<compile_context>
chip_gen: v7x
topology: tpu7x:2x2x1
jax: 0.10.0
libtpu: 0.0.40
codegen_flags: <defaults>
</compile_context>

<pallas_src>
import functools

import jax
import jax.numpy as jnp
from jax.experimental import pallas as pl
from jax.experimental.pallas import tpu as pltpu


def _sae_kernel(x_ref, w_enc_ref, b_enc_ref, w_dec_ref, b_dec_ref,
                recon_ref, acts_ref, l2_ref, l1_ref,
                recon_acc, l1_acc, *, matmul_dtype):
    # x_ref:     (tb, act)        -- constant across the hidden axis
    # w_enc_ref: (act, th)
    # b_enc_ref: (1, th)
    # w_dec_ref: (th, act)
    # b_dec_ref: (1, act)         -- constant across the whole grid
    # recon_ref: (tb, act)        -- revisited across the hidden axis
    # acts_ref:  (tb, th)
    # l2_ref/l1_ref: (tb, 128)    -- lane-dense per-token losses (col 0 is used)
    # recon_acc: (tb, act) f32 scratch, l1_acc: (tb, 1) f32 scratch
    h = pl.program_id(1)
    n_h = pl.num_programs(1)

    @pl.when(h == 0)
    def _init():
        recon_acc[...] = jnp.zeros_like(recon_acc)
        l1_acc[...] = jnp.zeros_like(l1_acc)

    x = x_ref[...]
    x_cent = x - b_dec_ref[...]                    # model dtype, as in reference

    if matmul_dtype is not None:
        lhs_e = x_cent.astype(matmul_dtype)
        rhs_e = w_enc_ref[...].astype(matmul_dtype)
    else:
        lhs_e = x_cent
        rhs_e = w_enc_ref[...]

    # encoder tile: (tb, act) x (act, th) -> (tb, th), f32 accumulation
    pre = jnp.dot(lhs_e, rhs_e, preferred_element_type=jnp.float32)
    pre = pre + b_enc_ref[...].astype(jnp.float32)
    acts_f32 = jnp.maximum(pre, 0.0)
    acts = acts_f32.astype(acts_ref.dtype)
    acts_ref[...] = acts

    if matmul_dtype is not None:
        lhs_d = acts_f32.astype(matmul_dtype)
        rhs_d = w_dec_ref[...].astype(matmul_dtype)
    else:
        lhs_d = acts
        rhs_d = w_dec_ref[...]

    # decoder partial: (tb, th) x (th, act), accumulated over hidden tiles
    recon_acc[...] += jnp.dot(lhs_d, rhs_d, preferred_element_type=jnp.float32)
    # per-token |acts| partial sum (f32, from the pre-cast activations —
    # identical for f32 dtype, low-order-bit difference only for bf16).
    l1_acc[...] += jnp.sum(jnp.abs(acts_f32), axis=-1, keepdims=True)

    @pl.when(h == n_h - 1)
    def _finalize():
        recon_f32 = recon_acc[...] + b_dec_ref[...].astype(jnp.float32)
        recon_cast = recon_f32.astype(recon_ref.dtype)
        recon_ref[...] = recon_cast
        diff = recon_cast.astype(jnp.float32) - x.astype(jnp.float32)
        l2 = jnp.sum(diff * diff, axis=-1, keepdims=True)            # (tb, 1)
        # Lane-dense (unmasked) stores: broadcast the per-token scalar across
        # the 128-lane row; the wrapper reads column 0.
        l2_ref[...] = jnp.broadcast_to(l2, l2_ref.shape)
        l1_ref[...] = jnp.broadcast_to(l1_acc[...], l1_ref.shape)


def sae_forward(x, W_enc, b_enc, W_dec, b_dec, l1_coeff, *,
                per_token=False, tb=None, th=None, matmul_dtype=None,
                bias_buffered=True):
    """Pallas forward pass. Returns (loss, x_reconstruct, acts, l2_loss, l1_loss).

    tb: batch tile (default 256; use 128 on v5e to match the 4x128^2 MXU).
    th: hidden (dict_size) tile; default <=2048 so the plan fits v7x's 64 MiB VMEM.
    matmul_dtype: e.g. jnp.bfloat16 on v6e/v7x for the fast MXU path (f32 accum).
    """
    B, act_size = x.shape
    d_hidden = W_enc.shape[1]
    dtype = x.dtype
    itemsize = jnp.dtype(dtype).itemsize

    # ---- tile selection --------------------------------------------------
    sub = 8 if itemsize >= 4 else 16          # sublane minimum (f32 vs bf16/fp16)
    if tb is None:
        tb = min(256, max(B, sub))
    tb = max(sub, ((tb + sub - 1) // sub) * sub)
    B_pad = ((B + tb - 1) // tb) * tb

    if th is None:
        if d_hidden % 128 == 0:
            th = min(2048, d_hidden)
            while d_hidden % th:
                th -= 128
        else:
            th = d_hidden
    assert d_hidden % th == 0 and (th == d_hidden or th % 128 == 0), \
        "th must divide dict_size and be a multiple of 128 (or the full dim)"
    n_b = B_pad // tb
    n_h = d_hidden // th

    x_p = x if B_pad == B else jnp.pad(x, ((0, B_pad - B), (0, 0)))
    b_enc2 = b_enc.reshape(1, d_hidden)
    b_dec2 = b_dec.reshape(1, act_size)

    # ---- block specs -----------------------------------------------------
    bdec_kwargs = {}
    if bias_buffered and hasattr(pl, "Buffered"):
        # b_dec's block index is constant over the whole grid -> single-buffer.
        bdec_kwargs = dict(pipeline_mode=pl.Buffered(1))

    in_specs = [
        pl.BlockSpec((tb, act_size), lambda i, h: (i, 0)),            # x (resident over h)
        pl.BlockSpec((act_size, th), lambda i, h: (0, h)),            # W_enc tile
        pl.BlockSpec((1, th), lambda i, h: (0, h)),                   # b_enc tile
        pl.BlockSpec((th, act_size), lambda i, h: (h, 0)),            # W_dec tile
        pl.BlockSpec((1, act_size), lambda i, h: (0, 0), **bdec_kwargs),  # b_dec
    ]
    out_specs = [
        pl.BlockSpec((tb, act_size), lambda i, h: (i, 0)),            # recon (revisited)
        pl.BlockSpec((tb, th), lambda i, h: (i, h)),                  # acts
        pl.BlockSpec((tb, 128), lambda i, h: (i, 0)),                 # per-token l2
        pl.BlockSpec((tb, 128), lambda i, h: (i, 0)),                 # per-token |acts| sum
    ]

    # ---- VMEM budget / compiler params ------------------------------------
    ds = itemsize
    vmem_bytes = (
        2 * tb * act_size * ds                 # x (double-buffered)
        + 2 * act_size * th * ds               # W_enc tiles
        + 2 * th * ds                          # b_enc tiles
        + 2 * th * act_size * ds               # W_dec tiles
        + (1 if bdec_kwargs else 2) * act_size * ds   # b_dec
        + 2 * tb * act_size * ds               # recon out
        + 2 * tb * th * ds                     # acts out
        + 2 * 2 * tb * 128 * 4                 # l2 + l1 out
        + tb * act_size * 4 + tb * 128         # scratch accumulators (padded)
    )
    # Keep headroom; v7x physical VMEM is 64 MiB, v5e/v6e 128 MiB.
    vmem_limit = int(min(max(int(vmem_bytes * 1.3) + (4 << 20), 32 << 20), 100 << 20))

    flops = 4 * B_pad * act_size * d_hidden    # two matmuls, 2*M*N*K each
    bytes_accessed = int(
        B_pad * act_size * ds                                   # x
        + n_b * 2 * act_size * d_hidden * ds                    # weights re-streamed / batch tile
        + (d_hidden + act_size) * ds                            # biases
        + B_pad * act_size * ds + B_pad * d_hidden * ds         # recon + acts
        + 2 * B_pad * 128 * 4)                                  # loss rows
    cost = pl.CostEstimate(flops=flops, transcendentals=0,
                           bytes_accessed=bytes_accessed)

    kernel = functools.partial(_sae_kernel, matmul_dtype=matmul_dtype)
    recon_p, acts_p, l2_p, l1_p = pl.pallas_call(
        kernel,
        out_shape=(
            jax.ShapeDtypeStruct((B_pad, act_size), dtype),     # x_reconstruct
            jax.ShapeDtypeStruct((B_pad, d_hidden), dtype),     # acts
            jax.ShapeDtypeStruct((B_pad, 128), jnp.float32),    # per-token l2 (col 0)
            jax.ShapeDtypeStruct((B_pad, 128), jnp.float32),    # per-token |acts| (col 0)
        ),
        grid_spec=pltpu.PrefetchScalarGridSpec(
            num_scalar_prefetch=0,
            grid=(n_b, n_h),                                    # hidden axis innermost
            in_specs=in_specs,
            out_specs=out_specs,
            scratch_shapes=[
                pltpu.VMEM((tb, act_size), jnp.float32),        # recon accumulator
                pltpu.VMEM((tb, 1), jnp.float32),               # l1 accumulator
            ],
        ),
        compiler_params=pltpu.CompilerParams(
            dimension_semantics=("parallel", "arbitrary"),
            vmem_limit_bytes=vmem_limit,
        ),
        cost_estimate=cost,
    )(x_p, W_enc, b_enc2, W_dec, b_dec2)

    recon = recon_p[:B]
    acts = acts_p[:B]
    l2_tok = l2_p[:B, 0]
    l1_tok = l1_coeff * l1_p[:B, 0]

    if per_token:
        l2_loss, l1_loss = l2_tok, l1_tok
    else:
        l2_loss = jnp.mean(l2_tok, axis=0)
        l1_loss = jnp.mean(l1_tok, axis=0)
    loss = l2_loss + l1_loss
    return loss, recon, acts, l2_loss, l1_loss


def init_params(key, act_size, d_hidden, dtype=jnp.float32):
    """Parameter init mirroring the module's __init__ (kaiming_uniform_, unit-norm W_dec rows)."""
    k1, k2 = jax.random.split(key)
    bound_enc = jnp.sqrt(6.0 / act_size)
    W_enc = jax.random.uniform(k1, (act_size, d_hidden), dtype=jnp.float32,
                               minval=-bound_enc, maxval=bound_enc).astype(dtype)
    bound_dec = jnp.sqrt(6.0 / d_hidden)
    W_dec = jax.random.uniform(k2, (d_hidden, act_size), dtype=jnp.float32,
                               minval=-bound_dec, maxval=bound_dec).astype(dtype)
    W_dec = (W_dec / jnp.linalg.norm(W_dec.astype(jnp.float32),
                                     axis=-1, keepdims=True)).astype(dtype)
    b_enc = jnp.zeros((d_hidden,), dtype=dtype)
    b_dec = jnp.zeros((act_size,), dtype=dtype)
    return W_enc, b_enc, W_dec, b_dec


def _ref_forward(x, W_enc, b_enc, W_dec, b_dec, l1_coeff):
    with jax.default_matmul_precision("highest"):
        x_cent = x - b_dec
        acts = jax.nn.relu(x_cent @ W_enc + b_enc)
        recon = acts @ W_dec + b_dec
    l2 = jnp.mean(jnp.sum((recon.astype(jnp.float32) - x.astype(jnp.float32)) ** 2, -1), 0)
    l1 = l1_coeff * jnp.mean(jnp.sum(jnp.abs(acts.astype(jnp.float32)), -1), 0)
    return l2 + l1, recon, acts, l2, l1


if __name__ == "__main__":
    # Small config consistent with the module (cfg['act_size'], cfg['dict_size'],
    # cfg['l1_coeff'], enc_dtype='fp32'); sized to exercise both grid axes
    # (2 batch tiles x 2 hidden tiles).
    B, act_size, d_hidden = 256, 128, 512
    l1_coeff = 3e-4
    dtype = jnp.float32

    key = jax.random.PRNGKey(0)
    kx, kp = jax.random.split(key)
    x = jax.random.normal(kx, (B, act_size), dtype=dtype)
    W_enc, b_enc, W_dec, b_dec = init_params(kp, act_size, d_hidden, dtype)

    def run(**kw):
        fwd = jax.jit(functools.partial(sae_forward, l1_coeff=l1_coeff,
                                        tb=128, th=256, **kw))
        outs = fwd(x, W_enc, b_enc, W_dec, b_dec)
        jax.block_until_ready(outs)
        return outs

    try:
        loss, recon, acts, l2_loss, l1_loss = run()
    except Exception:
        # Fallback if pipeline_mode=pl.Buffered(1) is unsupported in this build.
        loss, recon, acts, l2_loss, l1_loss = run(bias_buffered=False)

    # correctness vs. pure-JAX reference (f32 path)
    r_loss, r_recon, r_acts, r_l2, r_l1 = _ref_forward(
        x, W_enc, b_enc, W_dec, b_dec, l1_coeff)
    assert jnp.allclose(recon, r_recon, atol=2e-3, rtol=2e-3)
    assert jnp.allclose(acts, r_acts, atol=2e-3, rtol=2e-3)
    assert jnp.allclose(l2_loss, r_l2, atol=1e-2, rtol=1e-3)
    assert jnp.allclose(l1_loss, r_l1, atol=1e-4, rtol=1e-3)
    assert jnp.allclose(loss, r_loss, atol=1e-2, rtol=1e-3)

    # v6e/v7x fast-MXU path: bf16 operands, f32 accumulation (loose check).
    loss_bf, _, _, _, _ = run(matmul_dtype=jnp.bfloat16, bias_buffered=False)
    assert jnp.allclose(loss_bf, r_loss, rtol=5e-2, atol=5e-2)

    print("KERNEL_OK")
</pallas_src>

<mosaic_0001>
module attributes {stable_mosaic.version = 11 : i64} {
  func.func @_sae_kernel(%arg0: i32, %arg1: i32, %arg2: memref<128x128xf32, #tpu.memory_space<vmem>>, %arg3: memref<128x256xf32, #tpu.memory_space<vmem>>, %arg4: memref<1x256xf32, #tpu.memory_space<vmem>>, %arg5: memref<256x128xf32, #tpu.memory_space<vmem>>, %arg6: memref<1x128xf32, #tpu.memory_space<vmem>>, %arg7: memref<128x128xf32, #tpu.memory_space<vmem>>, %arg8: memref<128x256xf32, #tpu.memory_space<vmem>>, %arg9: memref<128x128xf32, #tpu.memory_space<vmem>>, %arg10: memref<128x128xf32, #tpu.memory_space<vmem>>, %arg11: memref<128x128xf32, #tpu.memory_space<vmem>>, %arg12: memref<128x1xf32, #tpu.memory_space<vmem>>) attributes {dimension_semantics = [#tpu.dimension_semantics<parallel>, #tpu.dimension_semantics<arbitrary>], iteration_bounds = array<i64: 2, 2>, scalar_prefetch = 0 : i64, scratch_operands = 2 : i64, tpu.core_type = #tpu.core_type<tc>, window_params = [{transform_indices = @transform_0, window_bounds = array<i64: 128, 128>}, {transform_indices = @transform_1, window_bounds = array<i64: 128, 256>}, {transform_indices = @transform_2, window_bounds = array<i64: 1, 256>}, {transform_indices = @transform_3, window_bounds = array<i64: 256, 128>}, {pipeline_mode = #tpu.pipeline_mode<synchronous>, transform_indices = @transform_4, window_bounds = array<i64: 1, 128>}, {transform_indices = @transform_5, window_bounds = array<i64: 128, 128>}, {transform_indices = @transform_6, window_bounds = array<i64: 128, 256>}, {transform_indices = @transform_7, window_bounds = array<i64: 128, 128>}, {transform_indices = @transform_8, window_bounds = array<i64: 128, 128>}]} {
    %c0_i32 = arith.constant 0 : i32
    %0 = arith.cmpi eq, %arg1, %c0_i32 : i32
    %1 = arith.extui %0 : i1 to i32
    %c0_i32_0 = arith.constant 0 : i32
    %2 = arith.cmpi ne, %1, %c0_i32_0 : i32
    scf.if %2 {
      %cst_24 = arith.constant 0.000000e+00 : f32
      %29 = vector.broadcast %cst_24 : f32 to vector<128x128xf32>
      %c0_25 = arith.constant 0 : index
      %c0_26 = arith.constant 0 : index
      %30 = vector.load %arg11[%c0_25, %c0_26] : memref<128x128xf32, #tpu.memory_space<vmem>>, vector<128x128xf32>
      tpu.vector_store %arg11[%c0_25, %c0_26], %29 {strides = array<i32>} : memref<128x128xf32, #tpu.memory_space<vmem>>, vector<128x128xf32>,
      %cst_27 = arith.constant 0.000000e+00 : f32
      %31 = vector.broadcast %cst_27 : f32 to vector<128x1xf32>
      %c0_28 = arith.constant 0 : index
      %c0_29 = arith.constant 0 : index
      %32 = vector.load %arg12[%c0_28, %c0_29] : memref<128x1xf32, #tpu.memory_space<vmem>>, vector<128x1xf32>
      tpu.vector_store %arg12[%c0_28, %c0_29], %31 {strides = array<i32>} : memref<128x1xf32, #tpu.memory_space<vmem>>, vector<128x1xf32>,
    } else {
    }
    %c0 = arith.constant 0 : index
    %c0_1 = arith.constant 0 : index
    %3 = vector.load %arg2[%c0, %c0_1] : memref<128x128xf32, #tpu.memory_space<vmem>>, vector<128x128xf32>
    %c0_2 = arith.constant 0 : index
    %c0_3 = arith.constant 0 : index
    %4 = vector.load %arg6[%c0_2, %c0_3] : memref<1x128xf32, #tpu.memory_space<vmem>>, vector<1x128xf32>
    %5 = vector.broadcast %4 : vector<1x128xf32> to vector<128x128xf32>
    %6 = arith.subf %3, %5 : vector<128x128xf32>
    %c0_4 = arith.constant 0 : index
    %c0_5 = arith.constant 0 : index
    %7 = vector.load %arg3[%c0_4, %c0_5] : memref<128x256xf32, #tpu.memory_space<vmem>>, vector<128x256xf32>
    %cst = arith.constant dense<0.000000e+00> : vector<128x256xf32>
    %8 = tpu.matmul %6, %7, %cst {dimension_numbers = #tpu.dot_dimension_numbers<[1], [0], [0], [1], [0, 0, 1, 1], [], []>} : vector<128x128xf32>, vector<128x256xf32>, vector<128x256xf32> -> vector<128x256xf32>
    %c0_6 = arith.constant 0 : index
    %c0_7 = arith.constant 0 : index
    %9 = vector.load %arg4[%c0_6, %c0_7] : memref<1x256xf32, #tpu.memory_space<vmem>>, vector<1x256xf32>
    %10 = vector.broadcast %9 : vector<1x256xf32> to vector<128x256xf32>
    %11 = arith.addf %8, %10 : vector<128x256xf32>
    %cst_8 = arith.constant 0.000000e+00 : f32
    %12 = vector.broadcast %cst_8 : f32 to vector<128x256xf32>
    %13 = arith.maximumf %11, %12 : vector<128x256xf32>
    %c0_9 = arith.constant 0 : index
    %c0_10 = arith.constant 0 : index
    %14 = vector.load %arg8[%c0_9, %c0_10] : memref<128x256xf32, #tpu.memory_space<vmem>>, vector<128x256xf32>
    tpu.vector_store %arg8[%c0_9, %c0_10], %13 {strides = array<i32>} : memref<128x256xf32, #tpu.memory_space<vmem>>, vector<128x256xf32>,
    %c0_11 = arith.constant 0 : index
    %c0_12 = arith.constant 0 : index
    %15 = vector.load %arg5[%c0_11, %c0_12] : memref<256x128xf32, #tpu.memory_space<vmem>>, vector<256x128xf32>
    %c0_13 = arith.constant 0 : index
    %c0_14 = arith.constant 0 : index
    %16 = vector.load %arg11[%c0_13, %c0_14] : memref<128x128xf32, #tpu.memory_space<vmem>>, vector<128x128xf32>
    %cst_15 = arith.constant dense<0.000000e+00> : vector<128x128xf32>
    %17 = tpu.matmul %13, %15, %cst_15 {dimension_numbers = #tpu.dot_dimension_numbers<[1], [0], [0], [1], [0, 0, 1, 1], [], []>} : vector<128x256xf32>, vector<256x128xf32>, vector<128x128xf32> -> vector<128x128xf32>
    %18 = arith.addf %16, %17 : vector<128x128xf32>
    %c0_16 = arith.constant 0 : index
    %c0_17 = arith.constant 0 : index
    %19 = vector.load %arg11[%c0_16, %c0_17] : memref<128x128xf32, #tpu.memory_space<vmem>>, vector<128x128xf32>
    tpu.vector_store %arg11[%c0_16, %c0_17], %18 {strides = array<i32>} : memref<128x128xf32, #tpu.memory_space<vmem>>, vector<128x128xf32>,
    %c0_18 = arith.constant 0 : index
    %c0_19 = arith.constant 0 : index
    %20 = vector.load %arg12[%c0_18, %c0_19] : memref<128x1xf32, #tpu.memory_space<vmem>>, vector<128x1xf32>
    %21 = math.absf %13 : vector<128x256xf32>
    %cst_20 = arith.constant dense<0.000000e+00> : vector<128xf32>
    %22 = vector.multi_reduction <add>, %21, %cst_20 [1] : vector<128x256xf32> to vector<128xf32>
    %23 = vector.shape_cast %22 : vector<128xf32> to vector<128x1xf32>
    %24 = arith.addf %20, %23 : vector<128x1xf32>
    %c0_21 = arith.constant 0 : index
    %c0_22 = arith.constant 0 : index
    %25 = vector.load %arg12[%c0_21, %c0_22] : memref<128x1xf32, #tpu.memory_space<vmem>>, vector<128x1xf32>
    tpu.vector_store %arg12[%c0_21, %c0_22], %24 {strides = array<i32>} : memref<128x1xf32, #tpu.memory_space<vmem>>, vector<128x1xf32>,
    %c1_i32 = arith.constant 1 : i32
    %26 = arith.cmpi eq, %arg1, %c1_i32 : i32
    %27 = arith.extui %26 : i1 to i32
    %c0_i32_23 = arith.constant 0 : i32
    %28 = arith.cmpi ne, %27, %c0_i32_23 : i32
    scf.if %28 {
      %c0_24 = arith.constant 0 : index
      %c0_25 = arith.constant 0 : index
      %29 = vector.load %arg11[%c0_24, %c0_25] : memref<128x128xf32, #tpu.memory_space<vmem>>, vector<128x128xf32>
      %c0_26 = arith.constant 0 : index
      %c0_27 = arith.constant 0 : index
      %30 = vector.load %arg6[%c0_26, %c0_27] : memref<1x128xf32, #tpu.memory_space<vmem>>, vector<1x128xf32>
      %31 = vector.broadcast %30 : vector<1x128xf32> to vector<128x128xf32>
      %32 = arith.addf %29, %31 : vector<128x128xf32>
      %c0_28 = arith.constant 0 : index
      %c0_29 = arith.constant 0 : index
      %33 = vector.load %arg7[%c0_28, %c0_29] : memref<128x128xf32, #tpu.memory_space<vmem>>, vector<128x128xf32>
      tpu.vector_store %arg7[%c0_28, %c0_29], %32 {strides = array<i32>} : memref<128x128xf32, #tpu.memory_space<vmem>>, vector<128x128xf32>,
      %34 = arith.subf %32, %3 : vector<128x128xf32>
      %35 = arith.mulf %34, %34 : vector<128x128xf32>
      %cst_30 = arith.constant dense<0.000000e+00> : vector<128xf32>
      %36 = vector.multi_reduction <add>, %35, %cst_30 [1] : vector<128x128xf32> to vector<128xf32>
      %37 = vector.shape_cast %36 : vector<128xf32> to vector<128x1xf32>
      %38 = vector.shape_cast %37 : vector<128x1xf32> to vector<128x1xf32>
      %39 = vector.broadcast %38 : vector<128x1xf32> to vector<128x128xf32>
      %c0_31 = arith.constant 0 : index
      %c0_32 = arith.constant 0 : index
      %40 = vector.load %arg9[%c0_31, %c0_32] : memref<128x128xf32, #tpu.memory_space<vmem>>, vector<128x128xf32>
      tpu.vector_store %arg9[%c0_31, %c0_32], %39 {strides = array<i32>} : memref<128x128xf32, #tpu.memory_space<vmem>>, vector<128x128xf32>,
      %c0_33 = arith.constant 0 : index
      %c0_34 = arith.constant 0 : index
      %41 = vector.load %arg12[%c0_33, %c0_34] : memref<128x1xf32, #tpu.memory_space<vmem>>, vector<128x1xf32>
      %42 = vector.shape_cast %41 : vector<128x1xf32> to vector<128x1xf32>
      %43 = vector.broadcast %42 : vector<128x1xf32> to vector<128x128xf32>
      %c0_35 = arith.constant 0 : index
      %c0_36 = arith.constant 0 : index
      %44 = vector.load %arg10[%c0_35, %c0_36] : memref<128x128xf32, #tpu.memory_space<vmem>>, vector<128x128xf32>
      tpu.vector_store %arg10[%c0_35, %c0_36], %43 {strides = array<i32>} : memref<128x128xf32, #tpu.memory_space<vmem>>, vector<128x128xf32>,
    } else {
    }
    return
  }
  func.func @transform_0(%arg0: i32, %arg1: i32) -> (i32, i32) {
    %c0_i32 = arith.constant 0 : i32
    %c0_i32_0 = arith.constant 0 : i32
    return %arg0, %c0_i32 : i32, i32
  }
  func.func @transform_1(%arg0: i32, %arg1: i32) -> (i32, i32) {
    %c0_i32 = arith.constant 0 : i32
    %c0_i32_0 = arith.constant 0 : i32
    return %c0_i32, %arg1 : i32, i32
  }
  func.func @transform_2(%arg0: i32, %arg1: i32) -> (i32, i32) {
    %c0_i32 = arith.constant 0 : i32
    %c0_i32_0 = arith.constant 0 : i32
    return %c0_i32, %arg1 : i32, i32
  }
  func.func @transform_3(%arg0: i32, %arg1: i32) -> (i32, i32) {
    %c0_i32 = arith.constant 0 : i32
    %c0_i32_0 = arith.constant 0 : i32
    return %arg1, %c0_i32 : i32, i32
  }
  func.func @transform_4(%arg0: i32, %arg1: i32) -> (i32, i32) {
    %c0_i32 = arith.constant 0 : i32
    %c0_i32_0 = arith.constant 0 : i32
    %c0_i32_1 = arith.constant 0 : i32
    return %c0_i32, %c0_i32_0 : i32, i32
  }
  func.func @transform_5(%arg0: i32, %arg1: i32) -> (i32, i32) {
    %c0_i32 = arith.constant 0 : i32
    %c0_i32_0 = arith.constant 0 : i32
    return %arg0, %c0_i32 : i32, i32
  }
  func.func @transform_6(%arg0: i32, %arg1: i32) -> (i32, i32) {
    %c0_i32 = arith.constant 0 : i32
    return %arg0, %arg1 : i32, i32
  }
  func.func @transform_7(%arg0: i32, %arg1: i32) -> (i32, i32) {
    %c0_i32 = arith.constant 0 : i32
    %c0_i32_0 = arith.constant 0 : i32
    return %arg0, %c0_i32 : i32, i32
  }
  func.func @transform_8(%arg0: i32, %arg1: i32) -> (i32, i32) {
    %c0_i32 = arith.constant 0 : i32
    %c0_i32_0 = arith.constant 0 : i32
    return %arg0, %c0_i32 : i32, i32
  }
}

module attributes {stable_mosaic.version = 11 : i64} {
  func.func @_sae_kernel(%arg0: i32, %arg1: i32, %arg2: memref<128x128xf32, #tpu.memory_space<vmem>>, %arg3: memref<128x256xf32, #tpu.memory_space<vmem>>, %arg4: memref<1x256xf32, #tpu.memory_space<vmem>>, %arg5: memref<256x128xf32, #tpu.memory_space<vmem>>, %arg6: memref<1x128xf32, #tpu.memory_space<vmem>>, %arg7: memref<128x128xf32, #tpu.memory_space<vmem>>, %arg8: memref<128x256xf32, #tpu.memory_space<vmem>>, %arg9: memref<128x128xf32, #tpu.memory_space<vmem>>, %arg10: memref<128x128xf32, #tpu.memory_space<vmem>>, %arg11: memref<128x128xf32, #tpu.memory_space<vmem>>, %arg12: memref<128x1xf32, #tpu.memory_space<vmem>>) attributes {dimension_semantics = [#tpu.dimension_semantics<parallel>, #tpu.dimension_semantics<arbitrary>], iteration_bounds = array<i64: 2, 2>, scalar_prefetch = 0 : i64, scratch_operands = 2 : i64, tpu.core_type = #tpu.core_type<tc>, window_params = [{transform_indices = @transform_0, window_bounds = array<i64: 128, 128>}, {transform_indices = @transform_1, window_bounds = array<i64: 128, 256>}, {transform_indices = @transform_2, window_bounds = array<i64: 1, 256>}, {transform_indices = @transform_3, window_bounds = array<i64: 256, 128>}, {pipeline_mode = #tpu.pipeline_mode<synchronous>, transform_indices = @transform_4, window_bounds = array<i64: 1, 128>}, {transform_indices = @transform_5, window_bounds = array<i64: 128, 128>}, {transform_indices = @transform_6, window_bounds = array<i64: 128, 256>}, {transform_indices = @transform_7, window_bounds = array<i64: 128, 128>}, {transform_indices = @transform_8, window_bounds = array<i64: 128, 128>}]} {
    %c0_i32 = arith.constant 0 : i32
    %0 = arith.cmpi eq, %arg1, %c0_i32 : i32
    %1 = arith.extui %0 : i1 to i32
    %c0_i32_0 = arith.constant 0 : i32
    %2 = arith.cmpi ne, %1, %c0_i32_0 : i32
    scf.if %2 {
      %cst_24 = arith.constant 0.000000e+00 : f32
      %29 = vector.broadcast %cst_24 : f32 to vector<128x128xf32>
      %c0_25 = arith.constant 0 : index
      %c0_26 = arith.constant 0 : index
      %30 = vector.load %arg11[%c0_25, %c0_26] : memref<128x128xf32, #tpu.memory_space<vmem>>, vector<128x128xf32>
      tpu.vector_store %arg11[%c0_25, %c0_26], %29 {strides = array<i32>} : memref<128x128xf32, #tpu.memory_space<vmem>>, vector<128x128xf32>,
      %cst_27 = arith.constant 0.000000e+00 : f32
      %31 = vector.broadcast %cst_27 : f32 to vector<128x1xf32>
      %c0_28 = arith.constant 0 : index
      %c0_29 = arith.constant 0 : index
      %32 = vector.load %arg12[%c0_28, %c0_29] : memref<128x1xf32, #tpu.memory_space<vmem>>, vector<128x1xf32>
      tpu.vector_store %arg12[%c0_28, %c0_29], %31 {strides = array<i32>} : memref<128x1xf32, #tpu.memory_space<vmem>>, vector<128x1xf32>,
    } else {
    }
    %c0 = arith.constant 0 : index
    %c0_1 = arith.constant 0 : index
    %3 = vector.load %arg2[%c0, %c0_1] : memref<128x128xf32, #tpu.memory_space<vmem>>, vector<128x128xf32>
    %c0_2 = arith.constant 0 : index
    %c0_3 = arith.constant 0 : index
    %4 = vector.load %arg6[%c0_2, %c0_3] : memref<1x128xf32, #tpu.memory_space<vmem>>, vector<1x128xf32>
    %5 = vector.broadcast %4 : vector<1x128xf32> to vector<128x128xf32>
    %6 = arith.subf %3, %5 : vector<128x128xf32>
    %c0_4 = arith.constant 0 : index
    %c0_5 = arith.constant 0 : index
    %7 = vector.load %arg3[%c0_4, %c0_5] : memref<128x256xf32, #tpu.memory_space<vmem>>, vector<128x256xf32>
    %cst = arith.constant dense<0.000000e+00> : vector<128x256xf32>
    %8 = tpu.matmul %6, %7, %cst {dimension_numbers = #tpu.dot_dimension_numbers<[1], [0], [0], [1], [0, 0, 1, 1], [], []>} : vector<128x128xf32>, vector<128x256xf32>, vector<128x256xf32> -> vector<128x256xf32>
    %c0_6 = arith.constant 0 : index
    %c0_7 = arith.constant 0 : index
    %9 = vector.load %arg4[%c0_6, %c0_7] : memref<1x256xf32, #tpu.memory_space<vmem>>, vector<1x256xf32>
    %10 = vector.broadcast %9 : vector<1x256xf32> to vector<128x256xf32>
    %11 = arith.addf %8, %10 : vector<128x256xf32>
    %cst_8 = arith.constant 0.000000e+00 : f32
    %12 = vector.broadcast %cst_8 : f32 to vector<128x256xf32>
    %13 = arith.maximumf %11, %12 : vector<128x256xf32>
    %c0_9 = arith.constant 0 : index
    %c0_10 = arith.constant 0 : index
    %14 = vector.load %arg8[%c0_9, %c0_10] : memref<128x256xf32, #tpu.memory_space<vmem>>, vector<128x256xf32>
    tpu.vector_store %arg8[%c0_9, %c0_10], %13 {strides = array<i32>} : memref<128x256xf32, #tpu.memory_space<vmem>>, vector<128x256xf32>,
    %c0_11 = arith.constant 0 : index
    %c0_12 = arith.constant 0 : index
    %15 = vector.load %arg5[%c0_11, %c0_12] : memref<256x128xf32, #tpu.memory_space<vmem>>, vector<256x128xf32>
    %c0_13 = arith.constant 0 : index
    %c0_14 = arith.constant 0 : index
    %16 = vector.load %arg11[%c0_13, %c0_14] : memref<128x128xf32, #tpu.memory_space<vmem>>, vector<128x128xf32>
    %cst_15 = arith.constant dense<0.000000e+00> : vector<128x128xf32>
    %17 = tpu.matmul %13, %15, %cst_15 {dimension_numbers = #tpu.dot_dimension_numbers<[1], [0], [0], [1], [0, 0, 1, 1], [], []>} : vector<128x256xf32>, vector<256x128xf32>, vector<128x128xf32> -> vector<128x128xf32>
    %18 = arith.addf %16, %17 : vector<128x128xf32>
    %c0_16 = arith.constant 0 : index
    %c0_17 = arith.constant 0 : index
    %19 = vector.load %arg11[%c0_16, %c0_17] : memref<128x128xf32, #tpu.memory_space<vmem>>, vector<128x128xf32>
    tpu.vector_store %arg11[%c0_16, %c0_17], %18 {strides = array<i32>} : memref<128x128xf32, #tpu.memory_space<vmem>>, vector<128x128xf32>,
    %c0_18 = arith.constant 0 : index
    %c0_19 = arith.constant 0 : index
    %20 = vector.load %arg12[%c0_18, %c0_19] : memref<128x1xf32, #tpu.memory_space<vmem>>, vector<128x1xf32>
    %21 = math.absf %13 : vector<128x256xf32>
    %cst_20 = arith.constant dense<0.000000e+00> : vector<128xf32>
    %22 = vector.multi_reduction <add>, %21, %cst_20 [1] : vector<128x256xf32> to vector<128xf32>
    %23 = vector.shape_cast %22 : vector<128xf32> to vector<128x1xf32>
    %24 = arith.addf %20, %23 : vector<128x1xf32>
    %c0_21 = arith.constant 0 : index
    %c0_22 = arith.constant 0 : index
    %25 = vector.load %arg12[%c0_21, %c0_22] : memref<128x1xf32, #tpu.memory_space<vmem>>, vector<128x1xf32>
    tpu.vector_store %arg12[%c0_21, %c0_22], %24 {strides = array<i32>} : memref<128x1xf32, #tpu.memory_space<vmem>>, vector<128x1xf32>,
    %c1_i32 = arith.constant 1 : i32
    %26 = arith.cmpi eq, %arg1, %c1_i32 : i32
    %27 = arith.extui %26 : i1 to i32
    %c0_i32_23 = arith.constant 0 : i32
    %28 = arith.cmpi ne, %27, %c0_i32_23 : i32
    scf.if %28 {
      %c0_24 = arith.constant 0 : index
      %c0_25 = arith.constant 0 : index
      %29 = vector.load %arg11[%c0_24, %c0_25] : memref<128x128xf32, #tpu.memory_space<vmem>>, vector<128x128xf32>
      %c0_26 = arith.constant 0 : index
      %c0_27 = arith.constant 0 : index
      %30 = vector.load %arg6[%c0_26, %c0_27] : memref<1x128xf32, #tpu.memory_space<vmem>>, vector<1x128xf32>
      %31 = vector.broadcast %30 : vector<1x128xf32> to vector<128x128xf32>
      %32 = arith.addf %29, %31 : vector<128x128xf32>
      %c0_28 = arith.constant 0 : index
      %c0_29 = arith.constant 0 : index
      %33 = vector.load %arg7[%c0_28, %c0_29] : memref<128x128xf32, #tpu.memory_space<vmem>>, vector<128x128xf32>
      tpu.vector_store %arg7[%c0_28, %c0_29], %32 {strides = array<i32>} : memref<128x128xf32, #tpu.memory_space<vmem>>, vector<128x128xf32>,
      %34 = arith.subf %32, %3 : vector<128x128xf32>
      %35 = arith.mulf %34, %34 : vector<128x128xf32>
      %cst_30 = arith.constant dense<0.000000e+00> : vector<128xf32>
      %36 = vector.multi_reduction <add>, %35, %cst_30 [1] : vector<128x128xf32> to vector<128xf32>
      %37 = vector.shape_cast %36 : vector<128xf32> to vector<128x1xf32>
      %38 = vector.shape_cast %37 : vector<128x1xf32> to vector<128x1xf32>
      %39 = vector.broadcast %38 : vector<128x1xf32> to vector<128x128xf32>
      %c0_31 = arith.constant 0 : index
      %c0_32 = arith.constant 0 : index
      %40 = vector.load %arg9[%c0_31, %c0_32] : memref<128x128xf32, #tpu.memory_space<vmem>>, vector<128x128xf32>
      tpu.vector_store %arg9[%c0_31, %c0_32], %39 {strides = array<i32>} : memref<128x128xf32, #tpu.memory_space<vmem>>, vector<128x128xf32>,
      %c0_33 = arith.constant 0 : index
      %c0_34 = arith.constant 0 : index
      %41 = vector.load %arg12[%c0_33, %c0_34] : memref<128x1xf32, #tpu.memory_space<vmem>>, vector<128x1xf32>
      %42 = vector.shape_cast %41 : vector<128x1xf32> to vector<128x1xf32>
      %43 = vector.broadcast %42 : vector<128x1xf32> to vector<128x128xf32>
      %c0_35 = arith.constant 0 : index
      %c0_36 = arith.constant 0 : index
      %44 = vector.load %arg10[%c0_35, %c0_36] : memref<128x128xf32, #tpu.memory_space<vmem>>, vector<128x128xf32>
      tpu.vector_store %arg10[%c0_35, %c0_36], %43 {strides = array<i32>} : memref<128x128xf32, #tpu.memory_space<vmem>>, vector<128x128xf32>,
    } else {
    }
    return
  }
  func.func @transform_0(%arg0: i32, %arg1: i32) -> (i32, i32) {
    %c0_i32 = arith.constant 0 : i32
    %c0_i32_0 = arith.constant 0 : i32
    return %arg0, %c0_i32 : i32, i32
  }
  func.func @transform_1(%arg0: i32, %arg1: i32) -> (i32, i32) {
    %c0_i32 = arith.constant 0 : i32
    %c0_i32_0 = arith.constant 0 : i32
    return %c0_i32, %arg1 : i32, i32
  }
  func.func @transform_2(%arg0: i32, %arg1: i32) -> (i32, i32) {
    %c0_i32 = arith.constant 0 : i32
    %c0_i32_0 = arith.constant 0 : i32
    return %c0_i32, %arg1 : i32, i32
  }
  func.func @transform_3(%arg0: i32, %arg1: i32) -> (i32, i32) {
    %c0_i32 = arith.constant 0 : i32
    %c0_i32_0 = arith.constant 0 : i32
    return %arg1, %c0_i32 : i32, i32
  }
  func.func @transform_4(%arg0: i32, %arg1: i32) -> (i32, i32) {
    %c0_i32 = arith.constant 0 : i32
    %c0_i32_0 = arith.constant 0 : i32
    %c0_i32_1 = arith.constant 0 : i32
    return %c0_i32, %c0_i32_0 : i32, i32
  }
  func.func @transform_5(%arg0: i32, %arg1: i32) -> (i32, i32) {
    %c0_i32 = arith.constant 0 : i32
    %c0_i32_0 = arith.constant 0 : i32
    return %arg0, %c0_i32 : i32, i32
  }
  func.func @transform_6(%arg0: i32, %arg1: i32) -> (i32, i32) {
    %c0_i32 = arith.constant 0 : i32
    return %arg0, %arg1 : i32, i32
  }
  func.func @transform_7(%arg0: i32, %arg1: i32) -> (i32, i32) {
    %c0_i32 = arith.constant 0 : i32
    %c0_i32_0 = arith.constant 0 : i32
    return %arg0, %c0_i32 : i32, i32
  }
  func.func @transform_8(%arg0: i32, %arg1: i32) -> (i32, i32) {
    %c0_i32 = arith.constant 0 : i32
    %c0_i32_0 = arith.constant 0 : i32
    return %arg0, %c0_i32 : i32, i32
  }
}

</mosaic_0001>

<llo_original>
// kernel: sae_forward.1
$region0: #{sae_forward.1}
  #allocation0 [shape = 'u32[]', space=smem, size = 0x4, offset = 0x4, fixed_abs, tag = 'smem constant byte address 0x4 - core index']
  #allocation1 [shape = 'u32[144,128]{1,0:T(1,128)}', space=vmem, size = 0x12000, scoped, tag = 'internal scratch']
  #allocation2 [shape = 'f32[128,128]{1,0:T(8,128)}', space=vmem, size = 0x10000, scoped, tag = 'scratch operand']
  #allocation3 [shape = 'f32[128,1]{1,0:T(8,128)}', space=vmem, size = 0x10000, scoped, tag = 'scratch operand']
  %s0 = inlined_call_operand.hbm [shape: f32[256,128], index: 0, kind: input, shape index: {}]
  %s1 = inlined_call_operand.hbm [shape: f32[128,512], index: 1, kind: input, shape index: {}]
  %s2 = inlined_call_operand.vmem [shape: f32[1,512], index: 2, kind: input, shape index: {}]
  %s3 = inlined_call_operand.hbm [shape: f32[512,128], index: 3, kind: input, shape index: {}]
  %s4 = inlined_call_operand.vmem [shape: f32[1,128], index: 4, kind: input, shape index: {}]
  %s5 = inlined_call_operand.hbm [shape: f32[256,128], index: 5, kind: output, shape index: {0}]
  %s6 = inlined_call_operand.hbm [shape: f32[256,512], index: 6, kind: output, shape index: {1}]
  %s7 = inlined_call_operand.vmem [shape: f32[256,128], index: 7, kind: output, shape index: {2}]
  %s8 = inlined_call_operand.vmem [shape: f32[256,128], index: 8, kind: output, shape index: {3}]
  %9 = xla_tuple %s5, %s6, %s7, %s8
  %s10 = sld [smem:[#allocation0]]
  $region97: #{sae_forward.1} parent=0
    _
  %s12 = ssub.s32 1, %s10
  %s13 = scalar_select 0, %s12, %s10
  $region1: #{sae_forward.1} parent=0
    #allocation4 [shape = 'u8[131072]{0}', space=vmem, size = 0x20000, scoped, tag = 'input window, operand 0']
    #allocation5 [shape = 's32[2]{0}', space=sflag, size = 0x8, scoped, tag = 'scoped memory for sae_forward.1']
    #allocation6 [shape = 's32[2]{0}', space=sflag, size = 0x8, scoped, tag = 'scoped memory for sae_forward.1']
    #allocation7 [shape = 'u8[262144]{0}', space=vmem, size = 0x40000, scoped, tag = 'input window, operand 1']
    #allocation8 [shape = 's32[2]{0}', space=sflag, size = 0x8, scoped, tag = 'scoped memory for sae_forward.1']
    #allocation9 [shape = 'u8[262144]{0}', space=vmem, size = 0x40000, scoped, tag = 'input window, operand 3']
    #allocation10 [shape = 'u8[131072]{0}', space=vmem, size = 0x20000, scoped, tag = 'output window, operand 0']
    #allocation11 [shape = 'u8[262144]{0}', space=vmem, size = 0x40000, scoped, tag = 'output window, operand 1']
    #allocation12 [shape = 's32[2]{0}', space=sflag, size = 0x8, scoped, tag = 'scoped memory for sae_forward.1']
    %14 = vsyncpa [#allocation5], 0
    %s15 = scalar_lea.sflag [#allocation5], 1
    %16 = vsyncpa %s15, 0
    %17 = vsyncpa [#allocation8], 0
    %s18 = scalar_lea.sflag [#allocation8], 1
    %19 = vsyncpa %s18, 0
    %20 = vsyncpa [#allocation6], 0
    %s21 = scalar_lea.sflag [#allocation6], 1
    %22 = vsyncpa %s21, 0
    %23 = vsyncpa [#allocation12], 0
    %s24 = scalar_lea.sflag [#allocation12], 1
    %25 = vsyncpa %s24, 0
    loop: start=0, step=1, limit=6
    $region2: #{sae_forward.1} parent=1 // loop_pre_header
      _
    $region3: #{sae_forward.1} parent=1 // loop_header
      %s27 = sphi 0, %s31
      %p28 = scmp.ge.s32.totalorder %s27, 6
      %s34 = sphi 0, %s46
      %s35 = sphi 0, %s42
      %s36 = sphi 0, %s34
      %s37 = sphi 0, %s35
      %s38 = sphi 0, %s36
      %s39 = sphi 0, %s37
      %s49 = sphi 0, %s51
      %s52 = sphi 0, %s49
      %s53 = sphi 0, %s52
      %s69 = sphi 0, %s53
      %s75 = sphi 0, %s77
      %s78 = sphi 0, %s75
      %s79 = sphi 0, %s78
      %s95 = sphi 0, %s79
      %s101 = sphi 0, %s103
      %s104 = sphi 0, %s101
      %s105 = sphi 0, %s104
      %s121 = sphi 0, %s105
      %s127 = sphi 0, %s129
      %s130 = sphi 0, %s127
      %s131 = sphi 0, %s130
      %s147 = sphi 0, %s131
      %s151 = sphi 0, %s151
      %s153 = sphi 0, %s151
      %s154 = sphi 0, %s153
      %s168 = sphi 0, %s154
      %s174 = sphi 0, %s176
      %s177 = sphi 0, %s174
      %s178 = sphi 0, %s177
      %s194 = sphi 0, %s178
      %s202 = sphi 0, %s204
      %s205 = sphi 0, %s202
      %s206 = sphi 0, %s205
      %s222 = sphi 0, %s206
      %s228 = sphi 0, %s230
      %s231 = sphi 0, %s228
      %s232 = sphi 0, %s231
      %s248 = sphi 0, %s232
      %s254 = sphi 0, %s256
      %s257 = sphi 0, %s254
      %s258 = sphi 0, %s257
      %s274 = sphi 0, %s258
    $region4: #{sae_forward.1} parent=1 // loop_header_branch
      %30 = sbr.rel (%p28) target = $region8
    $region5: #{sae_forward.1} parent=1 // loop_body
      %s32 = ssub.s32 %s27, 1
      %s33 = ssub.s32 %s27, 2
      %s40 = sadd.s32 1, %s35
      %p41 = scmp.ge.s32.totalorder %s40, 2
      %s42 = scalar_select %p41, 0, %s40
      %s43 = sadd.s32 1, %s34
      %s44 = scalar_select %p41, %s43, %s34
      %p45 = scmp.ge.s32.totalorder %s44, 2
      %s46 = scalar_select %p45, 0, %s44
      %s47 = ssub.s32 %s34, %s46
      %p48 = scmp.eq.s32.totalorder %s47, 0
      %s50 = sadd.s32 %s49, 1
      %s51 = scalar_select %p48, %s49, %s50
      %p54 = pneg %p48
      %p55 = scmp.eq.s32.totalorder %s27, 3
      %p56 = por %p54, %p55
      %p57 = scmp.ne.s32.totalorder %s49, %s52
      %p58 = scmp.eq.s32.totalorder %s27, 0
      %p59 = por %p57, %p58
      %p60 = scmp.ne.s32.totalorder %s49, %s52
      %p61 = scmp.eq.s32.totalorder %s32, 3
      %p62 = por %p60, %p61
      %p63 = scmp.ne.s32.totalorder %s52, %s53
      %p64 = scmp.eq.s32.totalorder %s32, 0
      %p65 = por %p63, %p64
      %p66 = scmp.ne.s32.totalorder %s52, %s53
      %p67 = scmp.eq.s32.totalorder %s33, 3
      %p68 = por %p66, %p67
      %p70 = scmp.ne.s32.totalorder %s53, %s69
      %p71 = scmp.eq.s32.totalorder %s33, 0
      %p72 = por %p70, %p71
      %s73 = ssub.s32 %s35, %s42
      %p74 = scmp.eq.s32.totalorder %s73, 0
      %s76 = sadd.s32 %s75, 1
      %s77 = scalar_select %p74, %s75, %s76
      %p80 = pneg %p74
      %p81 = scmp.eq.s32.totalorder %s27, 3
      %p82 = por %p80, %p81
      %p83 = scmp.ne.s32.totalorder %s75, %s78
      %p84 = scmp.eq.s32.totalorder %s27, 0
      %p85 = por %p83, %p84
      %p86 = scmp.ne.s32.totalorder %s75, %s78
      %p87 = scmp.eq.s32.totalorder %s32, 3
      %p88 = por %p86, %p87
      %p89 = scmp.ne.s32.totalorder %s78, %s79
      %p90 = scmp.eq.s32.totalorder %s32, 0
      %p91 = por %p89, %p90
      %p92 = scmp.ne.s32.totalorder %s78, %s79
      %p93 = scmp.eq.s32.totalorder %s33, 3
      %p94 = por %p92, %p93
      %p96 = scmp.ne.s32.totalorder %s79, %s95
      %p97 = scmp.eq.s32.totalorder %s33, 0
      %p98 = por %p96, %p97
      %s99 = ssub.s32 %s35, %s42
      %p100 = scmp.eq.s32.totalorder %s99, 0
      %s102 = sadd.s32 %s101, 1
      %s103 = scalar_select %p100, %s101, %s102
      %p106 = pneg %p100
      %p107 = scmp.eq.s32.totalorder %s27, 3
      %p108 = por %p106, %p107
      %p109 = scmp.ne.s32.totalorder %s101, %s104
      %p110 = scmp.eq.s32.totalorder %s27, 0
      %p111 = por %p109, %p110
      %p112 = scmp.ne.s32.totalorder %s101, %s104
      %p113 = scmp.eq.s32.totalorder %s32, 3
      %p114 = por %p112, %p113
      %p115 = scmp.ne.s32.totalorder %s104, %s105
      %p116 = scmp.eq.s32.totalorder %s32, 0
      %p117 = por %p115, %p116
      %p118 = scmp.ne.s32.totalorder %s104, %s105
      %p119 = scmp.eq.s32.totalorder %s33, 3
      %p120 = por %p118, %p119
      %p122 = scmp.ne.s32.totalorder %s105, %s121
      %p123 = scmp.eq.s32.totalorder %s33, 0
      %p124 = por %p122, %p123
      %s125 = ssub.s32 %s35, %s42
      %p126 = scmp.eq.s32.totalorder %s125, 0
      %s128 = sadd.s32 %s127, 1
      %s129 = scalar_select %p126, %s127, %s128
      %p132 = pneg %p126
      %p133 = scmp.eq.s32.totalorder %s27, 3
      %p134 = por %p132, %p133
      %p135 = scmp.ne.s32.totalorder %s127, %s130
      %p136 = scmp.eq.s32.totalorder %s27, 0
      %p137 = por %p135, %p136
      %p138 = scmp.ne.s32.totalorder %s127, %s130
      %p139 = scmp.eq.s32.totalorder %s32, 3
      %p140 = por %p138, %p139
      %p141 = scmp.ne.s32.totalorder %s130, %s131
      %p142 = scmp.eq.s32.totalorder %s32, 0
      %p143 = por %p141, %p142
      %p144 = scmp.ne.s32.totalorder %s130, %s131
      %p145 = scmp.eq.s32.totalorder %s33, 3
      %p146 = por %p144, %p145
      %p148 = scmp.ne.s32.totalorder %s131, %s147
      %p149 = scmp.eq.s32.totalorder %s33, 0
      %p150 = por %p148, %p149
      %s152 = sadd.s32 %s151, 1
      %p155 = scmp.eq.s32.totalorder %s27, 3
      %p156 = scmp.ne.s32.totalorder %s151, %s153
      %p157 = scmp.eq.s32.totalorder %s27, 0
      %p158 = por %p156, %p157
      %p159 = scmp.ne.s32.totalorder %s151, %s153
      %p160 = scmp.eq.s32.totalorder %s32, 3
      %p161 = por %p159, %p160
      %p162 = scmp.ne.s32.totalorder %s153, %s154
      %p163 = scmp.eq.s32.totalorder %s32, 0
      %p164 = por %p162, %p163
      %p165 = scmp.ne.s32.totalorder %s153, %s154
      %p166 = scmp.eq.s32.totalorder %s33, 3
      %p167 = por %p165, %p166
      %p169 = scmp.ne.s32.totalorder %s154, %s168
      %p170 = scmp.eq.s32.totalorder %s33, 0
      %p171 = por %p169, %p170
      %s172 = ssub.s32 %s34, %s46
      %p173 = scmp.eq.s32.totalorder %s172, 0
      %s175 = sadd.s32 %s174, 1
      %s176 = scalar_select %p173, %s174, %s175
      %p179 = pneg %p173
      %p180 = scmp.eq.s32.totalorder %s27, 3
      %p181 = por %p179, %p180
      %p182 = scmp.ne.s32.totalorder %s174, %s177
      %p183 = scmp.eq.s32.totalorder %s27, 0
      %p184 = por %p182, %p183
      %p185 = scmp.ne.s32.totalorder %s174, %s177
      %p186 = scmp.eq.s32.totalorder %s32, 3
      %p187 = por %p185, %p186
      %p188 = scmp.ne.s32.totalorder %s177, %s178
      %p189 = scmp.eq.s32.totalorder %s32, 0
      %p190 = por %p188, %p189
      %p191 = scmp.ne.s32.totalorder %s177, %s178
      %p192 = scmp.eq.s32.totalorder %s33, 3
      %p193 = por %p191, %p192
      %p195 = scmp.ne.s32.totalorder %s178, %s194
      %p196 = scmp.eq.s32.totalorder %s33, 0
      %p197 = por %p195, %p196
      %s198 = ssub.s32 %s34, %s46
      %s199 = ssub.s32 %s35, %s42
      %s200 = sor.u32 %s198, %s199
      %p201 = scmp.eq.s32.totalorder %s200, 0
      %s203 = sadd.s32 %s202, 1
      %s204 = scalar_select %p201, %s202, %s203
      %p207 = pneg %p201
      %p208 = scmp.eq.s32.totalorder %s27, 3
      %p209 = por %p207, %p208
      %p210 = scmp.ne.s32.totalorder %s202, %s205
      %p211 = scmp.eq.s32.totalorder %s27, 0
      %p212 = por %p210, %p211
      %p213 = scmp.ne.s32.totalorder %s202, %s205
      %p214 = scmp.eq.s32.totalorder %s32, 3
      %p215 = por %p213, %p214
      %p216 = scmp.ne.s32.totalorder %s205, %s206
      %p217 = scmp.eq.s32.totalorder %s32, 0
      %p218 = por %p216, %p217
      %p219 = scmp.ne.s32.totalorder %s205, %s206
      %p220 = scmp.eq.s32.totalorder %s33, 3
      %p221 = por %p219, %p220
      %p223 = scmp.ne.s32.totalorder %s206, %s222
      %p224 = scmp.eq.s32.totalorder %s33, 0
      %p225 = por %p223, %p224
      %s226 = ssub.s32 %s34, %s46
      %p227 = scmp.eq.s32.totalorder %s226, 0
      %s229 = sadd.s32 %s228, 1
      %s230 = scalar_select %p227, %s228, %s229
      %p233 = pneg %p227
      %p234 = scmp.eq.s32.totalorder %s27, 3
      %p235 = por %p233, %p234
      %p236 = scmp.ne.s32.totalorder %s228, %s231
      %p237 = scmp.eq.s32.totalorder %s27, 0
      %p238 = por %p236, %p237
      %p239 = scmp.ne.s32.totalorder %s228, %s231
      %p240 = scmp.eq.s32.totalorder %s32, 3
      %p241 = por %p239, %p240
      %p242 = scmp.ne.s32.totalorder %s231, %s232
      %p243 = scmp.eq.s32.totalorder %s32, 0
      %p244 = por %p242, %p243
      %p245 = scmp.ne.s32.totalorder %s231, %s232
      %p246 = scmp.eq.s32.totalorder %s33, 3
      %p247 = por %p245, %p246
      %p249 = scmp.ne.s32.totalorder %s232, %s248
      %p250 = scmp.eq.s32.totalorder %s33, 0
      %p251 = por %p249, %p250
      %s252 = ssub.s32 %s34, %s46
      %p253 = scmp.eq.s32.totalorder %s252, 0
      %s255 = sadd.s32 %s254, 1
      %s256 = scalar_select %p253, %s254, %s255
      %p259 = pneg %p253
      %p260 = scmp.eq.s32.totalorder %s27, 3
      %p261 = por %p259, %p260
      %p262 = scmp.ne.s32.totalorder %s254, %s257
      %p263 = scmp.eq.s32.totalorder %s27, 0
      %p264 = por %p262, %p263
      %p265 = scmp.ne.s32.totalorder %s254, %s257
      %p266 = scmp.eq.s32.totalorder %s32, 3
      %p267 = por %p265, %p266
      %p268 = scmp.ne.s32.totalorder %s257, %s258
      %p269 = scmp.eq.s32.totalorder %s32, 0
      %p270 = por %p268, %p269
      %p271 = scmp.ne.s32.totalorder %s257, %s258
      %p272 = scmp.eq.s32.totalorder %s33, 3
      %p273 = por %p271, %p272
      %p275 = scmp.ne.s32.totalorder %s258, %s274
      %p276 = scmp.eq.s32.totalorder %s33, 0
      %p277 = por %p275, %p276
      %p278 = scmp.le.s32.totalorder 1, %s27
      %p279 = scmp.lt.s32.totalorder %s27, 5
      %p280 = pnand %p278, %p279
      %p281 = pneg %p280
      // Predicated region
      $region9: #{sae_forward.1} parent=5 // pred_check
        _
      $region10: #{sae_forward.1} parent=5 // pred_check_branch
        %283 = sbr.rel (%p280) target = $region12
      $region11: #{sae_forward.1} parent=5 // pred_region
        %s284 = ssub.s32 %s27, 1
        // Predicated region
        $region13: #{sae_forward.1} parent=11 // pred_check
          %p285 = pneg %p164
        $region14: #{sae_forward.1} parent=11 // pred_check_branch
          %287 = sbr.rel (%p285) target = $region16
        $region15: #{sae_forward.1} parent=11 // pred_region
          _
        $region16: #{sae_forward.1} parent=11 // pred_fallthru
          _
      $region12: #{sae_forward.1} parent=5 // pred_fallthru
        _
      %p288 = scmp.lt.s32.totalorder %s27, 4
      // Predicated region
      $region17: #{sae_forward.1} parent=5 // pred_check
        %p289 = pneg %p288
      $region18: #{sae_forward.1} parent=5 // pred_check_branch
        %291 = sbr.rel (%p289) target = $region20
      $region19: #{sae_forward.1} parent=5 // pred_region
        // Predicated region
        $region21: #{sae_forward.1} parent=19 // pred_check
          %p292 = pneg %p59
        $region22: #{sae_forward.1} parent=19 // pred_check_branch
          %294 = sbr.rel (%p292) target = $region24
        $region23: #{sae_forward.1} parent=19 // pred_region
          %s295 = sand.u32 %s49, 1
          %s296 = scalar_lea.sflag [#allocation5], %s295
          %s297 = sand.u32 %s49, 1
          %s298 = smul.addr %s297, 128
          %s299 = scalar_lea.vmem [#allocation4], %s298
          %s300 = smul.u32 16, %s34
          %s302 = ssub.s32 2048, 2048
          %303 = vsyncadd %s296, %s302
          %s304 = smul.addr %s300, 128
          %s305 = scalar_lea.hbm %s0, %s304
          %s306 = sshll.u32 %s299, 4
          %s307 = int_to_ptr.vmem [resolvable:$true] %s306
          %312 = dma.hbm_to_vmem [thread:$0]  %s305, 2048, %s307, %s296, 128, 128, 8
        $region24: #{sae_forward.1} parent=19 // pred_fallthru
          _
        // Predicated region
        $region25: #{sae_forward.1} parent=19 // pred_check
          %p313 = pneg %p85
        $region26: #{sae_forward.1} parent=19 // pred_check_branch
          %315 = sbr.rel (%p313) target = $region28
        $region27: #{sae_forward.1} parent=19 // pred_region
          %s316 = sand.u32 %s27, 1
          %s317 = scalar_lea.sflag [#allocation8], %s316
          %s318 = sand.u32 %s75, 1
          %s319 = smul.addr %s318, 256
          %s320 = scalar_lea.vmem [#allocation7], %s319
          %s321 = smul.u32 2, %s35
          %s323 = ssub.s32 4096, 4096
          %324 = vsyncadd %s317, %s323
          %s325 = smul.addr %s321, 128
          %s326 = scalar_lea.hbm %s1, %s325
          %s327 = sshll.u32 %s320, 4
          %s328 = int_to_ptr.vmem [resolvable:$true] %s327
          %333 = dma.hbm_to_vmem [thread:$0]  %s326, 4096, %s328, %s317, 512, 256, 16
        $region28: #{sae_forward.1} parent=19 // pred_fallthru
          _
        // Predicated region
        $region29: #{sae_forward.1} parent=19 // pred_check
          %p334 = pneg %p111
        $region30: #{sae_forward.1} parent=19 // pred_check_branch
          %336 = sbr.rel (%p334) target = $region32
        $region31: #{sae_forward.1} parent=19 // pred_region
          %s337 = smul.u32 2, %s35
          %p338 = scmp.lt.s32.totalorder %s337, 3
          %s339 = scalar_select %p338, %s337, 3
          %s340 = scalar_lea.vmem %s2, %s339
          %s341 = smul.u32 2, %s35
        $region32: #{sae_forward.1} parent=19 // pred_fallthru
          _
        // Predicated region
        $region33: #{sae_forward.1} parent=19 // pred_check
          %p342 = pneg %p137
        $region34: #{sae_forward.1} parent=19 // pred_check_branch
          %344 = sbr.rel (%p342) target = $region36
        $region35: #{sae_forward.1} parent=19 // pred_region
          %s345 = sand.u32 %s27, 1
          %s346 = scalar_lea.sflag [#allocation8], %s345
          %s347 = sand.u32 %s127, 1
          %s348 = smul.addr %s347, 256
          %s349 = scalar_lea.vmem [#allocation9], %s348
          %s350 = smul.u32 32, %s35
          %s352 = ssub.s32 4096, 4096
          %353 = vsyncadd %s346, %s352
          %s354 = smul.addr %s350, 128
          %s355 = scalar_lea.hbm %s3, %s354
          %s356 = sshll.u32 %s349, 4
          %s357 = int_to_ptr.vmem [resolvable:$true] %s356
          %362 = dma.hbm_to_vmem [thread:$0]  %s355, 4096, %s357, %s346, 128, 128, 8
        $region36: #{sae_forward.1} parent=19 // pred_fallthru
          _
      $region20: #{sae_forward.1} parent=5 // pred_fallthru
        _
      %p363 = scmp.le.s32.totalorder 1, %s27
      %p364 = scmp.lt.s32.totalorder %s27, 5
      %p365 = pnand %p363, %p364
      %p366 = pneg %p365
      // Predicated region
      $region37: #{sae_forward.1} parent=5 // pred_check
        _
      $region38: #{sae_forward.1} parent=5 // pred_check_branch
        %368 = sbr.rel (%p365) target = $region40
      $region39: #{sae_forward.1} parent=5 // pred_region
        %s369 = ssub.s32 %s27, 1
        %s370 = sand.u32 %s52, 1
        %s371 = scalar_lea.sflag [#allocation5], %s370
        %s372 = sand.u32 %s52, 1
        %s373 = smul.addr %s372, 128
        %s374 = scalar_lea.vmem [#allocation4], %s373
        // Predicated region
        $region41: #{sae_forward.1} parent=39 // pred_check
          %p375 = pneg %p65
        $region42: #{sae_forward.1} parent=39 // pred_check_branch
          %377 = sbr.rel (%p375) target = $region44
        $region43: #{sae_forward.1} parent=39 // pred_region
          %378 = dma.done %s371, 2048
        $region44: #{sae_forward.1} parent=39 // pred_fallthru
          _
        %s379 = sand.u32 %s32, 1
        %s380 = scalar_lea.sflag [#allocation8], %s379
        %s381 = sand.u32 %s78, 1
        %s382 = smul.addr %s381, 256
        %s383 = scalar_lea.vmem [#allocation7], %s382
        // Predicated region
        $region45: #{sae_forward.1} parent=39 // pred_check
          %p384 = pneg %p91
        $region46: #{sae_forward.1} parent=39 // pred_check_branch
          %386 = sbr.rel (%p384) target = $region48
        $region47: #{sae_forward.1} parent=39 // pred_region
          %387 = dma.done %s380, 4096
        $region48: #{sae_forward.1} parent=39 // pred_fallthru
          _
        %s388 = sand.u32 %s32, 1
        %s389 = scalar_lea.sflag [#allocation8], %s388
        %s390 = sand.u32 %s130, 1
        %s391 = smul.addr %s390, 256
        %s392 = scalar_lea.vmem [#allocation9], %s391
        // Predicated region
        $region49: #{sae_forward.1} parent=39 // pred_check
          %p393 = pneg %p143
        $region50: #{sae_forward.1} parent=39 // pred_check_branch
          %395 = sbr.rel (%p393) target = $region52
        $region51: #{sae_forward.1} parent=39 // pred_region
          %396 = dma.done %s389, 4096
        $region52: #{sae_forward.1} parent=39 // pred_fallthru
          _
        %s397 = sand.u32 %s52, 1
        %s398 = scalar_lea.sflag [#allocation5], %s397
        %s399 = sand.u32 %s52, 1
        %s400 = smul.addr %s399, 128
        %s401 = scalar_lea.vmem [#allocation4], %s400
        %p402 = pneg %p65
        %p403 = pneg %p62
        %s404 = sand.u32 %s32, 1
        %s405 = scalar_lea.sflag [#allocation8], %s404
        %s406 = sand.u32 %s78, 1
        %s407 = smul.addr %s406, 256
        %s408 = scalar_lea.vmem [#allocation7], %s407
        %p409 = pneg %p91
        %p410 = pneg %p88
        %s411 = smul.u32 2, %s37
        %p412 = scmp.lt.s32.totalorder %s411, 3
        %s413 = scalar_select %p412, %s411, 3
        %s414 = scalar_lea.vmem %s2, %s413
        %p415 = pneg %p117
        %p416 = pneg %p114
        %s417 = sand.u32 %s32, 1
        %s418 = scalar_lea.sflag [#allocation8], %s417
        %s419 = sand.u32 %s130, 1
        %s420 = smul.addr %s419, 256
        %s421 = scalar_lea.vmem [#allocation9], %s420
        %p422 = pneg %p143
        %p423 = pneg %p140
        %p424 = pneg %p164
        %p425 = pneg %p161
        %p426 = pneg %p190
        %p427 = pneg %p187
        %s428 = sand.u32 %s177, 1
        %s429 = scalar_lea.sflag [#allocation6], %s428
        %s430 = sand.u32 %s177, 1
        %s431 = smul.addr %s430, 128
        %s432 = scalar_lea.vmem [#allocation10], %s431
        %p433 = pneg %p218
        %p434 = pneg %p215
        %s435 = sand.u32 %s205, 1
        %s436 = scalar_lea.sflag [#allocation12], %s435
        %s437 = sand.u32 %s205, 1
        %s438 = smul.addr %s437, 256
        %s439 = scalar_lea.vmem [#allocation11], %s438
        %p440 = pneg %p244
        %p441 = pneg %p241
        %s442 = smul.u32 16, %s36
        %p443 = scmp.lt.s32.totalorder %s442, 31
        %s444 = scalar_select %p443, %s442, 31
        %s445 = smul.addr %s444, 8
        %s446 = scalar_lea.vmem %s7, %s445
        %p447 = pneg %p270
        %p448 = pneg %p267
        %s449 = smul.u32 16, %s36
        %p450 = scmp.lt.s32.totalorder %s449, 31
        %s451 = scalar_select %p450, %s449, 31
        %s452 = smul.addr %s451, 8
        %s453 = scalar_lea.vmem %s8, %s452
        %s454 = smul.u32 16, %s36
        %s455 = smul.u32 2, %s37
        %s456 = smul.u32 2, %s37
        %p457 = scmp.lt.s32.totalorder %s456, 3
        %s458 = scalar_select %p457, %s456, 3
        %s459 = scalar_lea.vmem %s2, %s458
        %s460 = smul.u32 2, %s37
        %s461 = smul.u32 32, %s37
        %s462 = smul.u32 16, %s36
        %s463 = smul.u32 16, %s36
        %s464 = smul.u32 2, %s37
        %s465 = smul.u32 16, %s36
        %p466 = scmp.lt.s32.totalorder %s465, 31
        %s467 = scalar_select %p466, %s465, 31
        %s468 = smul.addr %s467, 8
        %s469 = scalar_lea.vmem %s7, %s468
        %s470 = smul.u32 16, %s36
        %s471 = smul.u32 16, %s36
        %p472 = scmp.lt.s32.totalorder %s471, 31
        %s473 = scalar_select %p472, %s471, 31
        %s474 = smul.addr %s473, 8
        %s475 = scalar_lea.vmem %s8, %s474
        %s476 = smul.u32 16, %s36
        %p477 = scmp.eq.s32.totalorder %s37, 0
        // Predicated region
        $region53: #{sae_forward.1} parent=39 // pred_check
          %p478 = pneg %p477
        $region54: #{sae_forward.1} parent=39 // pred_check_branch
          %480 = sbr.rel (%p478) target = $region56
        $region55: #{sae_forward.1} parent=39 // pred_region
          %481 = vst [vmem:[#allocation2] sm:$0xff] 0.0
          %482 = vst [vmem:[#allocation2 + $0x8] sm:$0xff] 0.0
          %483 = vst [vmem:[#allocation2 + $0x10] sm:$0xff] 0.0
          %484 = vst [vmem:[#allocation2 + $0x18] sm:$0xff] 0.0
          %485 = vst [vmem:[#allocation2 + $0x20] sm:$0xff] 0.0
          %486 = vst [vmem:[#allocation2 + $0x28] sm:$0xff] 0.0
          %487 = vst [vmem:[#allocation2 + $0x30] sm:$0xff] 0.0
          %488 = vst [vmem:[#allocation2 + $0x38] sm:$0xff] 0.0
          %489 = vst [vmem:[#allocation2 + $0x40] sm:$0xff] 0.0
          %490 = vst [vmem:[#allocation2 + $0x48] sm:$0xff] 0.0
          %491 = vst [vmem:[#allocation2 + $0x50] sm:$0xff] 0.0
          %492 = vst [vmem:[#allocation2 + $0x58] sm:$0xff] 0.0
          %493 = vst [vmem:[#allocation2 + $0x60] sm:$0xff] 0.0
          %494 = vst [vmem:[#allocation2 + $0x68] sm:$0xff] 0.0
          %495 = vst [vmem:[#allocation2 + $0x70] sm:$0xff] 0.0
          %496 = vst [vmem:[#allocation2 + $0x78] sm:$0xff] 0.0
          %vm497 = vcmask 7168
          %498 = vst.msk [vmem:[#allocation3] sm:$0xff] %vm497, 0.0
          %499 = vst.msk [vmem:[#allocation3 + $0x8] sm:$0xff] %vm497, 0.0
          %500 = vst.msk [vmem:[#allocation3 + $0x10] sm:$0xff] %vm497, 0.0
          %501 = vst.msk [vmem:[#allocation3 + $0x18] sm:$0xff] %vm497, 0.0
          %502 = vst.msk [vmem:[#allocation3 + $0x20] sm:$0xff] %vm497, 0.0
          %503 = vst.msk [vmem:[#allocation3 + $0x28] sm:$0xff] %vm497, 0.0
          %504 = vst.msk [vmem:[#allocation3 + $0x30] sm:$0xff] %vm497, 0.0
          %505 = vst.msk [vmem:[#allocation3 + $0x38] sm:$0xff] %vm497, 0.0
          %506 = vst.msk [vmem:[#allocation3 + $0x40] sm:$0xff] %vm497, 0.0
          %507 = vst.msk [vmem:[#allocation3 + $0x48] sm:$0xff] %vm497, 0.0
          %508 = vst.msk [vmem:[#allocation3 + $0x50] sm:$0xff] %vm497, 0.0
          %509 = vst.msk [vmem:[#allocation3 + $0x58] sm:$0xff] %vm497, 0.0
          %510 = vst.msk [vmem:[#allocation3 + $0x60] sm:$0xff] %vm497, 0.0
          %511 = vst.msk [vmem:[#allocation3 + $0x68] sm:$0xff] %vm497, 0.0
          %512 = vst.msk [vmem:[#allocation3 + $0x70] sm:$0xff] %vm497, 0.0
          %513 = vst.msk [vmem:[#allocation3 + $0x78] sm:$0xff] %vm497, 0.0
        $region56: #{sae_forward.1} parent=39 // pred_fallthru
          _
        %v514 = vld [vmem:[%s374] sm:$0xff]
        %v515 = vld [vmem:[%s374 + $0x8] sm:$0xff]
        %v516 = vld [vmem:[%s374 + $0x10] sm:$0xff]
        %v517 = vld [vmem:[%s374 + $0x18] sm:$0xff]
        %v518 = vld [vmem:[%s374 + $0x20] sm:$0xff]
        %v519 = vld [vmem:[%s374 + $0x28] sm:$0xff]
        %v520 = vld [vmem:[%s374 + $0x30] sm:$0xff]
        %v521 = vld [vmem:[%s374 + $0x38] sm:$0xff]
        %v522 = vld [vmem:[%s374 + $0x40] sm:$0xff]
        %v523 = vld [vmem:[%s374 + $0x48] sm:$0xff]
        %v524 = vld [vmem:[%s374 + $0x50] sm:$0xff]
        %v525 = vld [vmem:[%s374 + $0x58] sm:$0xff]
        %v526 = vld [vmem:[%s374 + $0x60] sm:$0xff]
        %v527 = vld [vmem:[%s374 + $0x68] sm:$0xff]
        %v528 = vld [vmem:[%s374 + $0x70] sm:$0xff]
        %v529 = vld [vmem:[%s374 + $0x78] sm:$0xff]
        %v530 = vld [vmem:[%s4] sm:$0x1]
        %v532 = vlaneseq
        %v533 = vshrl.u32 %v532, 7
        %v534 = vsub.s32 0, %v533
        %v535 = vrot.slane %v530, %v534
        %v537 = vsub.f32 %v514, %v535
        %v538 = vsub.f32 %v515, %v535
        %v539 = vsub.f32 %v516, %v535
        %v540 = vsub.f32 %v517, %v535
        %v541 = vsub.f32 %v518, %v535
        %v542 = vsub.f32 %v519, %v535
        %v543 = vsub.f32 %v520, %v535
        %v544 = vsub.f32 %v521, %v535
        %v545 = vsub.f32 %v522, %v535
        %v546 = vsub.f32 %v523, %v535
        %v547 = vsub.f32 %v524, %v535
        %v548 = vsub.f32 %v525, %v535
        %v549 = vsub.f32 %v526, %v535
        %v550 = vsub.f32 %v527, %v535
        %v551 = vsub.f32 %v528, %v535
        %v552 = vsub.f32 %v529, %v535
        %v553 = vld [vmem:[%s383] sm:$0xff]
        %v554 = vld [vmem:[%s383 + $0x8] sm:$0xff]
        %v555 = vld [vmem:[%s383 + $0x10] sm:$0xff]
        %v556 = vld [vmem:[%s383 + $0x18] sm:$0xff]
        %v557 = vld [vmem:[%s383 + $0x20] sm:$0xff]
        %v558 = vld [vmem:[%s383 + $0x28] sm:$0xff]
        %v559 = vld [vmem:[%s383 + $0x30] sm:$0xff]
        %v560 = vld [vmem:[%s383 + $0x38] sm:$0xff]
        %v561 = vld [vmem:[%s383 + $0x40] sm:$0xff]
        %v562 = vld [vmem:[%s383 + $0x48] sm:$0xff]
        %v563 = vld [vmem:[%s383 + $0x50] sm:$0xff]
        %v564 = vld [vmem:[%s383 + $0x58] sm:$0xff]
        %v565 = vld [vmem:[%s383 + $0x60] sm:$0xff]
        %v566 = vld [vmem:[%s383 + $0x68] sm:$0xff]
        %v567 = vld [vmem:[%s383 + $0x70] sm:$0xff]
        %v568 = vld [vmem:[%s383 + $0x78] sm:$0xff]
        %v569 = vld [vmem:[%s383 + $0x80] sm:$0xff]
        %v570 = vld [vmem:[%s383 + $0x88] sm:$0xff]
        %v571 = vld [vmem:[%s383 + $0x90] sm:$0xff]
        %v572 = vld [vmem:[%s383 + $0x98] sm:$0xff]
        %v573 = vld [vmem:[%s383 + $0xa0] sm:$0xff]
        %v574 = vld [vmem:[%s383 + $0xa8] sm:$0xff]
        %v575 = vld [vmem:[%s383 + $0xb0] sm:$0xff]
        %v576 = vld [vmem:[%s383 + $0xb8] sm:$0xff]
        %v577 = vld [vmem:[%s383 + $0xc0] sm:$0xff]
        %v578 = vld [vmem:[%s383 + $0xc8] sm:$0xff]
        %v579 = vld [vmem:[%s383 + $0xd0] sm:$0xff]
        %v580 = vld [vmem:[%s383 + $0xd8] sm:$0xff]
        %v581 = vld [vmem:[%s383 + $0xe0] sm:$0xff]
        %v582 = vld [vmem:[%s383 + $0xe8] sm:$0xff]
        %v583 = vld [vmem:[%s383 + $0xf0] sm:$0xff]
        %v584 = vld [vmem:[%s383 + $0xf8] sm:$0xff]
        %v585 = vld [vmem:[%s459] sm:$0x3]
        %v587 = vlaneseq
        %v588 = vshrl.u32 %v587, 7
        %v589 = vsub.s32 0, %v588
        %v590 = vrot.slane %v585, %v589
        %v591 = vlaneseq
        %v592 = vshrl.u32 %v591, 7
        %v593 = vsub.s32 1, %v592
        %v594 = vrot.slane %v585, %v593
        %597 = vmatprep.subr.mxu0 %v554
        %598 = vmatpush1.msra.mxu0 %v553
        %599 = vmatprep.subr.mxu0 %v556
        %600 = vmatpush1.msra.mxu0 %v555
        %601 = vmatprep.subr.mxu0 %v558
        %602 = vmatpush1.msra.mxu0 %v557
        %603 = vmatprep.subr.mxu0 %v560
        %604 = vmatpush1.msra.mxu0 %v559
        %605 = vmatprep.subr.mxu0 %v562
        %606 = vmatpush1.msra.mxu0 %v561
        %607 = vmatprep.subr.mxu0 %v564
        %608 = vmatpush1.msra.mxu0 %v563
        %609 = vmatprep.subr.mxu0 %v566
        %610 = vmatpush1.msra.mxu0 %v565
        %611 = vmatprep.subr.mxu0 %v568
        %612 = vmatpush1.msra.mxu0 %v567
        %613 = vmatprep.subr.mxu0 %v570
        %614 = vmatpush1.msra.mxu0 %v569
        %615 = vmatprep.subr.mxu0 %v572
        %616 = vmatpush1.msra.mxu0 %v571
        %617 = vmatprep.subr.mxu0 %v574
        %618 = vmatpush1.msra.mxu0 %v573
        %619 = vmatprep.subr.mxu0 %v576
        %620 = vmatpush1.msra.mxu0 %v575
        %621 = vmatprep.subr.mxu0 %v578
        %622 = vmatpush1.msra.mxu0 %v577
        %623 = vmatprep.subr.mxu0 %v580
        %624 = vmatpush1.msra.mxu0 %v579
        %625 = vmatprep.subr.mxu0 %v582
        %626 = vmatpush1.msra.mxu0 %v581
        %627 = vmatprep.subr.mxu0 %v584
        %628 = vmatpush1.msra.mxu0 %v583
        %629 = vmatprep.subr.mxu0 0.0
        %630 = vmatpush1.msra.mxu0 0.0
        %631 = vmatprep.subr.mxu0 0.0
        %632 = vmatpush1.msra.mxu0 0.0
        %633 = vmatprep.subr.mxu0 0.0
        %634 = vmatpush1.msra.mxu0 0.0
        %635 = vmatprep.subr.mxu0 0.0
        %636 = vmatpush1.msra.mxu0 0.0
        %637 = vmatprep.subr.mxu0 0.0
        %638 = vmatpush1.msra.mxu0 0.0
        %639 = vmatprep.subr.mxu0 0.0
        %640 = vmatpush1.msra.mxu0 0.0
        %641 = vmatprep.subr.mxu0 0.0
        %642 = vmatpush1.msra.mxu0 0.0
        %643 = vmatprep.subr.mxu0 0.0
        %644 = vmatpush1.msra.mxu0 0.0
        %645 = vmatprep.subr.mxu0 0.0
        %646 = vmatpush1.msra.mxu0 0.0
        %647 = vmatprep.subr.mxu0 0.0
        %648 = vmatpush1.msra.mxu0 0.0
        %649 = vmatprep.subr.mxu0 0.0
        %650 = vmatpush1.msra.mxu0 0.0
        %651 = vmatprep.subr.mxu0 0.0
        %652 = vmatpush1.msra.mxu0 0.0
        %653 = vmatprep.subr.mxu0 0.0
        %654 = vmatpush1.msra.mxu0 0.0
        %655 = vmatprep.subr.mxu0 0.0
        %656 = vmatpush1.msra.mxu0 0.0
        %657 = vmatprep.subr.mxu0 0.0
        %658 = vmatpush1.msra.mxu0 0.0
        %659 = vmatprep.subr.mxu0 0.0
        %660 = vmatpush1.msra.mxu0 0.0
        %661 = vmatprep.mubr.f32.mxu0 0.0
        %662 = vmatmul.mubr.f32.gmra.mrb[0].mxu0 %v537
        %v663 = vpop.f32.mrb[0].mxu0
        %v664 = vadd.f32 %v590, %v663
        %v665 = vpop.f32.mrb[0].mxu0
        %v666 = vadd.f32 %v594, %v665
        %667 = vmatprep.mubr.f32.mxu0 0.0
        %668 = vmatmul.mubr.f32.gmra.mrb[0].mxu0 %v538
        %v669 = vpop.f32.mrb[0].mxu0
        %v670 = vadd.f32 %v590, %v669
        %v671 = vpop.f32.mrb[0].mxu0
        %v672 = vadd.f32 %v594, %v671
        %673 = vmatprep.mubr.f32.mxu0 0.0
        %674 = vmatmul.mubr.f32.gmra.mrb[0].mxu0 %v539
        %v675 = vpop.f32.mrb[0].mxu0
        %v676 = vadd.f32 %v590, %v675
        %v677 = vpop.f32.mrb[0].mxu0
        %v678 = vadd.f32 %v594, %v677
        %679 = vmatprep.mubr.f32.mxu0 0.0
        %680 = vmatmul.mubr.f32.gmra.mrb[0].mxu0 %v540
        %v681 = vpop.f32.mrb[0].mxu0
        %v682 = vadd.f32 %v590, %v681
        %v683 = vpop.f32.mrb[0].mxu0
        %v684 = vadd.f32 %v594, %v683
        %685 = vmatprep.mubr.f32.mxu0 0.0
        %686 = vmatmul.mubr.f32.gmra.mrb[0].mxu0 %v541
        %v687 = vpop.f32.mrb[0].mxu0
        %v688 = vadd.f32 %v590, %v687
        %v689 = vpop.f32.mrb[0].mxu0
        %v690 = vadd.f32 %v594, %v689
        %691 = vmatprep.mubr.f32.mxu0 0.0
        %692 = vmatmul.mubr.f32.gmra.mrb[0].mxu0 %v542
        %v693 = vpop.f32.mrb[0].mxu0
        %v694 = vadd.f32 %v590, %v693
        %v695 = vpop.f32.mrb[0].mxu0
        %v696 = vadd.f32 %v594, %v695
        %697 = vmatprep.mubr.f32.mxu0 0.0
        %698 = vmatmul.mubr.f32.gmra.mrb[0].mxu0 %v543
        %v699 = vpop.f32.mrb[0].mxu0
        %v700 = vadd.f32 %v590, %v699
        %v701 = vpop.f32.mrb[0].mxu0
        %v702 = vadd.f32 %v594, %v701
        %703 = vmatprep.mubr.f32.mxu0 0.0
        %704 = vmatmul.mubr.f32.gmra.mrb[0].mxu0 %v544
        %v705 = vpop.f32.mrb[0].mxu0
        %v706 = vadd.f32 %v590, %v705
        %v707 = vpop.f32.mrb[0].mxu0
        %v708 = vadd.f32 %v594, %v707
        %709 = vmatprep.mubr.f32.mxu0 0.0
        %710 = vmatmul.mubr.f32.gmra.mrb[0].mxu0 %v545
        %v711 = vpop.f32.mrb[0].mxu0
        %v712 = vadd.f32 %v590, %v711
        %v713 = vpop.f32.mrb[0].mxu0
        %v714 = vadd.f32 %v594, %v713
        %715 = vmatprep.mubr.f32.mxu0 0.0
        %716 = vmatmul.mubr.f32.gmra.mrb[0].mxu0 %v546
        %v717 = vpop.f32.mrb[0].mxu0
        %v718 = vadd.f32 %v590, %v717
        %v719 = vpop.f32.mrb[0].mxu0
        %v720 = vadd.f32 %v594, %v719
        %721 = vmatprep.mubr.f32.mxu0 0.0
        %722 = vmatmul.mubr.f32.gmra.mrb[0].mxu0 %v547
        %v723 = vpop.f32.mrb[0].mxu0
        %v724 = vadd.f32 %v590, %v723
        %v725 = vpop.f32.mrb[0].mxu0
        %v726 = vadd.f32 %v594, %v725
        %727 = vmatprep.mubr.f32.mxu0 0.0
        %728 = vmatmul.mubr.f32.gmra.mrb[0].mxu0 %v548
        %v729 = vpop.f32.mrb[0].mxu0
        %v730 = vadd.f32 %v590, %v729
        %v731 = vpop.f32.mrb[0].mxu0
        %v732 = vadd.f32 %v594, %v731
        %733 = vmatprep.mubr.f32.mxu0 0.0
        %734 = vmatmul.mubr.f32.gmra.mrb[0].mxu0 %v549
        %v735 = vpop.f32.mrb[0].mxu0
        %v736 = vadd.f32 %v590, %v735
        %v737 = vpop.f32.mrb[0].mxu0
        %v738 = vadd.f32 %v594, %v737
        %739 = vmatprep.mubr.f32.mxu0 0.0
        %740 = vmatmul.mubr.f32.gmra.mrb[0].mxu0 %v550
        %v741 = vpop.f32.mrb[0].mxu0
        %v742 = vadd.f32 %v590, %v741
        %v743 = vpop.f32.mrb[0].mxu0
        %v744 = vadd.f32 %v594, %v743
        %745 = vmatprep.mubr.f32.mxu0 0.0
        %746 = vmatmul.mubr.f32.gmra.mrb[0].mxu0 %v551
        %v747 = vpop.f32.mrb[0].mxu0
        %v748 = vadd.f32 %v590, %v747
        %v749 = vpop.f32.mrb[0].mxu0
        %v750 = vadd.f32 %v594, %v749
        %751 = vmatprep.mubr.f32.mxu0 0.0
        %752 = vmatmul.mubr.f32.gmra.mrb[0].mxu0 %v552
        %v753 = vpop.f32.mrb[0].mxu0
        %v754 = vadd.f32 %v590, %v753
        %v755 = vpop.f32.mrb[0].mxu0
        %v756 = vadd.f32 %v594, %v755
        %757 = vdwg.mxu0
        %v758 = vmax.f32 %v664, 0.0
        %v759 = vmax.f32 %v666, 0.0
        %v760 = vmax.f32 %v670, 0.0
        %v761 = vmax.f32 %v672, 0.0
        %v762 = vmax.f32 %v676, 0.0
        %v763 = vmax.f32 %v678, 0.0
        %v764 = vmax.f32 %v682, 0.0
        %v765 = vmax.f32 %v684, 0.0
        %v766 = vmax.f32 %v688, 0.0
        %v767 = vmax.f32 %v690, 0.0
        %v768 = vmax.f32 %v694, 0.0
        %v769 = vmax.f32 %v696, 0.0
        %v770 = vmax.f32 %v700, 0.0
        %v771 = vmax.f32 %v702, 0.0
        %v772 = vmax.f32 %v706, 0.0
        %v773 = vmax.f32 %v708, 0.0
        %v774 = vmax.f32 %v712, 0.0
        %v775 = vmax.f32 %v714, 0.0
        %v776 = vmax.f32 %v718, 0.0
        %v777 = vmax.f32 %v720, 0.0
        %v778 = vmax.f32 %v724, 0.0
        %v779 = vmax.f32 %v726, 0.0
        %v780 = vmax.f32 %v730, 0.0
        %v781 = vmax.f32 %v732, 0.0
        %v782 = vmax.f32 %v736, 0.0
        %v783 = vmax.f32 %v738, 0.0
        %v784 = vmax.f32 %v742, 0.0
        %v785 = vmax.f32 %v744, 0.0
        %v786 = vmax.f32 %v748, 0.0
        %v787 = vmax.f32 %v750, 0.0
        %v788 = vmax.f32 %v754, 0.0
        %v789 = vmax.f32 %v756, 0.0
        %790 = vst [vmem:[%s439] sm:$0xff] %v758
        %791 = vst [vmem:[%s439 + $0x8] sm:$0xff] %v759
        %792 = vst [vmem:[%s439 + $0x10] sm:$0xff] %v760
        %793 = vst [vmem:[%s439 + $0x18] sm:$0xff] %v761
        %794 = vst [vmem:[%s439 + $0x20] sm:$0xff] %v762
        %795 = vst [vmem:[%s439 + $0x28] sm:$0xff] %v763
        %796 = vst [vmem:[%s439 + $0x30] sm:$0xff] %v764
        %797 = vst [vmem:[%s439 + $0x38] sm:$0xff] %v765
        %798 = vst [vmem:[%s439 + $0x40] sm:$0xff] %v766
        %799 = vst [vmem:[%s439 + $0x48] sm:$0xff] %v767
        %800 = vst [vmem:[%s439 + $0x50] sm:$0xff] %v768
        %801 = vst [vmem:[%s439 + $0x58] sm:$0xff] %v769
        %802 = vst [vmem:[%s439 + $0x60] sm:$0xff] %v770
        %803 = vst [vmem:[%s439 + $0x68] sm:$0xff] %v771
        %804 = vst [vmem:[%s439 + $0x70] sm:$0xff] %v772
        %805 = vst [vmem:[%s439 + $0x78] sm:$0xff] %v773
        %806 = vst [vmem:[%s439 + $0x80] sm:$0xff] %v774
        %807 = vst [vmem:[%s439 + $0x88] sm:$0xff] %v775
        %808 = vst [vmem:[%s439 + $0x90] sm:$0xff] %v776
        %809 = vst [vmem:[%s439 + $0x98] sm:$0xff] %v777
        %810 = vst [vmem:[%s439 + $0xa0] sm:$0xff] %v778
        %811 = vst [vmem:[%s439 + $0xa8] sm:$0xff] %v779
        %812 = vst [vmem:[%s439 + $0xb0] sm:$0xff] %v780
        %813 = vst [vmem:[%s439 + $0xb8] sm:$0xff] %v781
        %814 = vst [vmem:[%s439 + $0xc0] sm:$0xff] %v782
        %815 = vst [vmem:[%s439 + $0xc8] sm:$0xff] %v783
        %816 = vst [vmem:[%s439 + $0xd0] sm:$0xff] %v784
        %817 = vst [vmem:[%s439 + $0xd8] sm:$0xff] %v785
        %818 = vst [vmem:[%s439 + $0xe0] sm:$0xff] %v786
        %819 = vst [vmem:[%s439 + $0xe8] sm:$0xff] %v787
        %820 = vst [vmem:[%s439 + $0xf0] sm:$0xff] %v788
        %821 = vst [vmem:[%s439 + $0xf8] sm:$0xff] %v789
        %v822 = vld [vmem:[%s392] sm:$0xff]
        %v823 = vld [vmem:[%s392 + $0x8] sm:$0xff]
        %v824 = vld [vmem:[%s392 + $0x10] sm:$0xff]
        %v825 = vld [vmem:[%s392 + $0x18] sm:$0xff]
        %v826 = vld [vmem:[%s392 + $0x20] sm:$0xff]
        %v827 = vld [vmem:[%s392 + $0x28] sm:$0xff]
        %v828 = vld [vmem:[%s392 + $0x30] sm:$0xff]
        %v829 = vld [vmem:[%s392 + $0x38] sm:$0xff]
        %v830 = vld [vmem:[%s392 + $0x40] sm:$0xff]
        %v831 = vld [vmem:[%s392 + $0x48] sm:$0xff]
        %v832 = vld [vmem:[%s392 + $0x50] sm:$0xff]
        %v833 = vld [vmem:[%s392 + $0x58] sm:$0xff]
        %v834 = vld [vmem:[%s392 + $0x60] sm:$0xff]
        %v835 = vld [vmem:[%s392 + $0x68] sm:$0xff]
        %v836 = vld [vmem:[%s392 + $0x70] sm:$0xff]
        %v837 = vld [vmem:[%s392 + $0x78] sm:$0xff]
        %v838 = vld [vmem:[%s392 + $0x80] sm:$0xff]
        %v839 = vld [vmem:[%s392 + $0x88] sm:$0xff]
        %v840 = vld [vmem:[%s392 + $0x90] sm:$0xff]
        %v841 = vld [vmem:[%s392 + $0x98] sm:$0xff]
        %v842 = vld [vmem:[%s392 + $0xa0] sm:$0xff]
        %v843 = vld [vmem:[%s392 + $0xa8] sm:$0xff]
        %v844 = vld [vmem:[%s392 + $0xb0] sm:$0xff]
        %v845 = vld [vmem:[%s392 + $0xb8] sm:$0xff]
        %v846 = vld [vmem:[%s392 + $0xc0] sm:$0xff]
        %v847 = vld [vmem:[%s392 + $0xc8] sm:$0xff]
        %v848 = vld [vmem:[%s392 + $0xd0] sm:$0xff]
        %v849 = vld [vmem:[%s392 + $0xd8] sm:$0xff]
        %v850 = vld [vmem:[%s392 + $0xe0] sm:$0xff]
        %v851 = vld [vmem:[%s392 + $0xe8] sm:$0xff]
        %v852 = vld [vmem:[%s392 + $0xf0] sm:$0xff]
        %v853 = vld [vmem:[%s392 + $0xf8] sm:$0xff]
        %v854 = vld [vmem:[#allocation2] sm:$0xff]
        %v855 = vld [vmem:[#allocation2 + $0x8] sm:$0xff]
        %v856 = vld [vmem:[#allocation2 + $0x10] sm:$0xff]
        %v857 = vld [vmem:[#allocation2 + $0x18] sm:$0xff]
        %v858 = vld [vmem:[#allocation2 + $0x20] sm:$0xff]
        %v859 = vld [vmem:[#allocation2 + $0x28] sm:$0xff]
        %v860 = vld [vmem:[#allocation2 + $0x30] sm:$0xff]
        %v861 = vld [vmem:[#allocation2 + $0x38] sm:$0xff]
        %v862 = vld [vmem:[#allocation2 + $0x40] sm:$0xff]
        %v863 = vld [vmem:[#allocation2 + $0x48] sm:$0xff]
        %v864 = vld [vmem:[#allocation2 + $0x50] sm:$0xff]
        %v865 = vld [vmem:[#allocation2 + $0x58] sm:$0xff]
        %v866 = vld [vmem:[#allocation2 + $0x60] sm:$0xff]
        %v867 = vld [vmem:[#allocation2 + $0x68] sm:$0xff]
        %v868 = vld [vmem:[#allocation2 + $0x70] sm:$0xff]
        %v869 = vld [vmem:[#allocation2 + $0x78] sm:$0xff]
        %870 = vmatprep.subr.mxu0 0.0
        %871 = vmatpush1.msra.mxu0 %v822
        %872 = vmatprep.subr.mxu0 0.0
        %873 = vmatpush1.msra.mxu0 %v823
        %874 = vmatprep.subr.mxu0 0.0
        %875 = vmatpush1.msra.mxu0 %v824
        %876 = vmatprep.subr.mxu0 0.0
        %877 = vmatpush1.msra.mxu0 %v825
        %878 = vmatprep.subr.mxu0 0.0
        %879 = vmatpush1.msra.mxu0 %v826
        %880 = vmatprep.subr.mxu0 0.0
        %881 = vmatpush1.msra.mxu0 %v827
        %882 = vmatprep.subr.mxu0 0.0
        %883 = vmatpush1.msra.mxu0 %v828
        %884 = vmatprep.subr.mxu0 0.0
        %885 = vmatpush1.msra.mxu0 %v829
        %886 = vmatprep.subr.mxu0 0.0
        %887 = vmatpush1.msra.mxu0 %v830
        %888 = vmatprep.subr.mxu0 0.0
        %889 = vmatpush1.msra.mxu0 %v831
        %890 = vmatprep.subr.mxu0 0.0
        %891 = vmatpush1.msra.mxu0 %v832
        %892 = vmatprep.subr.mxu0 0.0
        %893 = vmatpush1.msra.mxu0 %v833
        %894 = vmatprep.subr.mxu0 0.0
        %895 = vmatpush1.msra.mxu0 %v834
        %896 = vmatprep.subr.mxu0 0.0
        %897 = vmatpush1.msra.mxu0 %v835
        %898 = vmatprep.subr.mxu0 0.0
        %899 = vmatpush1.msra.mxu0 %v836
        %900 = vmatprep.subr.mxu0 0.0
        %901 = vmatpush1.msra.mxu0 %v837
        %902 = vmatprep.subr.mxu0 0.0
        %903 = vmatpush1.msra.mxu0 %v838
        %904 = vmatprep.subr.mxu0 0.0
        %905 = vmatpush1.msra.mxu0 %v839
        %906 = vmatprep.subr.mxu0 0.0
        %907 = vmatpush1.msra.mxu0 %v840
        %908 = vmatprep.subr.mxu0 0.0
        %909 = vmatpush1.msra.mxu0 %v841
        %910 = vmatprep.subr.mxu0 0.0
        %911 = vmatpush1.msra.mxu0 %v842
        %912 = vmatprep.subr.mxu0 0.0
        %913 = vmatpush1.msra.mxu0 %v843
        %914 = vmatprep.subr.mxu0 0.0
        %915 = vmatpush1.msra.mxu0 %v844
        %916 = vmatprep.subr.mxu0 0.0
        %917 = vmatpush1.msra.mxu0 %v845
        %918 = vmatprep.subr.mxu0 0.0
        %919 = vmatpush1.msra.mxu0 %v846
        %920 = vmatprep.subr.mxu0 0.0
        %921 = vmatpush1.msra.mxu0 %v847
        %922 = vmatprep.subr.mxu0 0.0
        %923 = vmatpush1.msra.mxu0 %v848
        %924 = vmatprep.subr.mxu0 0.0
        %925 = vmatpush1.msra.mxu0 %v849
        %926 = vmatprep.subr.mxu0 0.0
        %927 = vmatpush1.msra.mxu0 %v850
        %928 = vmatprep.subr.mxu0 0.0
        %929 = vmatpush1.msra.mxu0 %v851
        %930 = vmatprep.subr.mxu0 0.0
        %931 = vmatpush1.msra.mxu0 %v852
        %932 = vmatprep.subr.mxu0 0.0
        %933 = vmatpush1.msra.mxu0 %v853
        %934 = vmatprep.mubr.f32.mxu0 %v759
        %935 = vmatmul.mubr.f32.gmra.mrb[0].mxu0 %v758
        %v936 = vpop.f32.mrb[0].mxu0
        %v937 = vadd.f32 0.0, %v936
        %v938 = vpop.f32.mrb[0].mxu0
        %939 = vmatprep.mubr.f32.mxu0 %v761
        %940 = vmatmul.mubr.f32.gmra.mrb[0].mxu0 %v760
        %v941 = vpop.f32.mrb[0].mxu0
        %v942 = vadd.f32 0.0, %v941
        %v943 = vpop.f32.mrb[0].mxu0
        %944 = vmatprep.mubr.f32.mxu0 %v763
        %945 = vmatmul.mubr.f32.gmra.mrb[0].mxu0 %v762
        %v946 = vpop.f32.mrb[0].mxu0
        %v947 = vadd.f32 0.0, %v946
        %v948 = vpop.f32.mrb[0].mxu0
        %949 = vmatprep.mubr.f32.mxu0 %v765
        %950 = vmatmul.mubr.f32.gmra.mrb[0].mxu0 %v764
        %v951 = vpop.f32.mrb[0].mxu0
        %v952 = vadd.f32 0.0, %v951
        %v953 = vpop.f32.mrb[0].mxu0
        %954 = vmatprep.mubr.f32.mxu0 %v767
        %955 = vmatmul.mubr.f32.gmra.mrb[0].mxu0 %v766
        %v956 = vpop.f32.mrb[0].mxu0
        %v957 = vadd.f32 0.0, %v956
        %v958 = vpop.f32.mrb[0].mxu0
        %959 = vmatprep.mubr.f32.mxu0 %v769
        %960 = vmatmul.mubr.f32.gmra.mrb[0].mxu0 %v768
        %v961 = vpop.f32.mrb[0].mxu0
        %v962 = vadd.f32 0.0, %v961
        %v963 = vpop.f32.mrb[0].mxu0
        %964 = vmatprep.mubr.f32.mxu0 %v771
        %965 = vmatmul.mubr.f32.gmra.mrb[0].mxu0 %v770
        %v966 = vpop.f32.mrb[0].mxu0
        %v967 = vadd.f32 0.0, %v966
        %v968 = vpop.f32.mrb[0].mxu0
        %969 = vmatprep.mubr.f32.mxu0 %v773
        %970 = vmatmul.mubr.f32.gmra.mrb[0].mxu0 %v772
        %v971 = vpop.f32.mrb[0].mxu0
        %v972 = vadd.f32 0.0, %v971
        %v973 = vpop.f32.mrb[0].mxu0
        %974 = vmatprep.mubr.f32.mxu0 %v775
        %975 = vmatmul.mubr.f32.gmra.mrb[0].mxu0 %v774
        %v976 = vpop.f32.mrb[0].mxu0
        %v977 = vadd.f32 0.0, %v976
        %v978 = vpop.f32.mrb[0].mxu0
        %979 = vmatprep.mubr.f32.mxu0 %v777
        %980 = vmatmul.mubr.f32.gmra.mrb[0].mxu0 %v776
        %v981 = vpop.f32.mrb[0].mxu0
        %v982 = vadd.f32 0.0, %v981
        %v983 = vpop.f32.mrb[0].mxu0
        %984 = vmatprep.mubr.f32.mxu0 %v779
        %985 = vmatmul.mubr.f32.gmra.mrb[0].mxu0 %v778
        %v986 = vpop.f32.mrb[0].mxu0
        %v987 = vadd.f32 0.0, %v986
        %v988 = vpop.f32.mrb[0].mxu0
        %989 = vmatprep.mubr.f32.mxu0 %v781
        %990 = vmatmul.mubr.f32.gmra.mrb[0].mxu0 %v780
        %v991 = vpop.f32.mrb[0].mxu0
        %v992 = vadd.f32 0.0, %v991
        %v993 = vpop.f32.mrb[0].mxu0
        %994 = vmatprep.mubr.f32.mxu0 %v783
        %995 = vmatmul.mubr.f32.gmra.mrb[0].mxu0 %v782
        %v996 = vpop.f32.mrb[0].mxu0
        %v997 = vadd.f32 0.0, %v996
        %v998 = vpop.f32.mrb[0].mxu0
        %999 = vmatprep.mubr.f32.mxu0 %v785
        %1000 = vmatmul.mubr.f32.gmra.mrb[0].mxu0 %v784
        %v1001 = vpop.f32.mrb[0].mxu0
        %v1002 = vadd.f32 0.0, %v1001
        %v1003 = vpop.f32.mrb[0].mxu0
        %1004 = vmatprep.mubr.f32.mxu0 %v787
        %1005 = vmatmul.mubr.f32.gmra.mrb[0].mxu0 %v786
        %v1006 = vpop.f32.mrb[0].mxu0
        %v1007 = vadd.f32 0.0, %v1006
        %v1008 = vpop.f32.mrb[0].mxu0
        %1009 = vmatprep.mubr.f32.mxu0 %v789
        %1010 = vmatmul.mubr.f32.gmra.mrb[0].mxu0 %v788
        %v1011 = vpop.f32.mrb[0].mxu0
        %v1012 = vadd.f32 0.0, %v1011
        %v1013 = vpop.f32.mrb[0].mxu0
        %1014 = vdwg.mxu0
        %v1015 = vadd.f32 %v854, %v937
        %v1016 = vadd.f32 %v855, %v942
        %v1017 = vadd.f32 %v856, %v947
        %v1018 = vadd.f32 %v857, %v952
        %v1019 = vadd.f32 %v858, %v957
        %v1020 = vadd.f32 %v859, %v962
        %v1021 = vadd.f32 %v860, %v967
        %v1022 = vadd.f32 %v861, %v972
        %v1023 = vadd.f32 %v862, %v977
        %v1024 = vadd.f32 %v863, %v982
        %v1025 = vadd.f32 %v864, %v987
        %v1026 = vadd.f32 %v865, %v992
        %v1027 = vadd.f32 %v866, %v997
        %v1028 = vadd.f32 %v867, %v1002
        %v1029 = vadd.f32 %v868, %v1007
        %v1030 = vadd.f32 %v869, %v1012
        %1031 = vst [vmem:[#allocation2] sm:$0xff] %v1015
        %1032 = vst [vmem:[#allocation2 + $0x8] sm:$0xff] %v1016
        %1033 = vst [vmem:[#allocation2 + $0x10] sm:$0xff] %v1017
        %1034 = vst [vmem:[#allocation2 + $0x18] sm:$0xff] %v1018
        %1035 = vst [vmem:[#allocation2 + $0x20] sm:$0xff] %v1019
        %1036 = vst [vmem:[#allocation2 + $0x28] sm:$0xff] %v1020
        %1037 = vst [vmem:[#allocation2 + $0x30] sm:$0xff] %v1021
        %1038 = vst [vmem:[#allocation2 + $0x38] sm:$0xff] %v1022
        %1039 = vst [vmem:[#allocation2 + $0x40] sm:$0xff] %v1023
        %1040 = vst [vmem:[#allocation2 + $0x48] sm:$0xff] %v1024
        %1041 = vst [vmem:[#allocation2 + $0x50] sm:$0xff] %v1025
        %1042 = vst [vmem:[#allocation2 + $0x58] sm:$0xff] %v1026
        %1043 = vst [vmem:[#allocation2 + $0x60] sm:$0xff] %v1027
        %1044 = vst [vmem:[#allocation2 + $0x68] sm:$0xff] %v1028
        %1045 = vst [vmem:[#allocation2 + $0x70] sm:$0xff] %v1029
        %1046 = vst [vmem:[#allocation2 + $0x78] sm:$0xff] %v1030
        %v1047 = vld [vmem:[#allocation3] sm:$0xff]
        %v1048 = vld [vmem:[#allocation3 + $0x8] sm:$0xff]
        %v1049 = vld [vmem:[#allocation3 + $0x10] sm:$0xff]
        %v1050 = vld [vmem:[#allocation3 + $0x18] sm:$0xff]
        %v1051 = vld [vmem:[#allocation3 + $0x20] sm:$0xff]
        %v1052 = vld [vmem:[#allocation3 + $0x28] sm:$0xff]
        %v1053 = vld [vmem:[#allocation3 + $0x30] sm:$0xff]
        %v1054 = vld [vmem:[#allocation3 + $0x38] sm:$0xff]
        %v1055 = vld [vmem:[#allocation3 + $0x40] sm:$0xff]
        %v1056 = vld [vmem:[#allocation3 + $0x48] sm:$0xff]
        %v1057 = vld [vmem:[#allocation3 + $0x50] sm:$0xff]
        %v1058 = vld [vmem:[#allocation3 + $0x58] sm:$0xff]
        %v1059 = vld [vmem:[#allocation3 + $0x60] sm:$0xff]
        %v1060 = vld [vmem:[#allocation3 + $0x68] sm:$0xff]
        %v1061 = vld [vmem:[#allocation3 + $0x70] sm:$0xff]
        %v1062 = vld [vmem:[#allocation3 + $0x78] sm:$0xff]
        %v1063 = vand.u32 2147483647, %v758
        %v1064 = vand.u32 2147483647, %v759
        %v1065 = vand.u32 2147483647, %v760
        %v1066 = vand.u32 2147483647, %v761
        %v1067 = vand.u32 2147483647, %v762
        %v1068 = vand.u32 2147483647, %v763
        %v1069 = vand.u32 2147483647, %v764
        %v1070 = vand.u32 2147483647, %v765
        %v1071 = vand.u32 2147483647, %v766
        %v1072 = vand.u32 2147483647, %v767
        %v1073 = vand.u32 2147483647, %v768
        %v1074 = vand.u32 2147483647, %v769
        %v1075 = vand.u32 2147483647, %v770
        %v1076 = vand.u32 2147483647, %v771
        %v1077 = vand.u32 2147483647, %v772
        %v1078 = vand.u32 2147483647, %v773
        %v1079 = vand.u32 2147483647, %v774
        %v1080 = vand.u32 2147483647, %v775
        %v1081 = vand.u32 2147483647, %v776
        %v1082 = vand.u32 2147483647, %v777
        %v1083 = vand.u32 2147483647, %v778
        %v1084 = vand.u32 2147483647, %v779
        %v1085 = vand.u32 2147483647, %v780
        %v1086 = vand.u32 2147483647, %v781
        %v1087 = vand.u32 2147483647, %v782
        %v1088 = vand.u32 2147483647, %v783
        %v1089 = vand.u32 2147483647, %v784
        %v1090 = vand.u32 2147483647, %v785
        %v1091 = vand.u32 2147483647, %v786
        %v1092 = vand.u32 2147483647, %v787
        %v1093 = vand.u32 2147483647, %v788
        %v1094 = vand.u32 2147483647, %v789
        %v1095 = vadd.f32 %v1063, %v1064
        %1096 = vadd.xlane.f32.xlu0 %v1095
        %v1097 = vpop.xlane.xlu0 %1096
        %v1098 = vadd.f32 %v1065, %v1066
        %1099 = vadd.xlane.f32.xlu0 %v1098
        %v1100 = vpop.xlane.xlu0 %1099
        %v1101 = vadd.f32 %v1067, %v1068
        %1102 = vadd.xlane.f32.xlu0 %v1101
        %v1103 = vpop.xlane.xlu0 %1102
        %v1104 = vadd.f32 %v1069, %v1070
        %1105 = vadd.xlane.f32.xlu0 %v1104
        %v1106 = vpop.xlane.xlu0 %1105
        %v1107 = vadd.f32 %v1071, %v1072
        %1108 = vadd.xlane.f32.xlu0 %v1107
        %v1109 = vpop.xlane.xlu0 %1108
        %v1110 = vadd.f32 %v1073, %v1074
        %1111 = vadd.xlane.f32.xlu0 %v1110
        %v1112 = vpop.xlane.xlu0 %1111
        %v1113 = vadd.f32 %v1075, %v1076
        %1114 = vadd.xlane.f32.xlu0 %v1113
        %v1115 = vpop.xlane.xlu0 %1114
        %v1116 = vadd.f32 %v1077, %v1078
        %1117 = vadd.xlane.f32.xlu0 %v1116
        %v1118 = vpop.xlane.xlu0 %1117
        %v1119 = vadd.f32 %v1079, %v1080
        %1120 = vadd.xlane.f32.xlu0 %v1119
        %v1121 = vpop.xlane.xlu0 %1120
        %v1122 = vadd.f32 %v1081, %v1082
        %1123 = vadd.xlane.f32.xlu0 %v1122
        %v1124 = vpop.xlane.xlu0 %1123
        %v1125 = vadd.f32 %v1083, %v1084
        %1126 = vadd.xlane.f32.xlu0 %v1125
        %v1127 = vpop.xlane.xlu0 %1126
        %v1128 = vadd.f32 %v1085, %v1086
        %1129 = vadd.xlane.f32.xlu0 %v1128
        %v1130 = vpop.xlane.xlu0 %1129
        %v1131 = vadd.f32 %v1087, %v1088
        %1132 = vadd.xlane.f32.xlu0 %v1131
        %v1133 = vpop.xlane.xlu0 %1132
        %v1134 = vadd.f32 %v1089, %v1090
        %1135 = vadd.xlane.f32.xlu0 %v1134
        %v1136 = vpop.xlane.xlu0 %1135
        %v1137 = vadd.f32 %v1091, %v1092
        %1138 = vadd.xlane.f32.xlu0 %v1137
        %v1139 = vpop.xlane.xlu0 %1138
        %v1140 = vadd.f32 %v1093, %v1094
        %1141 = vadd.xlane.f32.xlu0 %v1140
        %v1142 = vpop.xlane.xlu0 %1141
        %v1143 = vadd.f32 %v1047, %v1097
        %v1144 = vadd.f32 %v1048, %v1100
        %v1145 = vadd.f32 %v1049, %v1103
        %v1146 = vadd.f32 %v1050, %v1106
        %v1147 = vadd.f32 %v1051, %v1109
        %v1148 = vadd.f32 %v1052, %v1112
        %v1149 = vadd.f32 %v1053, %v1115
        %v1150 = vadd.f32 %v1054, %v1118
        %v1151 = vadd.f32 %v1055, %v1121
        %v1152 = vadd.f32 %v1056, %v1124
        %v1153 = vadd.f32 %v1057, %v1127
        %v1154 = vadd.f32 %v1058, %v1130
        %v1155 = vadd.f32 %v1059, %v1133
        %v1156 = vadd.f32 %v1060, %v1136
        %v1157 = vadd.f32 %v1061, %v1139
        %v1158 = vadd.f32 %v1062, %v1142
        %vm1159 = vcmask 7168
        %1160 = vst.msk [vmem:[#allocation3] sm:$0xff] %vm1159, %v1143
        %1161 = vst.msk [vmem:[#allocation3 + $0x8] sm:$0xff] %vm1159, %v1144
        %1162 = vst.msk [vmem:[#allocation3 + $0x10] sm:$0xff] %vm1159, %v1145
        %1163 = vst.msk [vmem:[#allocation3 + $0x18] sm:$0xff] %vm1159, %v1146
        %1164 = vst.msk [vmem:[#allocation3 + $0x20] sm:$0xff] %vm1159, %v1147
        %1165 = vst.msk [vmem:[#allocation3 + $0x28] sm:$0xff] %vm1159, %v1148
        %1166 = vst.msk [vmem:[#allocation3 + $0x30] sm:$0xff] %vm1159, %v1149
        %1167 = vst.msk [vmem:[#allocation3 + $0x38] sm:$0xff] %vm1159, %v1150
        %1168 = vst.msk [vmem:[#allocation3 + $0x40] sm:$0xff] %vm1159, %v1151
        %1169 = vst.msk [vmem:[#allocation3 + $0x48] sm:$0xff] %vm1159, %v1152
        %1170 = vst.msk [vmem:[#allocation3 + $0x50] sm:$0xff] %vm1159, %v1153
        %1171 = vst.msk [vmem:[#allocation3 + $0x58] sm:$0xff] %vm1159, %v1154
        %1172 = vst.msk [vmem:[#allocation3 + $0x60] sm:$0xff] %vm1159, %v1155
        %1173 = vst.msk [vmem:[#allocation3 + $0x68] sm:$0xff] %vm1159, %v1156
        %1174 = vst.msk [vmem:[#allocation3 + $0x70] sm:$0xff] %vm1159, %v1157
        %1175 = vst.msk [vmem:[#allocation3 + $0x78] sm:$0xff] %vm1159, %v1158
        %p1176 = scmp.eq.s32.totalorder %s37, 1
        // Predicated region
        $region57: #{sae_forward.1} parent=39 // pred_check
          %p1177 = pneg %p1176
        $region58: #{sae_forward.1} parent=39 // pred_check_branch
          %1179 = sbr.rel (%p1177) target = $region60
        $region59: #{sae_forward.1} parent=39 // pred_region
          %v1180 = vld [vmem:[#allocation2] sm:$0xff]
          %v1181 = vld [vmem:[#allocation2 + $0x8] sm:$0xff]
          %v1182 = vld [vmem:[#allocation2 + $0x10] sm:$0xff]
          %v1183 = vld [vmem:[#allocation2 + $0x18] sm:$0xff]
          %v1184 = vld [vmem:[#allocation2 + $0x20] sm:$0xff]
          %v1185 = vld [vmem:[#allocation2 + $0x28] sm:$0xff]
          %v1186 = vld [vmem:[#allocation2 + $0x30] sm:$0xff]
          %v1187 = vld [vmem:[#allocation2 + $0x38] sm:$0xff]
          %v1188 = vld [vmem:[#allocation2 + $0x40] sm:$0xff]
          %v1189 = vld [vmem:[#allocation2 + $0x48] sm:$0xff]
          %v1190 = vld [vmem:[#allocation2 + $0x50] sm:$0xff]
          %v1191 = vld [vmem:[#allocation2 + $0x58] sm:$0xff]
          %v1192 = vld [vmem:[#allocation2 + $0x60] sm:$0xff]
          %v1193 = vld [vmem:[#allocation2 + $0x68] sm:$0xff]
          %v1194 = vld [vmem:[#allocation2 + $0x70] sm:$0xff]
          %v1195 = vld [vmem:[#allocation2 + $0x78] sm:$0xff]
          %v1196 = vld [vmem:[%s4] sm:$0x1]
          %v1198 = vlaneseq
          %v1199 = vshrl.u32 %v1198, 7
          %v1200 = vsub.s32 0, %v1199
          %v1201 = vrot.slane %v1196, %v1200
          %v1203 = vadd.f32 %v1180, %v1201
          %v1204 = vadd.f32 %v1181, %v1201
          %v1205 = vadd.f32 %v1182, %v1201
          %v1206 = vadd.f32 %v1183, %v1201
          %v1207 = vadd.f32 %v1184, %v1201
          %v1208 = vadd.f32 %v1185, %v1201
          %v1209 = vadd.f32 %v1186, %v1201
          %v1210 = vadd.f32 %v1187, %v1201
          %v1211 = vadd.f32 %v1188, %v1201
          %v1212 = vadd.f32 %v1189, %v1201
          %v1213 = vadd.f32 %v1190, %v1201
          %v1214 = vadd.f32 %v1191, %v1201
          %v1215 = vadd.f32 %v1192, %v1201
          %v1216 = vadd.f32 %v1193, %v1201
          %v1217 = vadd.f32 %v1194, %v1201
          %v1218 = vadd.f32 %v1195, %v1201
          %1219 = vst [vmem:[%s432] sm:$0xff] %v1203
          %1220 = vst [vmem:[%s432 + $0x8] sm:$0xff] %v1204
          %1221 = vst [vmem:[%s432 + $0x10] sm:$0xff] %v1205
          %1222 = vst [vmem:[%s432 + $0x18] sm:$0xff] %v1206
          %1223 = vst [vmem:[%s432 + $0x20] sm:$0xff] %v1207
          %1224 = vst [vmem:[%s432 + $0x28] sm:$0xff] %v1208
          %1225 = vst [vmem:[%s432 + $0x30] sm:$0xff] %v1209
          %1226 = vst [vmem:[%s432 + $0x38] sm:$0xff] %v1210
          %1227 = vst [vmem:[%s432 + $0x40] sm:$0xff] %v1211
          %1228 = vst [vmem:[%s432 + $0x48] sm:$0xff] %v1212
          %1229 = vst [vmem:[%s432 + $0x50] sm:$0xff] %v1213
          %1230 = vst [vmem:[%s432 + $0x58] sm:$0xff] %v1214
          %1231 = vst [vmem:[%s432 + $0x60] sm:$0xff] %v1215
          %1232 = vst [vmem:[%s432 + $0x68] sm:$0xff] %v1216
          %1233 = vst [vmem:[%s432 + $0x70] sm:$0xff] %v1217
          %1234 = vst [vmem:[%s432 + $0x78] sm:$0xff] %v1218
          %v1235 = vsub.f32 %v1203, %v514
          %v1236 = vsub.f32 %v1204, %v515
          %v1237 = vsub.f32 %v1205, %v516
          %v1238 = vsub.f32 %v1206, %v517
          %v1239 = vsub.f32 %v1207, %v518
          %v1240 = vsub.f32 %v1208, %v519
          %v1241 = vsub.f32 %v1209, %v520
          %v1242 = vsub.f32 %v1210, %v521
          %v1243 = vsub.f32 %v1211, %v522
          %v1244 = vsub.f32 %v1212, %v523
          %v1245 = vsub.f32 %v1213, %v524
          %v1246 = vsub.f32 %v1214, %v525
          %v1247 = vsub.f32 %v1215, %v526
          %v1248 = vsub.f32 %v1216, %v527
          %v1249 = vsub.f32 %v1217, %v528
          %v1250 = vsub.f32 %v1218, %v529
          %v1251 = vmul.f32 %v1235, %v1235
          %v1252 = vmul.f32 %v1236, %v1236
          %v1253 = vmul.f32 %v1237, %v1237
          %v1254 = vmul.f32 %v1238, %v1238
          %v1255 = vmul.f32 %v1239, %v1239
          %v1256 = vmul.f32 %v1240, %v1240
          %v1257 = vmul.f32 %v1241, %v1241
          %v1258 = vmul.f32 %v1242, %v1242
          %v1259 = vmul.f32 %v1243, %v1243
          %v1260 = vmul.f32 %v1244, %v1244
          %v1261 = vmul.f32 %v1245, %v1245
          %v1262 = vmul.f32 %v1246, %v1246
          %v1263 = vmul.f32 %v1247, %v1247
          %v1264 = vmul.f32 %v1248, %v1248
          %v1265 = vmul.f32 %v1249, %v1249
          %v1266 = vmul.f32 %v1250, %v1250
          %1267 = vadd.xlane.f32.xlu0 %v1251
          %v1268 = vpop.xlane.xlu0 %1267
          %1269 = vadd.xlane.f32.xlu0 %v1252
          %v1270 = vpop.xlane.xlu0 %1269
          %1271 = vadd.xlane.f32.xlu0 %v1253
          %v1272 = vpop.xlane.xlu0 %1271
          %1273 = vadd.xlane.f32.xlu0 %v1254
          %v1274 = vpop.xlane.xlu0 %1273
          %1275 = vadd.xlane.f32.xlu0 %v1255
          %v1276 = vpop.xlane.xlu0 %1275
          %1277 = vadd.xlane.f32.xlu0 %v1256
          %v1278 = vpop.xlane.xlu0 %1277
          %1279 = vadd.xlane.f32.xlu0 %v1257
          %v1280 = vpop.xlane.xlu0 %1279
          %1281 = vadd.xlane.f32.xlu0 %v1258
          %v1282 = vpop.xlane.xlu0 %1281
          %1283 = vadd.xlane.f32.xlu0 %v1259
          %v1284 = vpop.xlane.xlu0 %1283
          %1285 = vadd.xlane.f32.xlu0 %v1260
          %v1286 = vpop.xlane.xlu0 %1285
          %1287 = vadd.xlane.f32.xlu0 %v1261
          %v1288 = vpop.xlane.xlu0 %1287
          %1289 = vadd.xlane.f32.xlu0 %v1262
          %v1290 = vpop.xlane.xlu0 %1289
          %1291 = vadd.xlane.f32.xlu0 %v1263
          %v1292 = vpop.xlane.xlu0 %1291
          %1293 = vadd.xlane.f32.xlu0 %v1264
          %v1294 = vpop.xlane.xlu0 %1293
          %1295 = vadd.xlane.f32.xlu0 %v1265
          %v1296 = vpop.xlane.xlu0 %1295
          %1297 = vadd.xlane.f32.xlu0 %v1266
          %v1298 = vpop.xlane.xlu0 %1297
          %1299 = vst [vmem:[%s469] sm:$0xff] %v1268
          %1300 = vst [vmem:[%s469 + $0x8] sm:$0xff] %v1270
          %1301 = vst [vmem:[%s469 + $0x10] sm:$0xff] %v1272
          %1302 = vst [vmem:[%s469 + $0x18] sm:$0xff] %v1274
          %1303 = vst [vmem:[%s469 + $0x20] sm:$0xff] %v1276
          %1304 = vst [vmem:[%s469 + $0x28] sm:$0xff] %v1278
          %1305 = vst [vmem:[%s469 + $0x30] sm:$0xff] %v1280
          %1306 = vst [vmem:[%s469 + $0x38] sm:$0xff] %v1282
          %1307 = vst [vmem:[%s469 + $0x40] sm:$0xff] %v1284
          %1308 = vst [vmem:[%s469 + $0x48] sm:$0xff] %v1286
          %1309 = vst [vmem:[%s469 + $0x50] sm:$0xff] %v1288
          %1310 = vst [vmem:[%s469 + $0x58] sm:$0xff] %v1290
          %1311 = vst [vmem:[%s469 + $0x60] sm:$0xff] %v1292
          %1312 = vst [vmem:[%s469 + $0x68] sm:$0xff] %v1294
          %1313 = vst [vmem:[%s469 + $0x70] sm:$0xff] %v1296
          %1314 = vst [vmem:[%s469 + $0x78] sm:$0xff] %v1298
          %v1315 = vld [vmem:[#allocation3] sm:$0xff]
          %v1316 = vld [vmem:[#allocation3 + $0x8] sm:$0xff]
          %v1317 = vld [vmem:[#allocation3 + $0x10] sm:$0xff]
          %v1318 = vld [vmem:[#allocation3 + $0x18] sm:$0xff]
          %v1319 = vld [vmem:[#allocation3 + $0x20] sm:$0xff]
          %v1320 = vld [vmem:[#allocation3 + $0x28] sm:$0xff]
          %v1321 = vld [vmem:[#allocation3 + $0x30] sm:$0xff]
          %v1322 = vld [vmem:[#allocation3 + $0x38] sm:$0xff]
          %v1323 = vld [vmem:[#allocation3 + $0x40] sm:$0xff]
          %v1324 = vld [vmem:[#allocation3 + $0x48] sm:$0xff]
          %v1325 = vld [vmem:[#allocation3 + $0x50] sm:$0xff]
          %v1326 = vld [vmem:[#allocation3 + $0x58] sm:$0xff]
          %v1327 = vld [vmem:[#allocation3 + $0x60] sm:$0xff]
          %v1328 = vld [vmem:[#allocation3 + $0x68] sm:$0xff]
          %v1329 = vld [vmem:[#allocation3 + $0x70] sm:$0xff]
          %v1330 = vld [vmem:[#allocation3 + $0x78] sm:$0xff]
          %1332 = vset.pattern.permute.xlu0 0
          %1333 = vperm.xlu0 %1332, %v1315
          %v1334 = vpop.permute.xlu0 %1333
          %1337 = vset.pattern.permute.xlu0 0
          %1338 = vperm.xlu0 %1337, %v1316
          %v1339 = vpop.permute.xlu0 %1338
          %1342 = vset.pattern.permute.xlu0 0
          %1343 = vperm.xlu0 %1342, %v1317
          %v1344 = vpop.permute.xlu0 %1343
          %1347 = vset.pattern.permute.xlu0 0
          %1348 = vperm.xlu0 %1347, %v1318
          %v1349 = vpop.permute.xlu0 %1348
          %1352 = vset.pattern.permute.xlu0 0
          %1353 = vperm.xlu0 %1352, %v1319
          %v1354 = vpop.permute.xlu0 %1353
          %1357 = vset.pattern.permute.xlu0 0
          %1358 = vperm.xlu0 %1357, %v1320
          %v1359 = vpop.permute.xlu0 %1358
          %1362 = vset.pattern.permute.xlu0 0
          %1363 = vperm.xlu0 %1362, %v1321
          %v1364 = vpop.permute.xlu0 %1363
          %1367 = vset.pattern.permute.xlu0 0
          %1368 = vperm.xlu0 %1367, %v1322
          %v1369 = vpop.permute.xlu0 %1368
          %1372 = vset.pattern.permute.xlu0 0
          %1373 = vperm.xlu0 %1372, %v1323
          %v1374 = vpop.permute.xlu0 %1373
          %1377 = vset.pattern.permute.xlu0 0
          %1378 = vperm.xlu0 %1377, %v1324
          %v1379 = vpop.permute.xlu0 %1378
          %1382 = vset.pattern.permute.xlu0 0
          %1383 = vperm.xlu0 %1382, %v1325
          %v1384 = vpop.permute.xlu0 %1383
          %1387 = vset.pattern.permute.xlu0 0
          %1388 = vperm.xlu0 %1387, %v1326
          %v1389 = vpop.permute.xlu0 %1388
          %1392 = vset.pattern.permute.xlu0 0
          %1393 = vperm.xlu0 %1392, %v1327
          %v1394 = vpop.permute.xlu0 %1393
          %1397 = vset.pattern.permute.xlu0 0
          %1398 = vperm.xlu0 %1397, %v1328
          %v1399 = vpop.permute.xlu0 %1398
          %1402 = vset.pattern.permute.xlu0 0
          %1403 = vperm.xlu0 %1402, %v1329
          %v1404 = vpop.permute.xlu0 %1403
          %1407 = vset.pattern.permute.xlu0 0
          %1408 = vperm.xlu0 %1407, %v1330
          %v1409 = vpop.permute.xlu0 %1408
          %1411 = vst [vmem:[%s475] sm:$0xff] %v1334
          %1412 = vst [vmem:[%s475 + $0x8] sm:$0xff] %v1339
          %1413 = vst [vmem:[%s475 + $0x10] sm:$0xff] %v1344
          %1414 = vst [vmem:[%s475 + $0x18] sm:$0xff] %v1349
          %1415 = vst [vmem:[%s475 + $0x20] sm:$0xff] %v1354
          %1416 = vst [vmem:[%s475 + $0x28] sm:$0xff] %v1359
          %1417 = vst [vmem:[%s475 + $0x30] sm:$0xff] %v1364
          %1418 = vst [vmem:[%s475 + $0x38] sm:$0xff] %v1369
          %1419 = vst [vmem:[%s475 + $0x40] sm:$0xff] %v1374
          %1420 = vst [vmem:[%s475 + $0x48] sm:$0xff] %v1379
          %1421 = vst [vmem:[%s475 + $0x50] sm:$0xff] %v1384
          %1422 = vst [vmem:[%s475 + $0x58] sm:$0xff] %v1389
          %1423 = vst [vmem:[%s475 + $0x60] sm:$0xff] %v1394
          %1424 = vst [vmem:[%s475 + $0x68] sm:$0xff] %v1399
          %1425 = vst [vmem:[%s475 + $0x70] sm:$0xff] %v1404
          %1426 = vst [vmem:[%s475 + $0x78] sm:$0xff] %v1409
        $region60: #{sae_forward.1} parent=39 // pred_fallthru
          _
        %s1427 = sand.u32 %s177, 1
        %s1428 = scalar_lea.sflag [#allocation6], %s1427
        %s1429 = sand.u32 %s177, 1
        %s1430 = smul.addr %s1429, 128
        %s1431 = scalar_lea.vmem [#allocation10], %s1430
        %s1432 = sand.u32 %s205, 1
        %s1433 = scalar_lea.sflag [#allocation12], %s1432
        %s1434 = sand.u32 %s205, 1
        %s1435 = smul.addr %s1434, 256
        %s1436 = scalar_lea.vmem [#allocation11], %s1435
        %s1437 = smul.u32 16, %s36
        %p1438 = scmp.lt.s32.totalorder %s1437, 31
        %s1439 = scalar_select %p1438, %s1437, 31
        %s1440 = smul.addr %s1439, 8
        %s1441 = scalar_lea.vmem %s7, %s1440
        %s1442 = smul.u32 16, %s36
        %p1443 = scmp.lt.s32.totalorder %s1442, 31
        %s1444 = scalar_select %p1443, %s1442, 31
        %s1445 = smul.addr %s1444, 8
        %s1446 = scalar_lea.vmem %s8, %s1445
        // Predicated region
        $region61: #{sae_forward.1} parent=39 // pred_check
          %p1447 = pneg %p187
        $region62: #{sae_forward.1} parent=39 // pred_check_branch
          %1449 = sbr.rel (%p1447) target = $region64
        $region63: #{sae_forward.1} parent=39 // pred_region
          %s1450 = smul.u32 16, %s36
          %s1452 = ssub.s32 2048, 2048
          %1453 = vsyncadd %s1428, %s1452
          %s1454 = smul.addr %s1450, 128
          %s1455 = scalar_lea.hbm %s5, %s1454
          %s1456 = sshll.u32 %s1431, 4
          %s1457 = int_to_ptr.vmem [resolvable:$true] %s1456
          %1462 = dma.vmem_to_hbm [thread:$0]  %s1457, 2048, %s1455, %s1428, 128, 128, 8
        $region64: #{sae_forward.1} parent=39 // pred_fallthru
          _
        // Predicated region
        $region65: #{sae_forward.1} parent=39 // pred_check
          %p1463 = pneg %p215
        $region66: #{sae_forward.1} parent=39 // pred_check_branch
          %1465 = sbr.rel (%p1463) target = $region68
        $region67: #{sae_forward.1} parent=39 // pred_region
          %s1466 = smul.u32 16, %s36
          %s1467 = smul.u32 2, %s37
          %s1469 = ssub.s32 4096, 4096
          %1470 = vsyncadd %s1433, %s1469
          %s1471 = smul.addr %s1466, 4
          %s1472 = sadd.s32 %s1467, %s1471
          %s1473 = smul.addr %s1472, 128
          %s1474 = scalar_lea.hbm %s6, %s1473
          %s1475 = sshll.u32 %s1436, 4
          %s1476 = int_to_ptr.vmem [resolvable:$true] %s1475
          %1481 = dma.vmem_to_hbm [thread:$0]  %s1476, 4096, %s1474, %s1433, 256, 512, 16
        $region68: #{sae_forward.1} parent=39 // pred_fallthru
          _
        // Predicated region
        $region69: #{sae_forward.1} parent=39 // pred_check
          %p1482 = pneg %p241
        $region70: #{sae_forward.1} parent=39 // pred_check_branch
          %1484 = sbr.rel (%p1482) target = $region72
        $region71: #{sae_forward.1} parent=39 // pred_region
          %s1485 = smul.u32 16, %s36
        $region72: #{sae_forward.1} parent=39 // pred_fallthru
          _
        // Predicated region
        $region73: #{sae_forward.1} parent=39 // pred_check
          %p1486 = pneg %p267
        $region74: #{sae_forward.1} parent=39 // pred_check_branch
          %1488 = sbr.rel (%p1486) target = $region76
        $region75: #{sae_forward.1} parent=39 // pred_region
          %s1489 = smul.u32 16, %s36
        $region76: #{sae_forward.1} parent=39 // pred_fallthru
          _
      $region40: #{sae_forward.1} parent=5 // pred_fallthru
        _
      %p1490 = scmp.le.s32.totalorder 2, %s27
      // Predicated region
      $region77: #{sae_forward.1} parent=5 // pred_check
        %p1491 = pneg %p1490
      $region78: #{sae_forward.1} parent=5 // pred_check_branch
        %1493 = sbr.rel (%p1491) target = $region80
      $region79: #{sae_forward.1} parent=5 // pred_region
        %s1494 = ssub.s32 %s27, 2
        // Predicated region
        $region81: #{sae_forward.1} parent=79 // pred_check
          %p1495 = pneg %p193
        $region82: #{sae_forward.1} parent=79 // pred_check_branch
          %1497 = sbr.rel (%p1495) target = $region84
        $region83: #{sae_forward.1} parent=79 // pred_region
          %s1498 = sand.u32 %s178, 1
          %s1499 = scalar_lea.sflag [#allocation6], %s1498
          %s1500 = sand.u32 %s178, 1
          %s1501 = smul.addr %s1500, 128
          %s1502 = scalar_lea.vmem [#allocation10], %s1501
          %1503 = dma.done %s1499, 2048
        $region84: #{sae_forward.1} parent=79 // pred_fallthru
          _
        // Predicated region
        $region85: #{sae_forward.1} parent=79 // pred_check
          %p1504 = pneg %p221
        $region86: #{sae_forward.1} parent=79 // pred_check_branch
          %1506 = sbr.rel (%p1504) target = $region88
        $region87: #{sae_forward.1} parent=79 // pred_region
          %s1507 = sand.u32 %s206, 1
          %s1508 = scalar_lea.sflag [#allocation12], %s1507
          %s1509 = sand.u32 %s206, 1
          %s1510 = smul.addr %s1509, 256
          %s1511 = scalar_lea.vmem [#allocation11], %s1510
          %1512 = dma.done %s1508, 4096
        $region88: #{sae_forward.1} parent=79 // pred_fallthru
          _
        // Predicated region
        $region89: #{sae_forward.1} parent=79 // pred_check
          %p1513 = pneg %p247
        $region90: #{sae_forward.1} parent=79 // pred_check_branch
          %1515 = sbr.rel (%p1513) target = $region92
        $region91: #{sae_forward.1} parent=79 // pred_region
          %s1516 = smul.u32 16, %s38
          %p1517 = scmp.lt.s32.totalorder %s1516, 31
          %s1518 = scalar_select %p1517, %s1516, 31
          %s1519 = smul.addr %s1518, 8
          %s1520 = scalar_lea.vmem %s7, %s1519
        $region92: #{sae_forward.1} parent=79 // pred_fallthru
          _
        // Predicated region
        $region93: #{sae_forward.1} parent=79 // pred_check
          %p1521 = pneg %p273
        $region94: #{sae_forward.1} parent=79 // pred_check_branch
          %1523 = sbr.rel (%p1521) target = $region96
        $region95: #{sae_forward.1} parent=79 // pred_region
          %s1524 = smul.u32 16, %s38
          %p1525 = scmp.lt.s32.totalorder %s1524, 31
          %s1526 = scalar_select %p1525, %s1524, 31
          %s1527 = smul.addr %s1526, 8
          %s1528 = scalar_lea.vmem %s8, %s1527
        $region96: #{sae_forward.1} parent=79 // pred_fallthru
          _
      $region80: #{sae_forward.1} parent=5 // pred_fallthru
        _
    $region6: #{sae_forward.1} parent=1 // loop_footer
      %s31 = sadd.s32 1, %s27
    $region7: #{sae_forward.1} parent=1 // loop_footer_branch
      %26 = sbr.rel target = $region3
    $region8: #{sae_forward.1} parent=1 // loop_exit
      _
    %1529 = vsyncpa [#allocation5], 1
    %s1530 = scalar_lea.sflag [#allocation5], 1
    %1531 = vsyncpa %s1530, 1
    %1532 = vsyncpa [#allocation8], 1
    %s1533 = scalar_lea.sflag [#allocation8], 1
    %1534 = vsyncpa %s1533, 1
    %1535 = vsyncpa [#allocation6], 1
    %s1536 = scalar_lea.sflag [#allocation6], 1
    %1537 = vsyncpa %s1536, 1
    %1538 = vsyncpa [#allocation12], 1
    %s1539 = scalar_lea.sflag [#allocation12], 1
    %1540 = vsyncpa %s1539, 1

// kernel: sae_forward.1
$region0: #{sae_forward.1}
  #allocation0 [shape = 'u32[]', space=smem, size = 0x4, offset = 0x4, fixed_abs, tag = 'smem constant byte address 0x4 - core index']
  #allocation1 [shape = 'u32[144,128]{1,0:T(1,128)}', space=vmem, size = 0x12000, scoped, tag = 'internal scratch']
  #allocation2 [shape = 'f32[128,128]{1,0:T(8,128)}', space=vmem, size = 0x10000, scoped, tag = 'scratch operand']
  #allocation3 [shape = 'f32[128,1]{1,0:T(8,128)}', space=vmem, size = 0x10000, scoped, tag = 'scratch operand']
  %s0 = inlined_call_operand.hbm [shape: f32[256,128], index: 0, kind: input, shape index: {}]
  %s1 = inlined_call_operand.hbm [shape: f32[128,512], index: 1, kind: input, shape index: {}]
  %s2 = inlined_call_operand.vmem [shape: f32[1,512], index: 2, kind: input, shape index: {}]
  %s3 = inlined_call_operand.hbm [shape: f32[512,128], index: 3, kind: input, shape index: {}]
  %s4 = inlined_call_operand.vmem [shape: f32[1,128], index: 4, kind: input, shape index: {}]
  %s5 = inlined_call_operand.hbm [shape: f32[256,128], index: 5, kind: output, shape index: {0}]
  %s6 = inlined_call_operand.hbm [shape: f32[256,512], index: 6, kind: output, shape index: {1}]
  %s7 = inlined_call_operand.vmem [shape: f32[256,128], index: 7, kind: output, shape index: {2}]
  %s8 = inlined_call_operand.vmem [shape: f32[256,128], index: 8, kind: output, shape index: {3}]
  %9 = xla_tuple %s5, %s6, %s7, %s8
  %s10 = sld [smem:[#allocation0]]
  $region97: #{sae_forward.1} parent=0
    _
  %s12 = ssub.s32 1, %s10
  %s13 = scalar_select 0, %s12, %s10
  $region1: #{sae_forward.1} parent=0
    #allocation4 [shape = 'u8[131072]{0}', space=vmem, size = 0x20000, scoped, tag = 'input window, operand 0']
    #allocation5 [shape = 's32[2]{0}', space=sflag, size = 0x8, scoped, tag = 'scoped memory for sae_forward.1']
    #allocation6 [shape = 's32[2]{0}', space=sflag, size = 0x8, scoped, tag = 'scoped memory for sae_forward.1']
    #allocation7 [shape = 'u8[262144]{0}', space=vmem, size = 0x40000, scoped, tag = 'input window, operand 1']
    #allocation8 [shape = 's32[2]{0}', space=sflag, size = 0x8, scoped, tag = 'scoped memory for sae_forward.1']
    #allocation9 [shape = 'u8[262144]{0}', space=vmem, size = 0x40000, scoped, tag = 'input window, operand 3']
    #allocation10 [shape = 'u8[131072]{0}', space=vmem, size = 0x20000, scoped, tag = 'output window, operand 0']
    #allocation11 [shape = 'u8[262144]{0}', space=vmem, size = 0x40000, scoped, tag = 'output window, operand 1']
    #allocation12 [shape = 's32[2]{0}', space=sflag, size = 0x8, scoped, tag = 'scoped memory for sae_forward.1']
    %14 = vsyncpa [#allocation5], 0
    %s15 = scalar_lea.sflag [#allocation5], 1
    %16 = vsyncpa %s15, 0
    %17 = vsyncpa [#allocation8], 0
    %s18 = scalar_lea.sflag [#allocation8], 1
    %19 = vsyncpa %s18, 0
    %20 = vsyncpa [#allocation6], 0
    %s21 = scalar_lea.sflag [#allocation6], 1
    %22 = vsyncpa %s21, 0
    %23 = vsyncpa [#allocation12], 0
    %s24 = scalar_lea.sflag [#allocation12], 1
    %25 = vsyncpa %s24, 0
    loop: start=0, step=1, limit=6
    $region2: #{sae_forward.1} parent=1 // loop_pre_header
      _
    $region3: #{sae_forward.1} parent=1 // loop_header
      %s27 = sphi 0, %s31
      %p28 = scmp.ge.s32.totalorder %s27, 6
      %s34 = sphi 0, %s46
      %s35 = sphi 0, %s42
      %s36 = sphi 0, %s34
      %s37 = sphi 0, %s35
      %s38 = sphi 0, %s36
      %s39 = sphi 0, %s37
      %s49 = sphi 0, %s51
      %s52 = sphi 0, %s49
      %s53 = sphi 0, %s52
      %s69 = sphi 0, %s53
      %s75 = sphi 0, %s77
      %s78 = sphi 0, %s75
      %s79 = sphi 0, %s78
      %s95 = sphi 0, %s79
      %s101 = sphi 0, %s103
      %s104 = sphi 0, %s101
      %s105 = sphi 0, %s104
      %s121 = sphi 0, %s105
      %s127 = sphi 0, %s129
      %s130 = sphi 0, %s127
      %s131 = sphi 0, %s130
      %s147 = sphi 0, %s131
      %s151 = sphi 0, %s151
      %s153 = sphi 0, %s151
      %s154 = sphi 0, %s153
      %s168 = sphi 0, %s154
      %s174 = sphi 0, %s176
      %s177 = sphi 0, %s174
      %s178 = sphi 0, %s177
      %s194 = sphi 0, %s178
      %s202 = sphi 0, %s204
      %s205 = sphi 0, %s202
      %s206 = sphi 0, %s205
      %s222 = sphi 0, %s206
      %s228 = sphi 0, %s230
      %s231 = sphi 0, %s228
      %s232 = sphi 0, %s231
      %s248 = sphi 0, %s232
      %s254 = sphi 0, %s256
      %s257 = sphi 0, %s254
      %s258 = sphi 0, %s257
      %s274 = sphi 0, %s258
    $region4: #{sae_forward.1} parent=1 // loop_header_branch
      %30 = sbr.rel (%p28) target = $region8
    $region5: #{sae_forward.1} parent=1 // loop_body
      %s32 = ssub.s32 %s27, 1
      %s33 = ssub.s32 %s27, 2
      %s40 = sadd.s32 1, %s35
      %p41 = scmp.ge.s32.totalorder %s40, 2
      %s42 = scalar_select %p41, 0, %s40
      %s43 = sadd.s32 1, %s34
      %s44 = scalar_select %p41, %s43, %s34
      %p45 = scmp.ge.s32.totalorder %s44, 2
      %s46 = scalar_select %p45, 0, %s44
      %s47 = ssub.s32 %s34, %s46
      %p48 = scmp.eq.s32.totalorder %s47, 0
      %s50 = sadd.s32 %s49, 1
      %s51 = scalar_select %p48, %s49, %s50
      %p54 = pneg %p48
      %p55 = scmp.eq.s32.totalorder %s27, 3
      %p56 = por %p54, %p55
      %p57 = scmp.ne.s32.totalorder %s49, %s52
      %p58 = scmp.eq.s32.totalorder %s27, 0
      %p59 = por %p57, %p58
      %p60 = scmp.ne.s32.totalorder %s49, %s52
      %p61 = scmp.eq.s32.totalorder %s32, 3
      %p62 = por %p60, %p61
      %p63 = scmp.ne.s32.totalorder %s52, %s53
      %p64 = scmp.eq.s32.totalorder %s32, 0
      %p65 = por %p63, %p64
      %p66 = scmp.ne.s32.totalorder %s52, %s53
      %p67 = scmp.eq.s32.totalorder %s33, 3
      %p68 = por %p66, %p67
      %p70 = scmp.ne.s32.totalorder %s53, %s69
      %p71 = scmp.eq.s32.totalorder %s33, 0
      %p72 = por %p70, %p71
      %s73 = ssub.s32 %s35, %s42
      %p74 = scmp.eq.s32.totalorder %s73, 0
      %s76 = sadd.s32 %s75, 1
      %s77 = scalar_select %p74, %s75, %s76
      %p80 = pneg %p74
      %p81 = scmp.eq.s32.totalorder %s27, 3
      %p82 = por %p80, %p81
      %p83 = scmp.ne.s32.totalorder %s75, %s78
      %p84 = scmp.eq.s32.totalorder %s27, 0
      %p85 = por %p83, %p84
      %p86 = scmp.ne.s32.totalorder %s75, %s78
      %p87 = scmp.eq.s32.totalorder %s32, 3
      %p88 = por %p86, %p87
      %p89 = scmp.ne.s32.totalorder %s78, %s79
      %p90 = scmp.eq.s32.totalorder %s32, 0
      %p91 = por %p89, %p90
      %p92 = scmp.ne.s32.totalorder %s78, %s79
      %p93 = scmp.eq.s32.totalorder %s33, 3
      %p94 = por %p92, %p93
      %p96 = scmp.ne.s32.totalorder %s79, %s95
      %p97 = scmp.eq.s32.totalorder %s33, 0
      %p98 = por %p96, %p97
      %s99 = ssub.s32 %s35, %s42
      %p100 = scmp.eq.s32.totalorder %s99, 0
      %s102 = sadd.s32 %s101, 1
      %s103 = scalar_select %p100, %s101, %s102
      %p106 = pneg %p100
      %p107 = scmp.eq.s32.totalorder %s27, 3
      %p108 = por %p106, %p107
      %p109 = scmp.ne.s32.totalorder %s101, %s104
      %p110 = scmp.eq.s32.totalorder %s27, 0
      %p111 = por %p109, %p110
      %p112 = scmp.ne.s32.totalorder %s101, %s104
      %p113 = scmp.eq.s32.totalorder %s32, 3
      %p114 = por %p112, %p113
      %p115 = scmp.ne.s32.totalorder %s104, %s105
      %p116 = scmp.eq.s32.totalorder %s32, 0
      %p117 = por %p115, %p116
      %p118 = scmp.ne.s32.totalorder %s104, %s105
      %p119 = scmp.eq.s32.totalorder %s33, 3
      %p120 = por %p118, %p119
      %p122 = scmp.ne.s32.totalorder %s105, %s121
      %p123 = scmp.eq.s32.totalorder %s33, 0
      %p124 = por %p122, %p123
      %s125 = ssub.s32 %s35, %s42
      %p126 = scmp.eq.s32.totalorder %s125, 0
      %s128 = sadd.s32 %s127, 1
      %s129 = scalar_select %p126, %s127, %s128
      %p132 = pneg %p126
      %p133 = scmp.eq.s32.totalorder %s27, 3
      %p134 = por %p132, %p133
      %p135 = scmp.ne.s32.totalorder %s127, %s130
      %p136 = scmp.eq.s32.totalorder %s27, 0
      %p137 = por %p135, %p136
      %p138 = scmp.ne.s32.totalorder %s127, %s130
      %p139 = scmp.eq.s32.totalorder %s32, 3
      %p140 = por %p138, %p139
      %p141 = scmp.ne.s32.totalorder %s130, %s131
      %p142 = scmp.eq.s32.totalorder %s32, 0
      %p143 = por %p141, %p142
      %p144 = scmp.ne.s32.totalorder %s130, %s131
      %p145 = scmp.eq.s32.totalorder %s33, 3
      %p146 = por %p144, %p145
      %p148 = scmp.ne.s32.totalorder %s131, %s147
      %p149 = scmp.eq.s32.totalorder %s33, 0
      %p150 = por %p148, %p149
      %s152 = sadd.s32 %s151, 1
      %p155 = scmp.eq.s32.totalorder %s27, 3
      %p156 = scmp.ne.s32.totalorder %s151, %s153
      %p157 = scmp.eq.s32.totalorder %s27, 0
      %p158 = por %p156, %p157
      %p159 = scmp.ne.s32.totalorder %s151, %s153
      %p160 = scmp.eq.s32.totalorder %s32, 3
      %p161 = por %p159, %p160
      %p162 = scmp.ne.s32.totalorder %s153, %s154
      %p163 = scmp.eq.s32.totalorder %s32, 0
      %p164 = por %p162, %p163
      %p165 = scmp.ne.s32.totalorder %s153, %s154
      %p166 = scmp.eq.s32.totalorder %s33, 3
      %p167 = por %p165, %p166
      %p169 = scmp.ne.s32.totalorder %s154, %s168
      %p170 = scmp.eq.s32.totalorder %s33, 0
      %p171 = por %p169, %p170
      %s172 = ssub.s32 %s34, %s46
      %p173 = scmp.eq.s32.totalorder %s172, 0
      %s175 = sadd.s32 %s174, 1
      %s176 = scalar_select %p173, %s174, %s175
      %p179 = pneg %p173
      %p180 = scmp.eq.s32.totalorder %s27, 3
      %p181 = por %p179, %p180
      %p182 = scmp.ne.s32.totalorder %s174, %s177
      %p183 = scmp.eq.s32.totalorder %s27, 0
      %p184 = por %p182, %p183
      %p185 = scmp.ne.s32.totalorder %s174, %s177
      %p186 = scmp.eq.s32.totalorder %s32, 3
      %p187 = por %p185, %p186
      %p188 = scmp.ne.s32.totalorder %s177, %s178
      %p189 = scmp.eq.s32.totalorder %s32, 0
      %p190 = por %p188, %p189
      %p191 = scmp.ne.s32.totalorder %s177, %s178
      %p192 = scmp.eq.s32.totalorder %s33, 3
      %p193 = por %p191, %p192
      %p195 = scmp.ne.s32.totalorder %s178, %s194
      %p196 = scmp.eq.s32.totalorder %s33, 0
      %p197 = por %p195, %p196
      %s198 = ssub.s32 %s34, %s46
      %s199 = ssub.s32 %s35, %s42
      %s200 = sor.u32 %s198, %s199
      %p201 = scmp.eq.s32.totalorder %s200, 0
      %s203 = sadd.s32 %s202, 1
      %s204 = scalar_select %p201, %s202, %s203
      %p207 = pneg %p201
      %p208 = scmp.eq.s32.totalorder %s27, 3
      %p209 = por %p207, %p208
      %p210 = scmp.ne.s32.totalorder %s202, %s205
      %p211 = scmp.eq.s32.totalorder %s27, 0
      %p212 = por %p210, %p211
      %p213 = scmp.ne.s32.totalorder %s202, %s205
      %p214 = scmp.eq.s32.totalorder %s32, 3
      %p215 = por %p213, %p214
      %p216 = scmp.ne.s32.totalorder %s205, %s206
      %p217 = scmp.eq.s32.totalorder %s32, 0
      %p218 = por %p216, %p217
      %p219 = scmp.ne.s32.totalorder %s205, %s206
      %p220 = scmp.eq.s32.totalorder %s33, 3
      %p221 = por %p219, %p220
      %p223 = scmp.ne.s32.totalorder %s206, %s222
      %p224 = scmp.eq.s32.totalorder %s33, 0
      %p225 = por %p223, %p224
      %s226 = ssub.s32 %s34, %s46
      %p227 = scmp.eq.s32.totalorder %s226, 0
      %s229 = sadd.s32 %s228, 1
      %s230 = scalar_select %p227, %s228, %s229
      %p233 = pneg %p227
      %p234 = scmp.eq.s32.totalorder %s27, 3
      %p235 = por %p233, %p234
      %p236 = scmp.ne.s32.totalorder %s228, %s231
      %p237 = scmp.eq.s32.totalorder %s27, 0
      %p238 = por %p236, %p237
      %p239 = scmp.ne.s32.totalorder %s228, %s231
      %p240 = scmp.eq.s32.totalorder %s32, 3
      %p241 = por %p239, %p240
      %p242 = scmp.ne.s32.totalorder %s231, %s232
      %p243 = scmp.eq.s32.totalorder %s32, 0
      %p244 = por %p242, %p243
      %p245 = scmp.ne.s32.totalorder %s231, %s232
      %p246 = scmp.eq.s32.totalorder %s33, 3
      %p247 = por %p245, %p246
      %p249 = scmp.ne.s32.totalorder %s232, %s248
      %p250 = scmp.eq.s32.totalorder %s33, 0
      %p251 = por %p249, %p250
      %s252 = ssub.s32 %s34, %s46
      %p253 = scmp.eq.s32.totalorder %s252, 0
      %s255 = sadd.s32 %s254, 1
      %s256 = scalar_select %p253, %s254, %s255
      %p259 = pneg %p253
      %p260 = scmp.eq.s32.totalorder %s27, 3
      %p261 = por %p259, %p260
      %p262 = scmp.ne.s32.totalorder %s254, %s257
      %p263 = scmp.eq.s32.totalorder %s27, 0
      %p264 = por %p262, %p263
      %p265 = scmp.ne.s32.totalorder %s254, %s257
      %p266 = scmp.eq.s32.totalorder %s32, 3
      %p267 = por %p265, %p266
      %p268 = scmp.ne.s32.totalorder %s257, %s258
      %p269 = scmp.eq.s32.totalorder %s32, 0
      %p270 = por %p268, %p269
      %p271 = scmp.ne.s32.totalorder %s257, %s258
      %p272 = scmp.eq.s32.totalorder %s33, 3
      %p273 = por %p271, %p272
      %p275 = scmp.ne.s32.totalorder %s258, %s274
      %p276 = scmp.eq.s32.totalorder %s33, 0
      %p277 = por %p275, %p276
      %p278 = scmp.le.s32.totalorder 1, %s27
      %p279 = scmp.lt.s32.totalorder %s27, 5
      %p280 = pnand %p278, %p279
      %p281 = pneg %p280
      // Predicated region
      $region9: #{sae_forward.1} parent=5 // pred_check
        _
      $region10: #{sae_forward.1} parent=5 // pred_check_branch
        %283 = sbr.rel (%p280) target = $region12
      $region11: #{sae_forward.1} parent=5 // pred_region
        %s284 = ssub.s32 %s27, 1
        // Predicated region
        $region13: #{sae_forward.1} parent=11 // pred_check
          %p285 = pneg %p164
        $region14: #{sae_forward.1} parent=11 // pred_check_branch
          %287 = sbr.rel (%p285) target = $region16
        $region15: #{sae_forward.1} parent=11 // pred_region
          _
        $region16: #{sae_forward.1} parent=11 // pred_fallthru
          _
      $region12: #{sae_forward.1} parent=5 // pred_fallthru
        _
      %p288 = scmp.lt.s32.totalorder %s27, 4
      // Predicated region
      $region17: #{sae_forward.1} parent=5 // pred_check
        %p289 = pneg %p288
      $region18: #{sae_forward.1} parent=5 // pred_check_branch
        %291 = sbr.rel (%p289) target = $region20
      $region19: #{sae_forward.1} parent=5 // pred_region
        // Predicated region
        $region21: #{sae_forward.1} parent=19 // pred_check
          %p292 = pneg %p59
        $region22: #{sae_forward.1} parent=19 // pred_check_branch
          %294 = sbr.rel (%p292) target = $region24
        $region23: #{sae_forward.1} parent=19 // pred_region
          %s295 = sand.u32 %s49, 1
          %s296 = scalar_lea.sflag [#allocation5], %s295
          %s297 = sand.u32 %s49, 1
          %s298 = smul.addr %s297, 128
          %s299 = scalar_lea.vmem [#allocation4], %s298
          %s300 = smul.u32 16, %s34
          %s302 = ssub.s32 2048, 2048
          %303 = vsyncadd %s296, %s302
          %s304 = smul.addr %s300, 128
          %s305 = scalar_lea.hbm %s0, %s304
          %s306 = sshll.u32 %s299, 4
          %s307 = int_to_ptr.vmem [resolvable:$true] %s306
          %312 = dma.hbm_to_vmem [thread:$0]  %s305, 2048, %s307, %s296, 128, 128, 8
        $region24: #{sae_forward.1} parent=19 // pred_fallthru
          _
        // Predicated region
        $region25: #{sae_forward.1} parent=19 // pred_check
          %p313 = pneg %p85
        $region26: #{sae_forward.1} parent=19 // pred_check_branch
          %315 = sbr.rel (%p313) target = $region28
        $region27: #{sae_forward.1} parent=19 // pred_region
          %s316 = sand.u32 %s27, 1
          %s317 = scalar_lea.sflag [#allocation8], %s316
          %s318 = sand.u32 %s75, 1
          %s319 = smul.addr %s318, 256
          %s320 = scalar_lea.vmem [#allocation7], %s319
          %s321 = smul.u32 2, %s35
          %s323 = ssub.s32 4096, 4096
          %324 = vsyncadd %s317, %s323
          %s325 = smul.addr %s321, 128
          %s326 = scalar_lea.hbm %s1, %s325
          %s327 = sshll.u32 %s320, 4
          %s328 = int_to_ptr.vmem [resolvable:$true] %s327
          %333 = dma.hbm_to_vmem [thread:$0]  %s326, 4096, %s328, %s317, 512, 256, 16
        $region28: #{sae_forward.1} parent=19 // pred_fallthru
          _
        // Predicated region
        $region29: #{sae_forward.1} parent=19 // pred_check
          %p334 = pneg %p111
        $region30: #{sae_forward.1} parent=19 // pred_check_branch
          %336 = sbr.rel (%p334) target = $region32
        $region31: #{sae_forward.1} parent=19 // pred_region
          %s337 = smul.u32 2, %s35
          %p338 = scmp.lt.s32.totalorder %s337, 3
          %s339 = scalar_select %p338, %s337, 3
          %s340 = scalar_lea.vmem %s2, %s339
          %s341 = smul.u32 2, %s35
        $region32: #{sae_forward.1} parent=19 // pred_fallthru
          _
        // Predicated region
        $region33: #{sae_forward.1} parent=19 // pred_check
          %p342 = pneg %p137
        $region34: #{sae_forward.1} parent=19 // pred_check_branch
          %344 = sbr.rel (%p342) target = $region36
        $region35: #{sae_forward.1} parent=19 // pred_region
          %s345 = sand.u32 %s27, 1
          %s346 = scalar_lea.sflag [#allocation8], %s345
          %s347 = sand.u32 %s127, 1
          %s348 = smul.addr %s347, 256
          %s349 = scalar_lea.vmem [#allocation9], %s348
          %s350 = smul.u32 32, %s35
          %s352 = ssub.s32 4096, 4096
          %353 = vsyncadd %s346, %s352
          %s354 = smul.addr %s350, 128
          %s355 = scalar_lea.hbm %s3, %s354
          %s356 = sshll.u32 %s349, 4
          %s357 = int_to_ptr.vmem [resolvable:$true] %s356
          %362 = dma.hbm_to_vmem [thread:$0]  %s355, 4096, %s357, %s346, 128, 128, 8
        $region36: #{sae_forward.1} parent=19 // pred_fallthru
          _
      $region20: #{sae_forward.1} parent=5 // pred_fallthru
        _
      %p363 = scmp.le.s32.totalorder 1, %s27
      %p364 = scmp.lt.s32.totalorder %s27, 5
      %p365 = pnand %p363, %p364
      %p366 = pneg %p365
      // Predicated region
      $region37: #{sae_forward.1} parent=5 // pred_check
        _
      $region38: #{sae_forward.1} parent=5 // pred_check_branch
        %368 = sbr.rel (%p365) target = $region40
      $region39: #{sae_forward.1} parent=5 // pred_region
        %s369 = ssub.s32 %s27, 1
        %s370 = sand.u32 %s52, 1
        %s371 = scalar_lea.sflag [#allocation5], %s370
        %s372 = sand.u32 %s52, 1
        %s373 = smul.addr %s372, 128
        %s374 = scalar_lea.vmem [#allocation4], %s373
        // Predicated region
        $region41: #{sae_forward.1} parent=39 // pred_check
          %p375 = pneg %p65
        $region42: #{sae_forward.1} parent=39 // pred_check_branch
          %377 = sbr.rel (%p375) target = $region44
        $region43: #{sae_forward.1} parent=39 // pred_region
          %378 = dma.done %s371, 2048
        $region44: #{sae_forward.1} parent=39 // pred_fallthru
          _
        %s379 = sand.u32 %s32, 1
        %s380 = scalar_lea.sflag [#allocation8], %s379
        %s381 = sand.u32 %s78, 1
        %s382 = smul.addr %s381, 256
        %s383 = scalar_lea.vmem [#allocation7], %s382
        // Predicated region
        $region45: #{sae_forward.1} parent=39 // pred_check
          %p384 = pneg %p91
        $region46: #{sae_forward.1} parent=39 // pred_check_branch
          %386 = sbr.rel (%p384) target = $region48
        $region47: #{sae_forward.1} parent=39 // pred_region
          %387 = dma.done %s380, 4096
        $region48: #{sae_forward.1} parent=39 // pred_fallthru
          _
        %s388 = sand.u32 %s32, 1
        %s389 = scalar_lea.sflag [#allocation8], %s388
        %s390 = sand.u32 %s130, 1
        %s391 = smul.addr %s390, 256
        %s392 = scalar_lea.vmem [#allocation9], %s391
        // Predicated region
        $region49: #{sae_forward.1} parent=39 // pred_check
          %p393 = pneg %p143
        $region50: #{sae_forward.1} parent=39 // pred_check_branch
          %395 = sbr.rel (%p393) target = $region52
        $region51: #{sae_forward.1} parent=39 // pred_region
          %396 = dma.done %s389, 4096
        $region52: #{sae_forward.1} parent=39 // pred_fallthru
          _
        %s397 = sand.u32 %s52, 1
        %s398 = scalar_lea.sflag [#allocation5], %s397
        %s399 = sand.u32 %s52, 1
        %s400 = smul.addr %s399, 128
        %s401 = scalar_lea.vmem [#allocation4], %s400
        %p402 = pneg %p65
        %p403 = pneg %p62
        %s404 = sand.u32 %s32, 1
        %s405 = scalar_lea.sflag [#allocation8], %s404
        %s406 = sand.u32 %s78, 1
        %s407 = smul.addr %s406, 256
        %s408 = scalar_lea.vmem [#allocation7], %s407
        %p409 = pneg %p91
        %p410 = pneg %p88
        %s411 = smul.u32 2, %s37
        %p412 = scmp.lt.s32.totalorder %s411, 3
        %s413 = scalar_select %p412, %s411, 3
        %s414 = scalar_lea.vmem %s2, %s413
        %p415 = pneg %p117
        %p416 = pneg %p114
        %s417 = sand.u32 %s32, 1
        %s418 = scalar_lea.sflag [#allocation8], %s417
        %s419 = sand.u32 %s130, 1
        %s420 = smul.addr %s419, 256
        %s421 = scalar_lea.vmem [#allocation9], %s420
        %p422 = pneg %p143
        %p423 = pneg %p140
        %p424 = pneg %p164
        %p425 = pneg %p161
        %p426 = pneg %p190
        %p427 = pneg %p187
        %s428 = sand.u32 %s177, 1
        %s429 = scalar_lea.sflag [#allocation6], %s428
        %s430 = sand.u32 %s177, 1
        %s431 = smul.addr %s430, 128
        %s432 = scalar_lea.vmem [#allocation10], %s431
        %p433 = pneg %p218
        %p434 = pneg %p215
        %s435 = sand.u32 %s205, 1
        %s436 = scalar_lea.sflag [#allocation12], %s435
        %s437 = sand.u32 %s205, 1
        %s438 = smul.addr %s437, 256
        %s439 = scalar_lea.vmem [#allocation11], %s438
        %p440 = pneg %p244
        %p441 = pneg %p241
        %s442 = smul.u32 16, %s36
        %p443 = scmp.lt.s32.totalorder %s442, 31
        %s444 = scalar_select %p443, %s442, 31
        %s445 = smul.addr %s444, 8
        %s446 = scalar_lea.vmem %s7, %s445
        %p447 = pneg %p270
        %p448 = pneg %p267
        %s449 = smul.u32 16, %s36
        %p450 = scmp.lt.s32.totalorder %s449, 31
        %s451 = scalar_select %p450, %s449, 31
        %s452 = smul.addr %s451, 8
        %s453 = scalar_lea.vmem %s8, %s452
        %s454 = smul.u32 16, %s36
        %s455 = smul.u32 2, %s37
        %s456 = smul.u32 2, %s37
        %p457 = scmp.lt.s32.totalorder %s456, 3
        %s458 = scalar_select %p457, %s456, 3
        %s459 = scalar_lea.vmem %s2, %s458
        %s460 = smul.u32 2, %s37
        %s461 = smul.u32 32, %s37
        %s462 = smul.u32 16, %s36
        %s463 = smul.u32 16, %s36
        %s464 = smul.u32 2, %s37
        %s465 = smul.u32 16, %s36
        %p466 = scmp.lt.s32.totalorder %s465, 31
        %s467 = scalar_select %p466, %s465, 31
        %s468 = smul.addr %s467, 8
        %s469 = scalar_lea.vmem %s7, %s468
        %s470 = smul.u32 16, %s36
        %s471 = smul.u32 16, %s36
        %p472 = scmp.lt.s32.totalorder %s471, 31
        %s473 = scalar_select %p472, %s471, 31
        %s474 = smul.addr %s473, 8
        %s475 = scalar_lea.vmem %s8, %s474
        %s476 = smul.u32 16, %s36
        %p477 = scmp.eq.s32.totalorder %s37, 0
        // Predicated region
        $region53: #{sae_forward.1} parent=39 // pred_check
          %p478 = pneg %p477
        $region54: #{sae_forward.1} parent=39 // pred_check_branch
          %480 = sbr.rel (%p478) target = $region56
        $region55: #{sae_forward.1} parent=39 // pred_region
          %481 = vst [vmem:[#allocation2] sm:$0xff] 0.0
          %482 = vst [vmem:[#allocation2 + $0x8] sm:$0xff] 0.0
          %483 = vst [vmem:[#allocation2 + $0x10] sm:$0xff] 0.0
          %484 = vst [vmem:[#allocation2 + $0x18] sm:$0xff] 0.0
          %485 = vst [vmem:[#allocation2 + $0x20] sm:$0xff] 0.0
          %486 = vst [vmem:[#allocation2 + $0x28] sm:$0xff] 0.0
          %487 = vst [vmem:[#allocation2 + $0x30] sm:$0xff] 0.0
          %488 = vst [vmem:[#allocation2 + $0x38] sm:$0xff] 0.0
          %489 = vst [vmem:[#allocation2 + $0x40] sm:$0xff] 0.0
          %490 = vst [vmem:[#allocation2 + $0x48] sm:$0xff] 0.0
          %491 = vst [vmem:[#allocation2 + $0x50] sm:$0xff] 0.0
          %492 = vst [vmem:[#allocation2 + $0x58] sm:$0xff] 0.0
          %493 = vst [vmem:[#allocation2 + $0x60] sm:$0xff] 0.0
          %494 = vst [vmem:[#allocation2 + $0x68] sm:$0xff] 0.0
          %495 = vst [vmem:[#allocation2 + $0x70] sm:$0xff] 0.0
          %496 = vst [vmem:[#allocation2 + $0x78] sm:$0xff] 0.0
          %vm497 = vcmask 7168
          %498 = vst.msk [vmem:[#allocation3] sm:$0xff] %vm497, 0.0
          %499 = vst.msk [vmem:[#allocation3 + $0x8] sm:$0xff] %vm497, 0.0
          %500 = vst.msk [vmem:[#allocation3 + $0x10] sm:$0xff] %vm497, 0.0
          %501 = vst.msk [vmem:[#allocation3 + $0x18] sm:$0xff] %vm497, 0.0
          %502 = vst.msk [vmem:[#allocation3 + $0x20] sm:$0xff] %vm497, 0.0
          %503 = vst.msk [vmem:[#allocation3 + $0x28] sm:$0xff] %vm497, 0.0
          %504 = vst.msk [vmem:[#allocation3 + $0x30] sm:$0xff] %vm497, 0.0
          %505 = vst.msk [vmem:[#allocation3 + $0x38] sm:$0xff] %vm497, 0.0
          %506 = vst.msk [vmem:[#allocation3 + $0x40] sm:$0xff] %vm497, 0.0
          %507 = vst.msk [vmem:[#allocation3 + $0x48] sm:$0xff] %vm497, 0.0
          %508 = vst.msk [vmem:[#allocation3 + $0x50] sm:$0xff] %vm497, 0.0
          %509 = vst.msk [vmem:[#allocation3 + $0x58] sm:$0xff] %vm497, 0.0
          %510 = vst.msk [vmem:[#allocation3 + $0x60] sm:$0xff] %vm497, 0.0
          %511 = vst.msk [vmem:[#allocation3 + $0x68] sm:$0xff] %vm497, 0.0
          %512 = vst.msk [vmem:[#allocation3 + $0x70] sm:$0xff] %vm497, 0.0
          %513 = vst.msk [vmem:[#allocation3 + $0x78] sm:$0xff] %vm497, 0.0
        $region56: #{sae_forward.1} parent=39 // pred_fallthru
          _
        %v514 = vld [vmem:[%s374] sm:$0xff]
        %v515 = vld [vmem:[%s374 + $0x8] sm:$0xff]
        %v516 = vld [vmem:[%s374 + $0x10] sm:$0xff]
        %v517 = vld [vmem:[%s374 + $0x18] sm:$0xff]
        %v518 = vld [vmem:[%s374 + $0x20] sm:$0xff]
        %v519 = vld [vmem:[%s374 + $0x28] sm:$0xff]
        %v520 = vld [vmem:[%s374 + $0x30] sm:$0xff]
        %v521 = vld [vmem:[%s374 + $0x38] sm:$0xff]
        %v522 = vld [vmem:[%s374 + $0x40] sm:$0xff]
        %v523 = vld [vmem:[%s374 + $0x48] sm:$0xff]
        %v524 = vld [vmem:[%s374 + $0x50] sm:$0xff]
        %v525 = vld [vmem:[%s374 + $0x58] sm:$0xff]
        %v526 = vld [vmem:[%s374 + $0x60] sm:$0xff]
        %v527 = vld [vmem:[%s374 + $0x68] sm:$0xff]
        %v528 = vld [vmem:[%s374 + $0x70] sm:$0xff]
        %v529 = vld [vmem:[%s374 + $0x78] sm:$0xff]
        %v530 = vld [vmem:[%s4] sm:$0x1]
        %v532 = vlaneseq
        %v533 = vshrl.u32 %v532, 7
        %v534 = vsub.s32 0, %v533
        %v535 = vrot.slane %v530, %v534
        %v537 = vsub.f32 %v514, %v535
        %v538 = vsub.f32 %v515, %v535
        %v539 = vsub.f32 %v516, %v535
        %v540 = vsub.f32 %v517, %v535
        %v541 = vsub.f32 %v518, %v535
        %v542 = vsub.f32 %v519, %v535
        %v543 = vsub.f32 %v520, %v535
        %v544 = vsub.f32 %v521, %v535
        %v545 = vsub.f32 %v522, %v535
        %v546 = vsub.f32 %v523, %v535
        %v547 = vsub.f32 %v524, %v535
        %v548 = vsub.f32 %v525, %v535
        %v549 = vsub.f32 %v526, %v535
        %v550 = vsub.f32 %v527, %v535
        %v551 = vsub.f32 %v528, %v535
        %v552 = vsub.f32 %v529, %v535
        %v553 = vld [vmem:[%s383] sm:$0xff]
        %v554 = vld [vmem:[%s383 + $0x8] sm:$0xff]
        %v555 = vld [vmem:[%s383 + $0x10] sm:$0xff]
        %v556 = vld [vmem:[%s383 + $0x18] sm:$0xff]
        %v557 = vld [vmem:[%s383 + $0x20] sm:$0xff]
        %v558 = vld [vmem:[%s383 + $0x28] sm:$0xff]
        %v559 = vld [vmem:[%s383 + $0x30] sm:$0xff]
        %v560 = vld [vmem:[%s383 + $0x38] sm:$0xff]
        %v561 = vld [vmem:[%s383 + $0x40] sm:$0xff]
        %v562 = vld [vmem:[%s383 + $0x48] sm:$0xff]
        %v563 = vld [vmem:[%s383 + $0x50] sm:$0xff]
        %v564 = vld [vmem:[%s383 + $0x58] sm:$0xff]
        %v565 = vld [vmem:[%s383 + $0x60] sm:$0xff]
        %v566 = vld [vmem:[%s383 + $0x68] sm:$0xff]
        %v567 = vld [vmem:[%s383 + $0x70] sm:$0xff]
        %v568 = vld [vmem:[%s383 + $0x78] sm:$0xff]
        %v569 = vld [vmem:[%s383 + $0x80] sm:$0xff]
        %v570 = vld [vmem:[%s383 + $0x88] sm:$0xff]
        %v571 = vld [vmem:[%s383 + $0x90] sm:$0xff]
        %v572 = vld [vmem:[%s383 + $0x98] sm:$0xff]
        %v573 = vld [vmem:[%s383 + $0xa0] sm:$0xff]
        %v574 = vld [vmem:[%s383 + $0xa8] sm:$0xff]
        %v575 = vld [vmem:[%s383 + $0xb0] sm:$0xff]
        %v576 = vld [vmem:[%s383 + $0xb8] sm:$0xff]
        %v577 = vld [vmem:[%s383 + $0xc0] sm:$0xff]
        %v578 = vld [vmem:[%s383 + $0xc8] sm:$0xff]
        %v579 = vld [vmem:[%s383 + $0xd0] sm:$0xff]
        %v580 = vld [vmem:[%s383 + $0xd8] sm:$0xff]
        %v581 = vld [vmem:[%s383 + $0xe0] sm:$0xff]
        %v582 = vld [vmem:[%s383 + $0xe8] sm:$0xff]
        %v583 = vld [vmem:[%s383 + $0xf0] sm:$0xff]
        %v584 = vld [vmem:[%s383 + $0xf8] sm:$0xff]
        %v585 = vld [vmem:[%s459] sm:$0x3]
        %v587 = vlaneseq
        %v588 = vshrl.u32 %v587, 7
        %v589 = vsub.s32 0, %v588
        %v590 = vrot.slane %v585, %v589
        %v591 = vlaneseq
        %v592 = vshrl.u32 %v591, 7
        %v593 = vsub.s32 1, %v592
        %v594 = vrot.slane %v585, %v593
        %597 = vmatprep.subr.mxu0 %v554
        %598 = vmatpush1.msra.mxu0 %v553
        %599 = vmatprep.subr.mxu0 %v556
        %600 = vmatpush1.msra.mxu0 %v555
        %601 = vmatprep.subr.mxu0 %v558
        %602 = vmatpush1.msra.mxu0 %v557
        %603 = vmatprep.subr.mxu0 %v560
        %604 = vmatpush1.msra.mxu0 %v559
        %605 = vmatprep.subr.mxu0 %v562
        %606 = vmatpush1.msra.mxu0 %v561
        %607 = vmatprep.subr.mxu0 %v564
        %608 = vmatpush1.msra.mxu0 %v563
        %609 = vmatprep.subr.mxu0 %v566
        %610 = vmatpush1.msra.mxu0 %v565
        %611 = vmatprep.subr.mxu0 %v568
        %612 = vmatpush1.msra.mxu0 %v567
        %613 = vmatprep.subr.mxu0 %v570
        %614 = vmatpush1.msra.mxu0 %v569
        %615 = vmatprep.subr.mxu0 %v572
        %616 = vmatpush1.msra.mxu0 %v571
        %617 = vmatprep.subr.mxu0 %v574
        %618 = vmatpush1.msra.mxu0 %v573
        %619 = vmatprep.subr.mxu0 %v576
        %620 = vmatpush1.msra.mxu0 %v575
        %621 = vmatprep.subr.mxu0 %v578
        %622 = vmatpush1.msra.mxu0 %v577
        %623 = vmatprep.subr.mxu0 %v580
        %624 = vmatpush1.msra.mxu0 %v579
        %625 = vmatprep.subr.mxu0 %v582
        %626 = vmatpush1.msra.mxu0 %v581
        %627 = vmatprep.subr.mxu0 %v584
        %628 = vmatpush1.msra.mxu0 %v583
        %629 = vmatprep.subr.mxu0 0.0
        %630 = vmatpush1.msra.mxu0 0.0
        %631 = vmatprep.subr.mxu0 0.0
        %632 = vmatpush1.msra.mxu0 0.0
        %633 = vmatprep.subr.mxu0 0.0
        %634 = vmatpush1.msra.mxu0 0.0
        %635 = vmatprep.subr.mxu0 0.0
        %636 = vmatpush1.msra.mxu0 0.0
        %637 = vmatprep.subr.mxu0 0.0
        %638 = vmatpush1.msra.mxu0 0.0
        %639 = vmatprep.subr.mxu0 0.0
        %640 = vmatpush1.msra.mxu0 0.0
        %641 = vmatprep.subr.mxu0 0.0
        %642 = vmatpush1.msra.mxu0 0.0
        %643 = vmatprep.subr.mxu0 0.0
        %644 = vmatpush1.msra.mxu0 0.0
        %645 = vmatprep.subr.mxu0 0.0
        %646 = vmatpush1.msra.mxu0 0.0
        %647 = vmatprep.subr.mxu0 0.0
        %648 = vmatpush1.msra.mxu0 0.0
        %649 = vmatprep.subr.mxu0 0.0
        %650 = vmatpush1.msra.mxu0 0.0
        %651 = vmatprep.subr.mxu0 0.0
        %652 = vmatpush1.msra.mxu0 0.0
        %653 = vmatprep.subr.mxu0 0.0
        %654 = vmatpush1.msra.mxu0 0.0
        %655 = vmatprep.subr.mxu0 0.0
        %656 = vmatpush1.msra.mxu0 0.0
        %657 = vmatprep.subr.mxu0 0.0
        %658 = vmatpush1.msra.mxu0 0.0
        %659 = vmatprep.subr.mxu0 0.0
        %660 = vmatpush1.msra.mxu0 0.0
        %661 = vmatprep.mubr.f32.mxu0 0.0
        %662 = vmatmul.mubr.f32.gmra.mrb[0].mxu0 %v537
        %v663 = vpop.f32.mrb[0].mxu0
        %v664 = vadd.f32 %v590, %v663
        %v665 = vpop.f32.mrb[0].mxu0
        %v666 = vadd.f32 %v594, %v665
        %667 = vmatprep.mubr.f32.mxu0 0.0
        %668 = vmatmul.mubr.f32.gmra.mrb[0].mxu0 %v538
        %v669 = vpop.f32.mrb[0].mxu0
        %v670 = vadd.f32 %v590, %v669
        %v671 = vpop.f32.mrb[0].mxu0
        %v672 = vadd.f32 %v594, %v671
        %673 = vmatprep.mubr.f32.mxu0 0.0
        %674 = vmatmul.mubr.f32.gmra.mrb[0].mxu0 %v539
        %v675 = vpop.f32.mrb[0].mxu0
        %v676 = vadd.f32 %v590, %v675
        %v677 = vpop.f32.mrb[0].mxu0
        %v678 = vadd.f32 %v594, %v677
        %679 = vmatprep.mubr.f32.mxu0 0.0
        %680 = vmatmul.mubr.f32.gmra.mrb[0].mxu0 %v540
        %v681 = vpop.f32.mrb[0].mxu0
        %v682 = vadd.f32 %v590, %v681
        %v683 = vpop.f32.mrb[0].mxu0
        %v684 = vadd.f32 %v594, %v683
        %685 = vmatprep.mubr.f32.mxu0 0.0
        %686 = vmatmul.mubr.f32.gmra.mrb[0].mxu0 %v541
        %v687 = vpop.f32.mrb[0].mxu0
        %v688 = vadd.f32 %v590, %v687
        %v689 = vpop.f32.mrb[0].mxu0
        %v690 = vadd.f32 %v594, %v689
        %691 = vmatprep.mubr.f32.mxu0 0.0
        %692 = vmatmul.mubr.f32.gmra.mrb[0].mxu0 %v542
        %v693 = vpop.f32.mrb[0].mxu0
        %v694 = vadd.f32 %v590, %v693
        %v695 = vpop.f32.mrb[0].mxu0
        %v696 = vadd.f32 %v594, %v695
        %697 = vmatprep.mubr.f32.mxu0 0.0
        %698 = vmatmul.mubr.f32.gmra.mrb[0].mxu0 %v543
        %v699 = vpop.f32.mrb[0].mxu0
        %v700 = vadd.f32 %v590, %v699
        %v701 = vpop.f32.mrb[0].mxu0
        %v702 = vadd.f32 %v594, %v701
        %703 = vmatprep.mubr.f32.mxu0 0.0
        %704 = vmatmul.mubr.f32.gmra.mrb[0].mxu0 %v544
        %v705 = vpop.f32.mrb[0].mxu0
        %v706 = vadd.f32 %v590, %v705
        %v707 = vpop.f32.mrb[0].mxu0
        %v708 = vadd.f32 %v594, %v707
        %709 = vmatprep.mubr.f32.mxu0 0.0
        %710 = vmatmul.mubr.f32.gmra.mrb[0].mxu0 %v545
        %v711 = vpop.f32.mrb[0].mxu0
        %v712 = vadd.f32 %v590, %v711
        %v713 = vpop.f32.mrb[0].mxu0
        %v714 = vadd.f32 %v594, %v713
        %715 = vmatprep.mubr.f32.mxu0 0.0
        %716 = vmatmul.mubr.f32.gmra.mrb[0].mxu0 %v546
        %v717 = vpop.f32.mrb[0].mxu0
        %v718 = vadd.f32 %v590, %v717
        %v719 = vpop.f32.mrb[0].mxu0
        %v720 = vadd.f32 %v594, %v719
        %721 = vmatprep.mubr.f32.mxu0 0.0
        %722 = vmatmul.mubr.f32.gmra.mrb[0].mxu0 %v547
        %v723 = vpop.f32.mrb[0].mxu0
        %v724 = vadd.f32 %v590, %v723
        %v725 = vpop.f32.mrb[0].mxu0
        %v726 = vadd.f32 %v594, %v725
        %727 = vmatprep.mubr.f32.mxu0 0.0
        %728 = vmatmul.mubr.f32.gmra.mrb[0].mxu0 %v548
        %v729 = vpop.f32.mrb[0].mxu0
        %v730 = vadd.f32 %v590, %v729
        %v731 = vpop.f32.mrb[0].mxu0
        %v732 = vadd.f32 %v594, %v731
        %733 = vmatprep.mubr.f32.mxu0 0.0
        %734 = vmatmul.mubr.f32.gmra.mrb[0].mxu0 %v549
        %v735 = vpop.f32.mrb[0].mxu0
        %v736 = vadd.f32 %v590, %v735
        %v737 = vpop.f32.mrb[0].mxu0
        %v738 = vadd.f32 %v594, %v737
        %739 = vmatprep.mubr.f32.mxu0 0.0
        %740 = vmatmul.mubr.f32.gmra.mrb[0].mxu0 %v550
        %v741 = vpop.f32.mrb[0].mxu0
        %v742 = vadd.f32 %v590, %v741
        %v743 = vpop.f32.mrb[0].mxu0
        %v744 = vadd.f32 %v594, %v743
        %745 = vmatprep.mubr.f32.mxu0 0.0
        %746 = vmatmul.mubr.f32.gmra.mrb[0].mxu0 %v551
        %v747 = vpop.f32.mrb[0].mxu0
        %v748 = vadd.f32 %v590, %v747
        %v749 = vpop.f32.mrb[0].mxu0
        %v750 = vadd.f32 %v594, %v749
        %751 = vmatprep.mubr.f32.mxu0 0.0
        %752 = vmatmul.mubr.f32.gmra.mrb[0].mxu0 %v552
        %v753 = vpop.f32.mrb[0].mxu0
        %v754 = vadd.f32 %v590, %v753
        %v755 = vpop.f32.mrb[0].mxu0
        %v756 = vadd.f32 %v594, %v755
        %757 = vdwg.mxu0
        %v758 = vmax.f32 %v664, 0.0
        %v759 = vmax.f32 %v666, 0.0
        %v760 = vmax.f32 %v670, 0.0
        %v761 = vmax.f32 %v672, 0.0
        %v762 = vmax.f32 %v676, 0.0
        %v763 = vmax.f32 %v678, 0.0
        %v764 = vmax.f32 %v682, 0.0
        %v765 = vmax.f32 %v684, 0.0
        %v766 = vmax.f32 %v688, 0.0
        %v767 = vmax.f32 %v690, 0.0
        %v768 = vmax.f32 %v694, 0.0
        %v769 = vmax.f32 %v696, 0.0
        %v770 = vmax.f32 %v700, 0.0
        %v771 = vmax.f32 %v702, 0.0
        %v772 = vmax.f32 %v706, 0.0
        %v773 = vmax.f32 %v708, 0.0
        %v774 = vmax.f32 %v712, 0.0
        %v775 = vmax.f32 %v714, 0.0
        %v776 = vmax.f32 %v718, 0.0
        %v777 = vmax.f32 %v720, 0.0
        %v778 = vmax.f32 %v724, 0.0
        %v779 = vmax.f32 %v726, 0.0
        %v780 = vmax.f32 %v730, 0.0
        %v781 = vmax.f32 %v732, 0.0
        %v782 = vmax.f32 %v736, 0.0
        %v783 = vmax.f32 %v738, 0.0
        %v784 = vmax.f32 %v742, 0.0
        %v785 = vmax.f32 %v744, 0.0
        %v786 = vmax.f32 %v748, 0.0
        %v787 = vmax.f32 %v750, 0.0
        %v788 = vmax.f32 %v754, 0.0
        %v789 = vmax.f32 %v756, 0.0
        %790 = vst [vmem:[%s439] sm:$0xff] %v758
        %791 = vst [vmem:[%s439 + $0x8] sm:$0xff] %v759
        %792 = vst [vmem:[%s439 + $0x10] sm:$0xff] %v760
        %793 = vst [vmem:[%s439 + $0x18] sm:$0xff] %v761
        %794 = vst [vmem:[%s439 + $0x20] sm:$0xff] %v762
        %795 = vst [vmem:[%s439 + $0x28] sm:$0xff] %v763
        %796 = vst [vmem:[%s439 + $0x30] sm:$0xff] %v764
        %797 = vst [vmem:[%s439 + $0x38] sm:$0xff] %v765
        %798 = vst [vmem:[%s439 + $0x40] sm:$0xff] %v766
        %799 = vst [vmem:[%s439 + $0x48] sm:$0xff] %v767
        %800 = vst [vmem:[%s439 + $0x50] sm:$0xff] %v768
        %801 = vst [vmem:[%s439 + $0x58] sm:$0xff] %v769
        %802 = vst [vmem:[%s439 + $0x60] sm:$0xff] %v770
        %803 = vst [vmem:[%s439 + $0x68] sm:$0xff] %v771
        %804 = vst [vmem:[%s439 + $0x70] sm:$0xff] %v772
        %805 = vst [vmem:[%s439 + $0x78] sm:$0xff] %v773
        %806 = vst [vmem:[%s439 + $0x80] sm:$0xff] %v774
        %807 = vst [vmem:[%s439 + $0x88] sm:$0xff] %v775
        %808 = vst [vmem:[%s439 + $0x90] sm:$0xff] %v776
        %809 = vst [vmem:[%s439 + $0x98] sm:$0xff] %v777
        %810 = vst [vmem:[%s439 + $0xa0] sm:$0xff] %v778
        %811 = vst [vmem:[%s439 + $0xa8] sm:$0xff] %v779
        %812 = vst [vmem:[%s439 + $0xb0] sm:$0xff] %v780
        %813 = vst [vmem:[%s439 + $0xb8] sm:$0xff] %v781
        %814 = vst [vmem:[%s439 + $0xc0] sm:$0xff] %v782
        %815 = vst [vmem:[%s439 + $0xc8] sm:$0xff] %v783
        %816 = vst [vmem:[%s439 + $0xd0] sm:$0xff] %v784
        %817 = vst [vmem:[%s439 + $0xd8] sm:$0xff] %v785
        %818 = vst [vmem:[%s439 + $0xe0] sm:$0xff] %v786
        %819 = vst [vmem:[%s439 + $0xe8] sm:$0xff] %v787
        %820 = vst [vmem:[%s439 + $0xf0] sm:$0xff] %v788
        %821 = vst [vmem:[%s439 + $0xf8] sm:$0xff] %v789
        %v822 = vld [vmem:[%s392] sm:$0xff]
        %v823 = vld [vmem:[%s392 + $0x8] sm:$0xff]
        %v824 = vld [vmem:[%s392 + $0x10] sm:$0xff]
        %v825 = vld [vmem:[%s392 + $0x18] sm:$0xff]
        %v826 = vld [vmem:[%s392 + $0x20] sm:$0xff]
        %v827 = vld [vmem:[%s392 + $0x28] sm:$0xff]
        %v828 = vld [vmem:[%s392 + $0x30] sm:$0xff]
        %v829 = vld [vmem:[%s392 + $0x38] sm:$0xff]
        %v830 = vld [vmem:[%s392 + $0x40] sm:$0xff]
        %v831 = vld [vmem:[%s392 + $0x48] sm:$0xff]
        %v832 = vld [vmem:[%s392 + $0x50] sm:$0xff]
        %v833 = vld [vmem:[%s392 + $0x58] sm:$0xff]
        %v834 = vld [vmem:[%s392 + $0x60] sm:$0xff]
        %v835 = vld [vmem:[%s392 + $0x68] sm:$0xff]
        %v836 = vld [vmem:[%s392 + $0x70] sm:$0xff]
        %v837 = vld [vmem:[%s392 + $0x78] sm:$0xff]
        %v838 = vld [vmem:[%s392 + $0x80] sm:$0xff]
        %v839 = vld [vmem:[%s392 + $0x88] sm:$0xff]
        %v840 = vld [vmem:[%s392 + $0x90] sm:$0xff]
        %v841 = vld [vmem:[%s392 + $0x98] sm:$0xff]
        %v842 = vld [vmem:[%s392 + $0xa0] sm:$0xff]
        %v843 = vld [vmem:[%s392 + $0xa8] sm:$0xff]
        %v844 = vld [vmem:[%s392 + $0xb0] sm:$0xff]
        %v845 = vld [vmem:[%s392 + $0xb8] sm:$0xff]
        %v846 = vld [vmem:[%s392 + $0xc0] sm:$0xff]
        %v847 = vld [vmem:[%s392 + $0xc8] sm:$0xff]
        %v848 = vld [vmem:[%s392 + $0xd0] sm:$0xff]
        %v849 = vld [vmem:[%s392 + $0xd8] sm:$0xff]
        %v850 = vld [vmem:[%s392 + $0xe0] sm:$0xff]
        %v851 = vld [vmem:[%s392 + $0xe8] sm:$0xff]
        %v852 = vld [vmem:[%s392 + $0xf0] sm:$0xff]
        %v853 = vld [vmem:[%s392 + $0xf8] sm:$0xff]
        %v854 = vld [vmem:[#allocation2] sm:$0xff]
        %v855 = vld [vmem:[#allocation2 + $0x8] sm:$0xff]
        %v856 = vld [vmem:[#allocation2 + $0x10] sm:$0xff]
        %v857 = vld [vmem:[#allocation2 + $0x18] sm:$0xff]
        %v858 = vld [vmem:[#allocation2 + $0x20] sm:$0xff]
        %v859 = vld [vmem:[#allocation2 + $0x28] sm:$0xff]
        %v860 = vld [vmem:[#allocation2 + $0x30] sm:$0xff]
        %v861 = vld [vmem:[#allocation2 + $0x38] sm:$0xff]
        %v862 = vld [vmem:[#allocation2 + $0x40] sm:$0xff]
        %v863 = vld [vmem:[#allocation2 + $0x48] sm:$0xff]
        %v864 = vld [vmem:[#allocation2 + $0x50] sm:$0xff]
        %v865 = vld [vmem:[#allocation2 + $0x58] sm:$0xff]
        %v866 = vld [vmem:[#allocation2 + $0x60] sm:$0xff]
        %v867 = vld [vmem:[#allocation2 + $0x68] sm:$0xff]
        %v868 = vld [vmem:[#allocation2 + $0x70] sm:$0xff]
        %v869 = vld [vmem:[#allocation2 + $0x78] sm:$0xff]
        %870 = vmatprep.subr.mxu0 0.0
        %871 = vmatpush1.msra.mxu0 %v822
        %872 = vmatprep.subr.mxu0 0.0
        %873 = vmatpush1.msra.mxu0 %v823
        %874 = vmatprep.subr.mxu0 0.0
        %875 = vmatpush1.msra.mxu0 %v824
        %876 = vmatprep.subr.mxu0 0.0
        %877 = vmatpush1.msra.mxu0 %v825
        %878 = vmatprep.subr.mxu0 0.0
        %879 = vmatpush1.msra.mxu0 %v826
        %880 = vmatprep.subr.mxu0 0.0
        %881 = vmatpush1.msra.mxu0 %v827
        %882 = vmatprep.subr.mxu0 0.0
        %883 = vmatpush1.msra.mxu0 %v828
        %884 = vmatprep.subr.mxu0 0.0
        %885 = vmatpush1.msra.mxu0 %v829
        %886 = vmatprep.subr.mxu0 0.0
        %887 = vmatpush1.msra.mxu0 %v830
        %888 = vmatprep.subr.mxu0 0.0
        %889 = vmatpush1.msra.mxu0 %v831
        %890 = vmatprep.subr.mxu0 0.0
        %891 = vmatpush1.msra.mxu0 %v832
        %892 = vmatprep.subr.mxu0 0.0
        %893 = vmatpush1.msra.mxu0 %v833
        %894 = vmatprep.subr.mxu0 0.0
        %895 = vmatpush1.msra.mxu0 %v834
        %896 = vmatprep.subr.mxu0 0.0
        %897 = vmatpush1.msra.mxu0 %v835
        %898 = vmatprep.subr.mxu0 0.0
        %899 = vmatpush1.msra.mxu0 %v836
        %900 = vmatprep.subr.mxu0 0.0
        %901 = vmatpush1.msra.mxu0 %v837
        %902 = vmatprep.subr.mxu0 0.0
        %903 = vmatpush1.msra.mxu0 %v838
        %904 = vmatprep.subr.mxu0 0.0
        %905 = vmatpush1.msra.mxu0 %v839
        %906 = vmatprep.subr.mxu0 0.0
        %907 = vmatpush1.msra.mxu0 %v840
        %908 = vmatprep.subr.mxu0 0.0
        %909 = vmatpush1.msra.mxu0 %v841
        %910 = vmatprep.subr.mxu0 0.0
        %911 = vmatpush1.msra.mxu0 %v842
        %912 = vmatprep.subr.mxu0 0.0
        %913 = vmatpush1.msra.mxu0 %v843
        %914 = vmatprep.subr.mxu0 0.0
        %915 = vmatpush1.msra.mxu0 %v844
        %916 = vmatprep.subr.mxu0 0.0
        %917 = vmatpush1.msra.mxu0 %v845
        %918 = vmatprep.subr.mxu0 0.0
        %919 = vmatpush1.msra.mxu0 %v846
        %920 = vmatprep.subr.mxu0 0.0
        %921 = vmatpush1.msra.mxu0 %v847
        %922 = vmatprep.subr.mxu0 0.0
        %923 = vmatpush1.msra.mxu0 %v848
        %924 = vmatprep.subr.mxu0 0.0
        %925 = vmatpush1.msra.mxu0 %v849
        %926 = vmatprep.subr.mxu0 0.0
        %927 = vmatpush1.msra.mxu0 %v850
        %928 = vmatprep.subr.mxu0 0.0
        %929 = vmatpush1.msra.mxu0 %v851
        %930 = vmatprep.subr.mxu0 0.0
        %931 = vmatpush1.msra.mxu0 %v852
        %932 = vmatprep.subr.mxu0 0.0
        %933 = vmatpush1.msra.mxu0 %v853
        %934 = vmatprep.mubr.f32.mxu0 %v759
        %935 = vmatmul.mubr.f32.gmra.mrb[0].mxu0 %v758
        %v936 = vpop.f32.mrb[0].mxu0
        %v937 = vadd.f32 0.0, %v936
        %v938 = vpop.f32.mrb[0].mxu0
        %939 = vmatprep.mubr.f32.mxu0 %v761
        %940 = vmatmul.mubr.f32.gmra.mrb[0].mxu0 %v760
        %v941 = vpop.f32.mrb[0].mxu0
        %v942 = vadd.f32 0.0, %v941
        %v943 = vpop.f32.mrb[0].mxu0
        %944 = vmatprep.mubr.f32.mxu0 %v763
        %945 = vmatmul.mubr.f32.gmra.mrb[0].mxu0 %v762
        %v946 = vpop.f32.mrb[0].mxu0
        %v947 = vadd.f32 0.0, %v946
        %v948 = vpop.f32.mrb[0].mxu0
        %949 = vmatprep.mubr.f32.mxu0 %v765
        %950 = vmatmul.mubr.f32.gmra.mrb[0].mxu0 %v764
        %v951 = vpop.f32.mrb[0].mxu0
        %v952 = vadd.f32 0.0, %v951
        %v953 = vpop.f32.mrb[0].mxu0
        %954 = vmatprep.mubr.f32.mxu0 %v767
        %955 = vmatmul.mubr.f32.gmra.mrb[0].mxu0 %v766
        %v956 = vpop.f32.mrb[0].mxu0
        %v957 = vadd.f32 0.0, %v956
        %v958 = vpop.f32.mrb[0].mxu0
        %959 = vmatprep.mubr.f32.mxu0 %v769
        %960 = vmatmul.mubr.f32.gmra.mrb[0].mxu0 %v768
        %v961 = vpop.f32.mrb[0].mxu0
        %v962 = vadd.f32 0.0, %v961
        %v963 = vpop.f32.mrb[0].mxu0
        %964 = vmatprep.mubr.f32.mxu0 %v771
        %965 = vmatmul.mubr.f32.gmra.mrb[0].mxu0 %v770
        %v966 = vpop.f32.mrb[0].mxu0
        %v967 = vadd.f32 0.0, %v966
        %v968 = vpop.f32.mrb[0].mxu0
        %969 = vmatprep.mubr.f32.mxu0 %v773
        %970 = vmatmul.mubr.f32.gmra.mrb[0].mxu0 %v772
        %v971 = vpop.f32.mrb[0].mxu0
        %v972 = vadd.f32 0.0, %v971
        %v973 = vpop.f32.mrb[0].mxu0
        %974 = vmatprep.mubr.f32.mxu0 %v775
        %975 = vmatmul.mubr.f32.gmra.mrb[0].mxu0 %v774
        %v976 = vpop.f32.mrb[0].mxu0
        %v977 = vadd.f32 0.0, %v976
        %v978 = vpop.f32.mrb[0].mxu0
        %979 = vmatprep.mubr.f32.mxu0 %v777
        %980 = vmatmul.mubr.f32.gmra.mrb[0].mxu0 %v776
        %v981 = vpop.f32.mrb[0].mxu0
        %v982 = vadd.f32 0.0, %v981
        %v983 = vpop.f32.mrb[0].mxu0
        %984 = vmatprep.mubr.f32.mxu0 %v779
        %985 = vmatmul.mubr.f32.gmra.mrb[0].mxu0 %v778
        %v986 = vpop.f32.mrb[0].mxu0
        %v987 = vadd.f32 0.0, %v986
        %v988 = vpop.f32.mrb[0].mxu0
        %989 = vmatprep.mubr.f32.mxu0 %v781
        %990 = vmatmul.mubr.f32.gmra.mrb[0].mxu0 %v780
        %v991 = vpop.f32.mrb[0].mxu0
        %v992 = vadd.f32 0.0, %v991
        %v993 = vpop.f32.mrb[0].mxu0
        %994 = vmatprep.mubr.f32.mxu0 %v783
        %995 = vmatmul.mubr.f32.gmra.mrb[0].mxu0 %v782
        %v996 = vpop.f32.mrb[0].mxu0
        %v997 = vadd.f32 0.0, %v996
        %v998 = vpop.f32.mrb[0].mxu0
        %999 = vmatprep.mubr.f32.mxu0 %v785
        %1000 = vmatmul.mubr.f32.gmra.mrb[0].mxu0 %v784
        %v1001 = vpop.f32.mrb[0].mxu0
        %v1002 = vadd.f32 0.0, %v1001
        %v1003 = vpop.f32.mrb[0].mxu0
        %1004 = vmatprep.mubr.f32.mxu0 %v787
        %1005 = vmatmul.mubr.f32.gmra.mrb[0].mxu0 %v786
        %v1006 = vpop.f32.mrb[0].mxu0
        %v1007 = vadd.f32 0.0, %v1006
        %v1008 = vpop.f32.mrb[0].mxu0
        %1009 = vmatprep.mubr.f32.mxu0 %v789
        %1010 = vmatmul.mubr.f32.gmra.mrb[0].mxu0 %v788
        %v1011 = vpop.f32.mrb[0].mxu0
        %v1012 = vadd.f32 0.0, %v1011
        %v1013 = vpop.f32.mrb[0].mxu0
        %1014 = vdwg.mxu0
        %v1015 = vadd.f32 %v854, %v937
        %v1016 = vadd.f32 %v855, %v942
        %v1017 = vadd.f32 %v856, %v947
        %v1018 = vadd.f32 %v857, %v952
        %v1019 = vadd.f32 %v858, %v957
        %v1020 = vadd.f32 %v859, %v962
        %v1021 = vadd.f32 %v860, %v967
        %v1022 = vadd.f32 %v861, %v972
        %v1023 = vadd.f32 %v862, %v977
        %v1024 = vadd.f32 %v863, %v982
        %v1025 = vadd.f32 %v864, %v987
        %v1026 = vadd.f32 %v865, %v992
        %v1027 = vadd.f32 %v866, %v997
        %v1028 = vadd.f32 %v867, %v1002
        %v1029 = vadd.f32 %v868, %v1007
        %v1030 = vadd.f32 %v869, %v1012
        %1031 = vst [vmem:[#allocation2] sm:$0xff] %v1015
        %1032 = vst [vmem:[#allocation2 + $0x8] sm:$0xff] %v1016
        %1033 = vst [vmem:[#allocation2 + $0x10] sm:$0xff] %v1017
        %1034 = vst [vmem:[#allocation2 + $0x18] sm:$0xff] %v1018
        %1035 = vst [vmem:[#allocation2 + $0x20] sm:$0xff] %v1019
        %1036 = vst [vmem:[#allocation2 + $0x28] sm:$0xff] %v1020
        %1037 = vst [vmem:[#allocation2 + $0x30] sm:$0xff] %v1021
        %1038 = vst [vmem:[#allocation2 + $0x38] sm:$0xff] %v1022
        %1039 = vst [vmem:[#allocation2 + $0x40] sm:$0xff] %v1023
        %1040 = vst [vmem:[#allocation2 + $0x48] sm:$0xff] %v1024
        %1041 = vst [vmem:[#allocation2 + $0x50] sm:$0xff] %v1025
        %1042 = vst [vmem:[#allocation2 + $0x58] sm:$0xff] %v1026
        %1043 = vst [vmem:[#allocation2 + $0x60] sm:$0xff] %v1027
        %1044 = vst [vmem:[#allocation2 + $0x68] sm:$0xff] %v1028
        %1045 = vst [vmem:[#allocation2 + $0x70] sm:$0xff] %v1029
        %1046 = vst [vmem:[#allocation2 + $0x78] sm:$0xff] %v1030
        %v1047 = vld [vmem:[#allocation3] sm:$0xff]
        %v1048 = vld [vmem:[#allocation3 + $0x8] sm:$0xff]
        %v1049 = vld [vmem:[#allocation3 + $0x10] sm:$0xff]
        %v1050 = vld [vmem:[#allocation3 + $0x18] sm:$0xff]
        %v1051 = vld [vmem:[#allocation3 + $0x20] sm:$0xff]
        %v1052 = vld [vmem:[#allocation3 + $0x28] sm:$0xff]
        %v1053 = vld [vmem:[#allocation3 + $0x30] sm:$0xff]
        %v1054 = vld [vmem:[#allocation3 + $0x38] sm:$0xff]
        %v1055 = vld [vmem:[#allocation3 + $0x40] sm:$0xff]
        %v1056 = vld [vmem:[#allocation3 + $0x48] sm:$0xff]
        %v1057 = vld [vmem:[#allocation3 + $0x50] sm:$0xff]
        %v1058 = vld [vmem:[#allocation3 + $0x58] sm:$0xff]
        %v1059 = vld [vmem:[#allocation3 + $0x60] sm:$0xff]
        %v1060 = vld [vmem:[#allocation3 + $0x68] sm:$0xff]
        %v1061 = vld [vmem:[#allocation3 + $0x70] sm:$0xff]
        %v1062 = vld [vmem:[#allocation3 + $0x78] sm:$0xff]
        %v1063 = vand.u32 2147483647, %v758
        %v1064 = vand.u32 2147483647, %v759
        %v1065 = vand.u32 2147483647, %v760
        %v1066 = vand.u32 2147483647, %v761
        %v1067 = vand.u32 2147483647, %v762
        %v1068 = vand.u32 2147483647, %v763
        %v1069 = vand.u32 2147483647, %v764
        %v1070 = vand.u32 2147483647, %v765
        %v1071 = vand.u32 2147483647, %v766
        %v1072 = vand.u32 2147483647, %v767
        %v1073 = vand.u32 2147483647, %v768
        %v1074 = vand.u32 2147483647, %v769
        %v1075 = vand.u32 2147483647, %v770
        %v1076 = vand.u32 2147483647, %v771
        %v1077 = vand.u32 2147483647, %v772
        %v1078 = vand.u32 2147483647, %v773
        %v1079 = vand.u32 2147483647, %v774
        %v1080 = vand.u32 2147483647, %v775
        %v1081 = vand.u32 2147483647, %v776
        %v1082 = vand.u32 2147483647, %v777
        %v1083 = vand.u32 2147483647, %v778
        %v1084 = vand.u32 2147483647, %v779
        %v1085 = vand.u32 2147483647, %v780
        %v1086 = vand.u32 2147483647, %v781
        %v1087 = vand.u32 2147483647, %v782
        %v1088 = vand.u32 2147483647, %v783
        %v1089 = vand.u32 2147483647, %v784
        %v1090 = vand.u32 2147483647, %v785
        %v1091 = vand.u32 2147483647, %v786
        %v1092 = vand.u32 2147483647, %v787
        %v1093 = vand.u32 2147483647, %v788
        %v1094 = vand.u32 2147483647, %v789
        %v1095 = vadd.f32 %v1063, %v1064
        %1096 = vadd.xlane.f32.xlu0 %v1095
        %v1097 = vpop.xlane.xlu0 %1096
        %v1098 = vadd.f32 %v1065, %v1066
        %1099 = vadd.xlane.f32.xlu0 %v1098
        %v1100 = vpop.xlane.xlu0 %1099
        %v1101 = vadd.f32 %v1067, %v1068
        %1102 = vadd.xlane.f32.xlu0 %v1101
        %v1103 = vpop.xlane.xlu0 %1102
        %v1104 = vadd.f32 %v1069, %v1070
        %1105 = vadd.xlane.f32.xlu0 %v1104
        %v1106 = vpop.xlane.xlu0 %1105
        %v1107 = vadd.f32 %v1071, %v1072
        %1108 = vadd.xlane.f32.xlu0 %v1107
        %v1109 = vpop.xlane.xlu0 %1108
        %v1110 = vadd.f32 %v1073, %v1074
        %1111 = vadd.xlane.f32.xlu0 %v1110
        %v1112 = vpop.xlane.xlu0 %1111
        %v1113 = vadd.f32 %v1075, %v1076
        %1114 = vadd.xlane.f32.xlu0 %v1113
        %v1115 = vpop.xlane.xlu0 %1114
        %v1116 = vadd.f32 %v1077, %v1078
        %1117 = vadd.xlane.f32.xlu0 %v1116
        %v1118 = vpop.xlane.xlu0 %1117
        %v1119 = vadd.f32 %v1079, %v1080
        %1120 = vadd.xlane.f32.xlu0 %v1119
        %v1121 = vpop.xlane.xlu0 %1120
        %v1122 = vadd.f32 %v1081, %v1082
        %1123 = vadd.xlane.f32.xlu0 %v1122
        %v1124 = vpop.xlane.xlu0 %1123
        %v1125 = vadd.f32 %v1083, %v1084
        %1126 = vadd.xlane.f32.xlu0 %v1125
        %v1127 = vpop.xlane.xlu0 %1126
        %v1128 = vadd.f32 %v1085, %v1086
        %1129 = vadd.xlane.f32.xlu0 %v1128
        %v1130 = vpop.xlane.xlu0 %1129
        %v1131 = vadd.f32 %v1087, %v1088
        %1132 = vadd.xlane.f32.xlu0 %v1131
        %v1133 = vpop.xlane.xlu0 %1132
        %v1134 = vadd.f32 %v1089, %v1090
        %1135 = vadd.xlane.f32.xlu0 %v1134
        %v1136 = vpop.xlane.xlu0 %1135
        %v1137 = vadd.f32 %v1091, %v1092
        %1138 = vadd.xlane.f32.xlu0 %v1137
        %v1139 = vpop.xlane.xlu0 %1138
        %v1140 = vadd.f32 %v1093, %v1094
        %1141 = vadd.xlane.f32.xlu0 %v1140
        %v1142 = vpop.xlane.xlu0 %1141
        %v1143 = vadd.f32 %v1047, %v1097
        %v1144 = vadd.f32 %v1048, %v1100
        %v1145 = vadd.f32 %v1049, %v1103
        %v1146 = vadd.f32 %v1050, %v1106
        %v1147 = vadd.f32 %v1051, %v1109
        %v1148 = vadd.f32 %v1052, %v1112
        %v1149 = vadd.f32 %v1053, %v1115
        %v1150 = vadd.f32 %v1054, %v1118
        %v1151 = vadd.f32 %v1055, %v1121
        %v1152 = vadd.f32 %v1056, %v1124
        %v1153 = vadd.f32 %v1057, %v1127
        %v1154 = vadd.f32 %v1058, %v1130
        %v1155 = vadd.f32 %v1059, %v1133
        %v1156 = vadd.f32 %v1060, %v1136
        %v1157 = vadd.f32 %v1061, %v1139
        %v1158 = vadd.f32 %v1062, %v1142
        %vm1159 = vcmask 7168
        %1160 = vst.msk [vmem:[#allocation3] sm:$0xff] %vm1159, %v1143
        %1161 = vst.msk [vmem:[#allocation3 + $0x8] sm:$0xff] %vm1159, %v1144
        %1162 = vst.msk [vmem:[#allocation3 + $0x10] sm:$0xff] %vm1159, %v1145
        %1163 = vst.msk [vmem:[#allocation3 + $0x18] sm:$0xff] %vm1159, %v1146
        %1164 = vst.msk [vmem:[#allocation3 + $0x20] sm:$0xff] %vm1159, %v1147
        %1165 = vst.msk [vmem:[#allocation3 + $0x28] sm:$0xff] %vm1159, %v1148
        %1166 = vst.msk [vmem:[#allocation3 + $0x30] sm:$0xff] %vm1159, %v1149
        %1167 = vst.msk [vmem:[#allocation3 + $0x38] sm:$0xff] %vm1159, %v1150
        %1168 = vst.msk [vmem:[#allocation3 + $0x40] sm:$0xff] %vm1159, %v1151
        %1169 = vst.msk [vmem:[#allocation3 + $0x48] sm:$0xff] %vm1159, %v1152
        %1170 = vst.msk [vmem:[#allocation3 + $0x50] sm:$0xff] %vm1159, %v1153
        %1171 = vst.msk [vmem:[#allocation3 + $0x58] sm:$0xff] %vm1159, %v1154
        %1172 = vst.msk [vmem:[#allocation3 + $0x60] sm:$0xff] %vm1159, %v1155
        %1173 = vst.msk [vmem:[#allocation3 + $0x68] sm:$0xff] %vm1159, %v1156
        %1174 = vst.msk [vmem:[#allocation3 + $0x70] sm:$0xff] %vm1159, %v1157
        %1175 = vst.msk [vmem:[#allocation3 + $0x78] sm:$0xff] %vm1159, %v1158
        %p1176 = scmp.eq.s32.totalorder %s37, 1
        // Predicated region
        $region57: #{sae_forward.1} parent=39 // pred_check
          %p1177 = pneg %p1176
        $region58: #{sae_forward.1} parent=39 // pred_check_branch
          %1179 = sbr.rel (%p1177) target = $region60
        $region59: #{sae_forward.1} parent=39 // pred_region
          %v1180 = vld [vmem:[#allocation2] sm:$0xff]
          %v1181 = vld [vmem:[#allocation2 + $0x8] sm:$0xff]
          %v1182 = vld [vmem:[#allocation2 + $0x10] sm:$0xff]
          %v1183 = vld [vmem:[#allocation2 + $0x18] sm:$0xff]
          %v1184 = vld [vmem:[#allocation2 + $0x20] sm:$0xff]
          %v1185 = vld [vmem:[#allocation2 + $0x28] sm:$0xff]
          %v1186 = vld [vmem:[#allocation2 + $0x30] sm:$0xff]
          %v1187 = vld [vmem:[#allocation2 + $0x38] sm:$0xff]
          %v1188 = vld [vmem:[#allocation2 + $0x40] sm:$0xff]
          %v1189 = vld [vmem:[#allocation2 + $0x48] sm:$0xff]
          %v1190 = vld [vmem:[#allocation2 + $0x50] sm:$0xff]
          %v1191 = vld [vmem:[#allocation2 + $0x58] sm:$0xff]
          %v1192 = vld [vmem:[#allocation2 + $0x60] sm:$0xff]
          %v1193 = vld [vmem:[#allocation2 + $0x68] sm:$0xff]
          %v1194 = vld [vmem:[#allocation2 + $0x70] sm:$0xff]
          %v1195 = vld [vmem:[#allocation2 + $0x78] sm:$0xff]
          %v1196 = vld [vmem:[%s4] sm:$0x1]
          %v1198 = vlaneseq
          %v1199 = vshrl.u32 %v1198, 7
          %v1200 = vsub.s32 0, %v1199
          %v1201 = vrot.slane %v1196, %v1200
          %v1203 = vadd.f32 %v1180, %v1201
          %v1204 = vadd.f32 %v1181, %v1201
          %v1205 = vadd.f32 %v1182, %v1201
          %v1206 = vadd.f32 %v1183, %v1201
          %v1207 = vadd.f32 %v1184, %v1201
          %v1208 = vadd.f32 %v1185, %v1201
          %v1209 = vadd.f32 %v1186, %v1201
          %v1210 = vadd.f32 %v1187, %v1201
          %v1211 = vadd.f32 %v1188, %v1201
          %v1212 = vadd.f32 %v1189, %v1201
          %v1213 = vadd.f32 %v1190, %v1201
          %v1214 = vadd.f32 %v1191, %v1201
          %v1215 = vadd.f32 %v1192, %v1201
          %v1216 = vadd.f32 %v1193, %v1201
          %v1217 = vadd.f32 %v1194, %v1201
          %v1218 = vadd.f32 %v1195, %v1201
          %1219 = vst [vmem:[%s432] sm:$0xff] %v1203
          %1220 = vst [vmem:[%s432 + $0x8] sm:$0xff] %v1204
          %1221 = vst [vmem:[%s432 + $0x10] sm:$0xff] %v1205
          %1222 = vst [vmem:[%s432 + $0x18] sm:$0xff] %v1206
          %1223 = vst [vmem:[%s432 + $0x20] sm:$0xff] %v1207
          %1224 = vst [vmem:[%s432 + $0x28] sm:$0xff] %v1208
          %1225 = vst [vmem:[%s432 + $0x30] sm:$0xff] %v1209
          %1226 = vst [vmem:[%s432 + $0x38] sm:$0xff] %v1210
          %1227 = vst [vmem:[%s432 + $0x40] sm:$0xff] %v1211
          %1228 = vst [vmem:[%s432 + $0x48] sm:$0xff] %v1212
          %1229 = vst [vmem:[%s432 + $0x50] sm:$0xff] %v1213
          %1230 = vst [vmem:[%s432 + $0x58] sm:$0xff] %v1214
          %1231 = vst [vmem:[%s432 + $0x60] sm:$0xff] %v1215
          %1232 = vst [vmem:[%s432 + $0x68] sm:$0xff] %v1216
          %1233 = vst [vmem:[%s432 + $0x70] sm:$0xff] %v1217
          %1234 = vst [vmem:[%s432 + $0x78] sm:$0xff] %v1218
          %v1235 = vsub.f32 %v1203, %v514
          %v1236 = vsub.f32 %v1204, %v515
          %v1237 = vsub.f32 %v1205, %v516
          %v1238 = vsub.f32 %v1206, %v517
          %v1239 = vsub.f32 %v1207, %v518
          %v1240 = vsub.f32 %v1208, %v519
          %v1241 = vsub.f32 %v1209, %v520
          %v1242 = vsub.f32 %v1210, %v521
          %v1243 = vsub.f32 %v1211, %v522
          %v1244 = vsub.f32 %v1212, %v523
          %v1245 = vsub.f32 %v1213, %v524
          %v1246 = vsub.f32 %v1214, %v525
          %v1247 = vsub.f32 %v1215, %v526
          %v1248 = vsub.f32 %v1216, %v527
          %v1249 = vsub.f32 %v1217, %v528
          %v1250 = vsub.f32 %v1218, %v529
          %v1251 = vmul.f32 %v1235, %v1235
          %v1252 = vmul.f32 %v1236, %v1236
          %v1253 = vmul.f32 %v1237, %v1237
          %v1254 = vmul.f32 %v1238, %v1238
          %v1255 = vmul.f32 %v1239, %v1239
          %v1256 = vmul.f32 %v1240, %v1240
          %v1257 = vmul.f32 %v1241, %v1241
          %v1258 = vmul.f32 %v1242, %v1242
          %v1259 = vmul.f32 %v1243, %v1243
          %v1260 = vmul.f32 %v1244, %v1244
          %v1261 = vmul.f32 %v1245, %v1245
          %v1262 = vmul.f32 %v1246, %v1246
          %v1263 = vmul.f32 %v1247, %v1247
          %v1264 = vmul.f32 %v1248, %v1248
          %v1265 = vmul.f32 %v1249, %v1249
          %v1266 = vmul.f32 %v1250, %v1250
          %1267 = vadd.xlane.f32.xlu0 %v1251
          %v1268 = vpop.xlane.xlu0 %1267
          %1269 = vadd.xlane.f32.xlu0 %v1252
          %v1270 = vpop.xlane.xlu0 %1269
          %1271 = vadd.xlane.f32.xlu0 %v1253
          %v1272 = vpop.xlane.xlu0 %1271
          %1273 = vadd.xlane.f32.xlu0 %v1254
          %v1274 = vpop.xlane.xlu0 %1273
          %1275 = vadd.xlane.f32.xlu0 %v1255
          %v1276 = vpop.xlane.xlu0 %1275
          %1277 = vadd.xlane.f32.xlu0 %v1256
          %v1278 = vpop.xlane.xlu0 %1277
          %1279 = vadd.xlane.f32.xlu0 %v1257
          %v1280 = vpop.xlane.xlu0 %1279
          %1281 = vadd.xlane.f32.xlu0 %v1258
          %v1282 = vpop.xlane.xlu0 %1281
          %1283 = vadd.xlane.f32.xlu0 %v1259
          %v1284 = vpop.xlane.xlu0 %1283
          %1285 = vadd.xlane.f32.xlu0 %v1260
          %v1286 = vpop.xlane.xlu0 %1285
          %1287 = vadd.xlane.f32.xlu0 %v1261
          %v1288 = vpop.xlane.xlu0 %1287
          %1289 = vadd.xlane.f32.xlu0 %v1262
          %v1290 = vpop.xlane.xlu0 %1289
          %1291 = vadd.xlane.f32.xlu0 %v1263
          %v1292 = vpop.xlane.xlu0 %1291
          %1293 = vadd.xlane.f32.xlu0 %v1264
          %v1294 = vpop.xlane.xlu0 %1293
          %1295 = vadd.xlane.f32.xlu0 %v1265
          %v1296 = vpop.xlane.xlu0 %1295
          %1297 = vadd.xlane.f32.xlu0 %v1266
          %v1298 = vpop.xlane.xlu0 %1297
          %1299 = vst [vmem:[%s469] sm:$0xff] %v1268
          %1300 = vst [vmem:[%s469 + $0x8] sm:$0xff] %v1270
          %1301 = vst [vmem:[%s469 + $0x10] sm:$0xff] %v1272
          %1302 = vst [vmem:[%s469 + $0x18] sm:$0xff] %v1274
          %1303 = vst [vmem:[%s469 + $0x20] sm:$0xff] %v1276
          %1304 = vst [vmem:[%s469 + $0x28] sm:$0xff] %v1278
          %1305 = vst [vmem:[%s469 + $0x30] sm:$0xff] %v1280
          %1306 = vst [vmem:[%s469 + $0x38] sm:$0xff] %v1282
          %1307 = vst [vmem:[%s469 + $0x40] sm:$0xff] %v1284
          %1308 = vst [vmem:[%s469 + $0x48] sm:$0xff] %v1286
          %1309 = vst [vmem:[%s469 + $0x50] sm:$0xff] %v1288
          %1310 = vst [vmem:[%s469 + $0x58] sm:$0xff] %v1290
          %1311 = vst [vmem:[%s469 + $0x60] sm:$0xff] %v1292
          %1312 = vst [vmem:[%s469 + $0x68] sm:$0xff] %v1294
          %1313 = vst [vmem:[%s469 + $0x70] sm:$0xff] %v1296
          %1314 = vst [vmem:[%s469 + $0x78] sm:$0xff] %v1298
          %v1315 = vld [vmem:[#allocation3] sm:$0xff]
          %v1316 = vld [vmem:[#allocation3 + $0x8] sm:$0xff]
          %v1317 = vld [vmem:[#allocation3 + $0x10] sm:$0xff]
          %v1318 = vld [vmem:[#allocation3 + $0x18] sm:$0xff]
          %v1319 = vld [vmem:[#allocation3 + $0x20] sm:$0xff]
          %v1320 = vld [vmem:[#allocation3 + $0x28] sm:$0xff]
          %v1321 = vld [vmem:[#allocation3 + $0x30] sm:$0xff]
          %v1322 = vld [vmem:[#allocation3 + $0x38] sm:$0xff]
          %v1323 = vld [vmem:[#allocation3 + $0x40] sm:$0xff]
          %v1324 = vld [vmem:[#allocation3 + $0x48] sm:$0xff]
          %v1325 = vld [vmem:[#allocation3 + $0x50] sm:$0xff]
          %v1326 = vld [vmem:[#allocation3 + $0x58] sm:$0xff]
          %v1327 = vld [vmem:[#allocation3 + $0x60] sm:$0xff]
          %v1328 = vld [vmem:[#allocation3 + $0x68] sm:$0xff]
          %v1329 = vld [vmem:[#allocation3 + $0x70] sm:$0xff]
          %v1330 = vld [vmem:[#allocation3 + $0x78] sm:$0xff]
          %1332 = vset.pattern.permute.xlu0 0
          %1333 = vperm.xlu0 %1332, %v1315
          %v1334 = vpop.permute.xlu0 %1333
          %1337 = vset.pattern.permute.xlu0 0
          %1338 = vperm.xlu0 %1337, %v1316
          %v1339 = vpop.permute.xlu0 %1338
          %1342 = vset.pattern.permute.xlu0 0
          %1343 = vperm.xlu0 %1342, %v1317
          %v1344 = vpop.permute.xlu0 %1343
          %1347 = vset.pattern.permute.xlu0 0
          %1348 = vperm.xlu0 %1347, %v1318
          %v1349 = vpop.permute.xlu0 %1348
          %1352 = vset.pattern.permute.xlu0 0
          %1353 = vperm.xlu0 %1352, %v1319
          %v1354 = vpop.permute.xlu0 %1353
          %1357 = vset.pattern.permute.xlu0 0
          %1358 = vperm.xlu0 %1357, %v1320
          %v1359 = vpop.permute.xlu0 %1358
          %1362 = vset.pattern.permute.xlu0 0
          %1363 = vperm.xlu0 %1362, %v1321
          %v1364 = vpop.permute.xlu0 %1363
          %1367 = vset.pattern.permute.xlu0 0
          %1368 = vperm.xlu0 %1367, %v1322
          %v1369 = vpop.permute.xlu0 %1368
          %1372 = vset.pattern.permute.xlu0 0
          %1373 = vperm.xlu0 %1372, %v1323
          %v1374 = vpop.permute.xlu0 %1373
          %1377 = vset.pattern.permute.xlu0 0
          %1378 = vperm.xlu0 %1377, %v1324
          %v1379 = vpop.permute.xlu0 %1378
          %1382 = vset.pattern.permute.xlu0 0
          %1383 = vperm.xlu0 %1382, %v1325
          %v1384 = vpop.permute.xlu0 %1383
          %1387 = vset.pattern.permute.xlu0 0
          %1388 = vperm.xlu0 %1387, %v1326
          %v1389 = vpop.permute.xlu0 %1388
          %1392 = vset.pattern.permute.xlu0 0
          %1393 = vperm.xlu0 %1392, %v1327
          %v1394 = vpop.permute.xlu0 %1393
          %1397 = vset.pattern.permute.xlu0 0
          %1398 = vperm.xlu0 %1397, %v1328
          %v1399 = vpop.permute.xlu0 %1398
          %1402 = vset.pattern.permute.xlu0 0
          %1403 = vperm.xlu0 %1402, %v1329
          %v1404 = vpop.permute.xlu0 %1403
          %1407 = vset.pattern.permute.xlu0 0
          %1408 = vperm.xlu0 %1407, %v1330
          %v1409 = vpop.permute.xlu0 %1408
          %1411 = vst [vmem:[%s475] sm:$0xff] %v1334
          %1412 = vst [vmem:[%s475 + $0x8] sm:$0xff] %v1339
          %1413 = vst [vmem:[%s475 + $0x10] sm:$0xff] %v1344
          %1414 = vst [vmem:[%s475 + $0x18] sm:$0xff] %v1349
          %1415 = vst [vmem:[%s475 + $0x20] sm:$0xff] %v1354
          %1416 = vst [vmem:[%s475 + $0x28] sm:$0xff] %v1359
          %1417 = vst [vmem:[%s475 + $0x30] sm:$0xff] %v1364
          %1418 = vst [vmem:[%s475 + $0x38] sm:$0xff] %v1369
          %1419 = vst [vmem:[%s475 + $0x40] sm:$0xff] %v1374
          %1420 = vst [vmem:[%s475 + $0x48] sm:$0xff] %v1379
          %1421 = vst [vmem:[%s475 + $0x50] sm:$0xff] %v1384
          %1422 = vst [vmem:[%s475 + $0x58] sm:$0xff] %v1389
          %1423 = vst [vmem:[%s475 + $0x60] sm:$0xff] %v1394
          %1424 = vst [vmem:[%s475 + $0x68] sm:$0xff] %v1399
          %1425 = vst [vmem:[%s475 + $0x70] sm:$0xff] %v1404
          %1426 = vst [vmem:[%s475 + $0x78] sm:$0xff] %v1409
        $region60: #{sae_forward.1} parent=39 // pred_fallthru
          _
        %s1427 = sand.u32 %s177, 1
        %s1428 = scalar_lea.sflag [#allocation6], %s1427
        %s1429 = sand.u32 %s177, 1
        %s1430 = smul.addr %s1429, 128
        %s1431 = scalar_lea.vmem [#allocation10], %s1430
        %s1432 = sand.u32 %s205, 1
        %s1433 = scalar_lea.sflag [#allocation12], %s1432
        %s1434 = sand.u32 %s205, 1
        %s1435 = smul.addr %s1434, 256
        %s1436 = scalar_lea.vmem [#allocation11], %s1435
        %s1437 = smul.u32 16, %s36
        %p1438 = scmp.lt.s32.totalorder %s1437, 31
        %s1439 = scalar_select %p1438, %s1437, 31
        %s1440 = smul.addr %s1439, 8
        %s1441 = scalar_lea.vmem %s7, %s1440
        %s1442 = smul.u32 16, %s36
        %p1443 = scmp.lt.s32.totalorder %s1442, 31
        %s1444 = scalar_select %p1443, %s1442, 31
        %s1445 = smul.addr %s1444, 8
        %s1446 = scalar_lea.vmem %s8, %s1445
        // Predicated region
        $region61: #{sae_forward.1} parent=39 // pred_check
          %p1447 = pneg %p187
        $region62: #{sae_forward.1} parent=39 // pred_check_branch
          %1449 = sbr.rel (%p1447) target = $region64
        $region63: #{sae_forward.1} parent=39 // pred_region
          %s1450 = smul.u32 16, %s36
          %s1452 = ssub.s32 2048, 2048
          %1453 = vsyncadd %s1428, %s1452
          %s1454 = smul.addr %s1450, 128
          %s1455 = scalar_lea.hbm %s5, %s1454
          %s1456 = sshll.u32 %s1431, 4
          %s1457 = int_to_ptr.vmem [resolvable:$true] %s1456
          %1462 = dma.vmem_to_hbm [thread:$0]  %s1457, 2048, %s1455, %s1428, 128, 128, 8
        $region64: #{sae_forward.1} parent=39 // pred_fallthru
          _
        // Predicated region
        $region65: #{sae_forward.1} parent=39 // pred_check
          %p1463 = pneg %p215
        $region66: #{sae_forward.1} parent=39 // pred_check_branch
          %1465 = sbr.rel (%p1463) target = $region68
        $region67: #{sae_forward.1} parent=39 // pred_region
          %s1466 = smul.u32 16, %s36
          %s1467 = smul.u32 2, %s37
          %s1469 = ssub.s32 4096, 4096
          %1470 = vsyncadd %s1433, %s1469
          %s1471 = smul.addr %s1466, 4
          %s1472 = sadd.s32 %s1467, %s1471
          %s1473 = smul.addr %s1472, 128
          %s1474 = scalar_lea.hbm %s6, %s1473
          %s1475 = sshll.u32 %s1436, 4
          %s1476 = int_to_ptr.vmem [resolvable:$true] %s1475
          %1481 = dma.vmem_to_hbm [thread:$0]  %s1476, 4096, %s1474, %s1433, 256, 512, 16
        $region68: #{sae_forward.1} parent=39 // pred_fallthru
          _
        // Predicated region
        $region69: #{sae_forward.1} parent=39 // pred_check
          %p1482 = pneg %p241
        $region70: #{sae_forward.1} parent=39 // pred_check_branch
          %1484 = sbr.rel (%p1482) target = $region72
        $region71: #{sae_forward.1} parent=39 // pred_region
          %s1485 = smul.u32 16, %s36
        $region72: #{sae_forward.1} parent=39 // pred_fallthru
          _
        // Predicated region
        $region73: #{sae_forward.1} parent=39 // pred_check
          %p1486 = pneg %p267
        $region74: #{sae_forward.1} parent=39 // pred_check_branch
          %1488 = sbr.rel (%p1486) target = $region76
        $region75: #{sae_forward.1} parent=39 // pred_region
          %s1489 = smul.u32 16, %s36
        $region76: #{sae_forward.1} parent=39 // pred_fallthru
          _
      $region40: #{sae_forward.1} parent=5 // pred_fallthru
        _
      %p1490 = scmp.le.s32.totalorder 2, %s27
      // Predicated region
      $region77: #{sae_forward.1} parent=5 // pred_check
        %p1491 = pneg %p1490
      $region78: #{sae_forward.1} parent=5 // pred_check_branch
        %1493 = sbr.rel (%p1491) target = $region80
      $region79: #{sae_forward.1} parent=5 // pred_region
        %s1494 = ssub.s32 %s27, 2
        // Predicated region
        $region81: #{sae_forward.1} parent=79 // pred_check
          %p1495 = pneg %p193
        $region82: #{sae_forward.1} parent=79 // pred_check_branch
          %1497 = sbr.rel (%p1495) target = $region84
        $region83: #{sae_forward.1} parent=79 // pred_region
          %s1498 = sand.u32 %s178, 1
          %s1499 = scalar_lea.sflag [#allocation6], %s1498
          %s1500 = sand.u32 %s178, 1
          %s1501 = smul.addr %s1500, 128
          %s1502 = scalar_lea.vmem [#allocation10], %s1501
          %1503 = dma.done %s1499, 2048
        $region84: #{sae_forward.1} parent=79 // pred_fallthru
          _
        // Predicated region
        $region85: #{sae_forward.1} parent=79 // pred_check
          %p1504 = pneg %p221
        $region86: #{sae_forward.1} parent=79 // pred_check_branch
          %1506 = sbr.rel (%p1504) target = $region88
        $region87: #{sae_forward.1} parent=79 // pred_region
          %s1507 = sand.u32 %s206, 1
          %s1508 = scalar_lea.sflag [#allocation12], %s1507
          %s1509 = sand.u32 %s206, 1
          %s1510 = smul.addr %s1509, 256
          %s1511 = scalar_lea.vmem [#allocation11], %s1510
          %1512 = dma.done %s1508, 4096
        $region88: #{sae_forward.1} parent=79 // pred_fallthru
          _
        // Predicated region
        $region89: #{sae_forward.1} parent=79 // pred_check
          %p1513 = pneg %p247
        $region90: #{sae_forward.1} parent=79 // pred_check_branch
          %1515 = sbr.rel (%p1513) target = $region92
        $region91: #{sae_forward.1} parent=79 // pred_region
          %s1516 = smul.u32 16, %s38
          %p1517 = scmp.lt.s32.totalorder %s1516, 31
          %s1518 = scalar_select %p1517, %s1516, 31
          %s1519 = smul.addr %s1518, 8
          %s1520 = scalar_lea.vmem %s7, %s1519
        $region92: #{sae_forward.1} parent=79 // pred_fallthru
          _
        // Predicated region
        $region93: #{sae_forward.1} parent=79 // pred_check
          %p1521 = pneg %p273
        $region94: #{sae_forward.1} parent=79 // pred_check_branch
          %1523 = sbr.rel (%p1521) target = $region96
        $region95: #{sae_forward.1} parent=79 // pred_region
          %s1524 = smul.u32 16, %s38
          %p1525 = scmp.lt.s32.totalorder %s1524, 31
          %s1526 = scalar_select %p1525, %s1524, 31
          %s1527 = smul.addr %s1526, 8
          %s1528 = scalar_lea.vmem %s8, %s1527
        $region96: #{sae_forward.1} parent=79 // pred_fallthru
          _
      $region80: #{sae_forward.1} parent=5 // pred_fallthru
        _
    $region6: #{sae_forward.1} parent=1 // loop_footer
      %s31 = sadd.s32 1, %s27
    $region7: #{sae_forward.1} parent=1 // loop_footer_branch
      %26 = sbr.rel target = $region3
    $region8: #{sae_forward.1} parent=1 // loop_exit
      _
    %1529 = vsyncpa [#allocation5], 1
    %s1530 = scalar_lea.sflag [#allocation5], 1
    %1531 = vsyncpa %s1530, 1
    %1532 = vsyncpa [#allocation8], 1
    %s1533 = scalar_lea.sflag [#allocation8], 1
    %1534 = vsyncpa %s1533, 1
    %1535 = vsyncpa [#allocation6], 1
    %s1536 = scalar_lea.sflag [#allocation6], 1
    %1537 = vsyncpa %s1536, 1
    %1538 = vsyncpa [#allocation12], 1
    %s1539 = scalar_lea.sflag [#allocation12], 1
    %1540 = vsyncpa %s1539, 1

</llo_original>
